<compile_context>
chip_gen: v7x
topology: tpu7x:2x2x1
jax: 0.10.0
libtpu: 0.0.40
codegen_flags: <defaults>
</compile_context>

<pallas_src>
import functools

import jax
import jax.numpy as jnp
import numpy as np
from jax import lax
from jax.experimental import pallas as pl
from jax.experimental.pallas import tpu as pltpu


# ---------------------------------------------------------------------------
# layout helpers
# ---------------------------------------------------------------------------
def _round_up(x, m):
    return ((x + m - 1) // m) * m


def _pick_tile_rows(hw, target):
    """Largest multiple of 8 that divides hw and is <= target (>= 8)."""
    t = min(hw, max(8, target))
    t -= t % 8
    while t > 8 and hw % t != 0:
        t -= 8
    assert t >= 8 and hw % t == 0, (hw, target)
    return t


def _geometry(H, W, target_rows):
    Wp = _round_up(W + 2, 8)        # one zero col each side + sublane alignment
    HWp = H * Wp                    # flat padded-column spatial extent
    thw = _pick_tile_rows(HWp, target_rows)
    halo = Wp + 8                   # rows of halo needed above/below a tile
    P = _round_up(Wp + 1, thw)      # zero rows top/bottom, multiple of thw
    assert P >= halo and P % thw == 0
    return dict(Wp=Wp, HWp=HWp, thw=thw, halo=halo, P=P,
                npad=P // thw, nj=HWp // thw,
                tot=HWp + 2 * P, win=thw + 2 * halo)


# ---------------------------------------------------------------------------
# Pallas kernels
# ---------------------------------------------------------------------------
def conv1_kernel(cols_ref, w_ref, b_ref, nw_ref, noise_ref, mask_ref, o_ref,
                 *, npad, nj):
    """Layer 1: relu(cols @ w + b) + nw * noise, written into padded layout.

    cols_ref  : (1, thw, 9*Cin) bf16   im2col'd input tile (Cin tiny)
    o_ref     : (1, thw, Cout)  bf16   padded-layout output block
    Pad-row blocks (non-interior grid steps) are written as zeros so the next
    layer's vertical conv padding is exact.
    """
    j = pl.program_id(1) - npad
    interior = jnp.logical_and(j >= 0, j < nj)

    @pl.when(jnp.logical_not(interior))
    def _():
        o_ref[...] = jnp.zeros_like(o_ref)

    @pl.when(interior)
    def _():
        acc = jnp.dot(cols_ref[0], w_ref[...], preferred_element_type=jnp.float32)
        acc = jnp.maximum(acc + b_ref[...], 0.0)
        acc = acc + nw_ref[...] * noise_ref[0]
        # zero the pad columns so the next layer's implicit zero padding is exact
        o_ref[0] = (acc * mask_ref[...]).astype(o_ref.dtype)


def _window_copy(hbm_ref, win_buf, sem, b, j, slot, *, p_rows, thw, halo, win):
    """Async copy of one halo'd row window (win, C) HBM -> VMEM slot."""
    row0 = p_rows + j * thw - halo
    return pltpu.make_async_copy(hbm_ref.at[b, pl.ds(row0, win), :],
                                 win_buf.at[slot], sem.at[slot])


def _conv3x3_cols(window, *, thw, halo, wp):
    """Nine shifted 3x3 taps of the halo'd window -> one (thw, 9*Cin) bf16 slab."""
    taps = []
    for dy in (-1, 0, 1):
        for dx in (-1, 0, 1):
            off = halo + dy * wp + dx           # static; dy offsets 8-aligned
            taps.append(window[off:off + thw, :])
    return jnp.concatenate(taps, axis=-1)


def conv_mid_kernel(hbm_ref, w_ref, b_ref, nw_ref, noise_ref, mask_ref, o_ref,
                    win_buf, sem, *, thw, halo, win, wp, p_rows, npad, nj):
    """Mid layer: relu(conv3x3(h) + b) + nw * noise on a halo'd VMEM window."""
    b = pl.program_id(0)
    j = pl.program_id(1) - npad
    interior = jnp.logical_and(j >= 0, j < nj)

    @pl.when(jnp.logical_not(interior))
    def _():
        o_ref[...] = jnp.zeros_like(o_ref)

    @pl.when(interior)
    def _():
        copy = functools.partial(_window_copy, hbm_ref, win_buf, sem, b,
                                 p_rows=p_rows, thw=thw, halo=halo, win=win)
        slot = lax.rem(j, 2)

        @pl.when(j == 0)
        def _():
            copy(j, slot).start()               # prime first tile of this batch

        copy(j, slot).wait()

        @pl.when(j + 1 < nj)
        def _():
            copy(j + 1, 1 - slot).start()       # prefetch next tile's window

        window = win_buf[slot]                  # (win, Cin) bf16
        cols = _conv3x3_cols(window, thw=thw, halo=halo, wp=wp)
        acc = jnp.dot(cols, w_ref[...], preferred_element_type=jnp.float32)
        acc = jnp.maximum(acc + b_ref[...], 0.0)
        acc = acc + nw_ref[...] * noise_ref[0]
        o_ref[0] = (acc * mask_ref[...]).astype(o_ref.dtype)


def conv_gumbel_kernel(hbm_ref, w_ref, b_ref, g_ref, o_ref, win_buf, sem,
                       *, thw, halo, win, wp, p_rows, nj):
    """Final layer: hard gumbel-softmax(conv3x3(h) + b) over channels.

    g_ref : (1, thw, Cout) f32 pre-sampled Gumbel(0,1) noise.
    o_ref : (1, thw, Cout) f32 one-hot forward value (hard=True).
    Dividing by tau > 0 does not change the argmax, so '/ tau' is elided.
    """
    b = pl.program_id(0)
    j = pl.program_id(1)
    copy = functools.partial(_window_copy, hbm_ref, win_buf, sem, b,
                             p_rows=p_rows, thw=thw, halo=halo, win=win)
    slot = lax.rem(j, 2)

    @pl.when(j == 0)
    def _():
        copy(j, slot).start()

    copy(j, slot).wait()

    @pl.when(j + 1 < nj)
    def _():
        copy(j + 1, 1 - slot).start()

    cout = o_ref.shape[-1]
    window = win_buf[slot]
    cols = _conv3x3_cols(window, thw=thw, halo=halo, wp=wp)
    logits = jnp.dot(cols, w_ref[...], preferred_element_type=jnp.float32)
    logits = logits + b_ref[...] + g_ref[0]
    m = jnp.max(logits, axis=-1, keepdims=True)
    ch = lax.broadcasted_iota(jnp.int32, (thw, cout), 1)
    cand = jnp.where(logits >= m, ch, cout)      # first max wins (torch-like)
    first = jnp.min(cand, axis=-1, keepdims=True)
    o_ref[0] = (ch == first).astype(o_ref.dtype)


# ---------------------------------------------------------------------------
# pallas_call wrappers
# ---------------------------------------------------------------------------
def _call_conv1(cols, w, bias, nw, noise, mask, geo):
    B = cols.shape[0]
    k9 = cols.shape[-1]
    cout = w.shape[-1]
    thw, npad, nj, tot = geo["thw"], geo["npad"], geo["nj"], geo["tot"]
    gj = 2 * npad + nj
    clip = lambda j: jnp.minimum(jnp.maximum(j - npad, 0), nj - 1)
    kern = functools.partial(conv1_kernel, npad=npad, nj=nj)
    return pl.pallas_call(
        kern,
        out_shape=jax.ShapeDtypeStruct((B, tot, cout), jnp.bfloat16),
        grid=(B, gj),
        in_specs=[
            pl.BlockSpec((1, thw, k9), lambda i, j: (i, clip(j), 0)),
            pl.BlockSpec(w.shape, lambda i, j: (0, 0)),
            pl.BlockSpec(bias.shape, lambda i, j: (0, 0)),
            pl.BlockSpec(nw.shape, lambda i, j: (0, 0)),
            pl.BlockSpec((1, thw, 1), lambda i, j: (i, clip(j), 0)),
            pl.BlockSpec((thw, 1), lambda i, j: (clip(j), 0)),
        ],
        out_specs=pl.BlockSpec((1, thw, cout), lambda i, j: (i, j, 0)),
        compiler_params=pltpu.CompilerParams(
            dimension_semantics=("parallel", "parallel")),
    )(cols, w, bias, nw, noise, mask)


def _call_conv_mid(hpad, w, bias, nw, noise, mask, geo):
    B, _, cin = hpad.shape
    cout = w.shape[-1]
    thw, npad, nj, tot = geo["thw"], geo["npad"], geo["nj"], geo["tot"]
    gj = 2 * npad + nj
    clip = lambda j: jnp.minimum(jnp.maximum(j - npad, 0), nj - 1)
    kern = functools.partial(conv_mid_kernel, thw=thw, halo=geo["halo"],
                             win=geo["win"], wp=geo["Wp"], p_rows=geo["P"],
                             npad=npad, nj=nj)
    return pl.pallas_call(
        kern,
        out_shape=jax.ShapeDtypeStruct((B, tot, cout), jnp.bfloat16),
        grid=(B, gj),
        in_specs=[
            pl.BlockSpec(memory_space=pl.ANY),          # activation stays in HBM
            pl.BlockSpec(w.shape, lambda i, j: (0, 0)),
            pl.BlockSpec(bias.shape, lambda i, j: (0, 0)),
            pl.BlockSpec(nw.shape, lambda i, j: (0, 0)),
            pl.BlockSpec((1, thw, 1), lambda i, j: (i, clip(j), 0)),
            pl.BlockSpec((thw, 1), lambda i, j: (clip(j), 0)),
        ],
        out_specs=pl.BlockSpec((1, thw, cout), lambda i, j: (i, j, 0)),
        scratch_shapes=[pltpu.VMEM((2, geo["win"], cin), jnp.bfloat16),
                        pltpu.SemaphoreType.DMA((2,))],
        compiler_params=pltpu.CompilerParams(
            dimension_semantics=("parallel", "arbitrary")),
    )(hpad, w, bias, nw, noise, mask)


def _call_conv_gumbel(hpad, w, bias, g, geo):
    B, _, cin = hpad.shape
    cout = w.shape[-1]
    thw, nj, HWp = geo["thw"], geo["nj"], geo["HWp"]
    kern = functools.partial(conv_gumbel_kernel, thw=thw, halo=geo["halo"],
                             win=geo["win"], wp=geo["Wp"], p_rows=geo["P"],
                             nj=nj)
    return pl.pallas_call(
        kern,
        out_shape=jax.ShapeDtypeStruct((B, HWp, cout), jnp.float32),
        grid=(B, nj),
        in_specs=[
            pl.BlockSpec(memory_space=pl.ANY),
            pl.BlockSpec(w.shape, lambda i, j: (0, 0)),
            pl.BlockSpec(bias.shape, lambda i, j: (0, 0)),
            pl.BlockSpec((1, thw, cout), lambda i, j: (i, j, 0)),
        ],
        out_specs=pl.BlockSpec((1, thw, cout), lambda i, j: (i, j, 0)),
        scratch_shapes=[pltpu.VMEM((2, geo["win"], cin), jnp.bfloat16),
                        pltpu.SemaphoreType.DMA((2,))],
        compiler_params=pltpu.CompilerParams(
            dimension_semantics=("parallel", "arbitrary")),
    )(hpad, w, bias, g)


# ---------------------------------------------------------------------------
# JAX glue (padded layout construction, layer-1 im2col, params)
# ---------------------------------------------------------------------------
def init_params(key, anatomy_out_channels, mid=128):
    A = anatomy_out_channels
    ks = jax.random.split(key, 8)

    def kaiming(k, cin, cout):
        std = (2.0 / (cin * 9)) ** 0.5
        return jax.random.normal(k, (3, 3, cin, cout), jnp.float32) * std

    xav = (2.0 / (mid * 9 + A * 9)) ** 0.5
    return dict(
        w1=kaiming(ks[0], A, mid), b1=jax.random.normal(ks[1], (mid,)) * 0.01,
        w2=kaiming(ks[2], mid, mid), b2=jax.random.normal(ks[3], (mid,)) * 0.01,
        w3=kaiming(ks[4], mid, mid), b3=jax.random.normal(ks[5], (mid,)) * 0.01,
        w4=jax.random.normal(ks[6], (3, 3, mid, A), jnp.float32) * xav,
        b4=jnp.zeros((A,), jnp.float32),
        # NoiseInjection weights are zero-initialized in the module
        nw1=jnp.zeros((mid,), jnp.float32),
        nw2=jnp.zeros((mid,), jnp.float32),
        nw3=jnp.zeros((mid,), jnp.float32),
    )


def noise_net_forward(a_nchw, noise_nchw, params, gumbel_key, tau=1.0):
    """NoiseNet forward. a: (B, A, H, W), noise: (B, 1, H, W), NCHW.

    Note: the PyTorch module shares the SAME noise map across all three
    NoiseInjection layers; we do the same.
    """
    del tau  # hard gumbel-softmax forward value is invariant to tau > 0
    B, A, H, W = a_nchw.shape
    mid = params["w2"].shape[-1]
    bf = jnp.bfloat16

    Wp0 = _round_up(W + 2, 8)
    target = 128 if H * Wp0 <= 1024 else 512   # TODO(synk): re-sweep per chip gen
    geo = _geometry(H, W, target)
    Wp, HWp = geo["Wp"], geo["HWp"]

    # scatter pixels/noise into the zero-column-padded layout (cols 1..W)
    x = jnp.transpose(a_nchw, (0, 2, 3, 1)).astype(jnp.float32)           # NHWC
    xp = jnp.zeros((B, H, Wp, A), jnp.float32).at[:, :, 1:W + 1, :].set(x)
    nz = jnp.transpose(noise_nchw, (0, 2, 3, 1)).astype(jnp.float32)
    noisep = jnp.zeros((B, H, Wp, 1), jnp.float32).at[:, :, 1:W + 1, :].set(nz)
    noisep = noisep.reshape(B, HWp, 1)

    # valid-column mask: zero the pad columns of every layer output so the next
    # layer's implicit zero padding is exact
    colp = np.arange(HWp) % Wp
    mask = jnp.asarray(((colp >= 1) & (colp <= W)).astype(np.float32).reshape(HWp, 1))

    # layer 1: 3x3 im2col in the padded-column space (Cin = A tiny), fused K=9A matmul
    xpp = jnp.pad(xp, ((0, 0), (1, 1), (1, 1), (0, 0)))
    taps = [xpp[:, dy:dy + H, dx:dx + Wp, :] for dy in range(3) for dx in range(3)]
    cols1 = jnp.concatenate(taps, axis=-1).reshape(B, HWp, 9 * A).astype(bf)

    h = _call_conv1(cols1, params["w1"].reshape(9 * A, mid).astype(bf),
                    params["b1"].reshape(1, mid), params["nw1"].reshape(1, mid),
                    noisep, mask, geo)

    # layers 2-3: conv + relu + noise, per-tile halo windows via manual DMA
    for wk, bk, nk in (("w2", "b2", "nw2"), ("w3", "b3", "nw3")):
        h = _call_conv_mid(h, params[wk].reshape(9 * mid, mid).astype(bf),
                           params[bk].reshape(1, mid), params[nk].reshape(1, mid),
                           noisep, mask, geo)

    # layer 4: conv + hard gumbel-softmax over channels
    # TODO(synk): training-time straight-through gradient (custom_vjp with the
    # soft softmax / tau) not implemented.
    g = jax.random.gumbel(gumbel_key, (B, HWp, A), dtype=jnp.float32)
    onehot = _call_conv_gumbel(h, params["w4"].reshape(9 * mid, A).astype(bf),
                               params["b4"].reshape(1, A), g, geo)

    out = onehot.reshape(B, H, Wp, A)[:, :, 1:W + 1, :]                    # drop pad cols
    return jnp.transpose(out, (0, 3, 1, 2))                                # NCHW


# ---------------------------------------------------------------------------
if __name__ == "__main__":
    key = jax.random.PRNGKey(0)
    k_a, k_noise, k_params, k_gumbel = jax.random.split(key, 4)

    B, A, H, W = 2, 4, 16, 16
    a = jax.random.normal(k_a, (B, A, H, W), jnp.float32)        # NCHW anatomy map
    noise = jax.random.normal(k_noise, (B, 1, H, W), jnp.float32)

    params = init_params(k_params, anatomy_out_channels=A)

    fwd = jax.jit(noise_net_forward)
    out = fwd(a, noise, params, k_gumbel)
    out = jax.block_until_ready(out)

    assert out.shape == (B, A, H, W)
    # hard gumbel-softmax -> exactly one-hot over the channel axis per pixel
    assert bool(jnp.all(jnp.abs(out.sum(axis=1) - 1.0) < 1e-6))
    assert bool(jnp.all((out == 0.0) | (out == 1.0)))
    print("KERNEL_OK")
</pallas_src>

<mosaic_0001>
module attributes {stable_mosaic.version = 11 : i64} {
  func.func @conv1_kernel(%arg0: i32, %arg1: i32, %arg2: memref<1x128x36xbf16, #tpu.memory_space<vmem>>, %arg3: memref<36x128xbf16, #tpu.memory_space<vmem>>, %arg4: memref<1x128xf32, #tpu.memory_space<vmem>>, %arg5: memref<1x128xf32, #tpu.memory_space<vmem>>, %arg6: memref<1x128x1xf32, #tpu.memory_space<vmem>>, %arg7: memref<128x1xf32, #tpu.memory_space<vmem>>, %arg8: memref<1x128x128xbf16, #tpu.memory_space<vmem>>) attributes {dimension_semantics = [#tpu.dimension_semantics<parallel>, #tpu.dimension_semantics<parallel>], iteration_bounds = array<i64: 2, 5>, scalar_prefetch = 0 : i64, scratch_operands = 0 : i64, tpu.core_type = #tpu.core_type<tc>, window_params = [{transform_indices = @transform_0, window_bounds = array<i64: 1, 128, 36>}, {pipeline_mode = #tpu.pipeline_mode<synchronous>, transform_indices = @transform_1, window_bounds = array<i64: 36, 128>}, {pipeline_mode = #tpu.pipeline_mode<synchronous>, transform_indices = @transform_2, window_bounds = array<i64: 1, 128>}, {pipeline_mode = #tpu.pipeline_mode<synchronous>, transform_indices = @transform_3, window_bounds = array<i64: 1, 128>}, {transform_indices = @transform_4, window_bounds = array<i64: 1, 128, 1>}, {transform_indices = @transform_5, window_bounds = array<i64: 128, 1>}, {transform_indices = @transform_6, window_bounds = array<i64: 1, 128, 128>}]} {
    %c1_i32 = arith.constant 1 : i32
    %0 = arith.subi %arg1, %c1_i32 : i32
    %c0_i32 = arith.constant 0 : i32
    %1 = arith.cmpi sge, %0, %c0_i32 : i32
    %c3_i32 = arith.constant 3 : i32
    %2 = arith.cmpi slt, %0, %c3_i32 : i32
    %3 = arith.andi %1, %2 : i1
    %true = arith.constant true
    %4 = arith.xori %3, %true : i1
    %5 = arith.extui %4 : i1 to i32
    %c0_i32_0 = arith.constant 0 : i32
    %6 = arith.cmpi ne, %5, %c0_i32_0 : i32
    scf.if %6 {
      %cst = arith.constant 0.000000e+00 : bf16
      %9 = vector.broadcast %cst : bf16 to vector<1x128x128xbf16>
      %c0 = arith.constant 0 : index
      %c0_2 = arith.constant 0 : index
      %c0_3 = arith.constant 0 : index
      %10 = vector.load %arg8[%c0, %c0_2, %c0_3] : memref<1x128x128xbf16, #tpu.memory_space<vmem>>, vector<1x128x128xbf16>
      tpu.vector_store %arg8[%c0, %c0_2, %c0_3], %9 {strides = array<i32>} : memref<1x128x128xbf16, #tpu.memory_space<vmem>>, vector<1x128x128xbf16>,
    } else {
    }
    %7 = arith.extui %3 : i1 to i32
    %c0_i32_1 = arith.constant 0 : i32
    %8 = arith.cmpi ne, %7, %c0_i32_1 : i32
    scf.if %8 {
      %c0 = arith.constant 0 : index
      %c0_2 = arith.constant 0 : index
      %c0_3 = arith.constant 0 : index
      %9 = vector.load %arg2[%c0, %c0_2, %c0_3] : memref<1x128x36xbf16, #tpu.memory_space<vmem>>, vector<1x128x36xbf16>
      %10 = vector.shape_cast %9 : vector<1x128x36xbf16> to vector<128x36xbf16>
      %c0_4 = arith.constant 0 : index
      %c0_5 = arith.constant 0 : index
      %11 = vector.load %arg3[%c0_4, %c0_5] : memref<36x128xbf16, #tpu.memory_space<vmem>>, vector<36x128xbf16>
      %cst = arith.constant dense<0.000000e+00> : vector<128x128xf32>
      %12 = tpu.matmul %10, %11, %cst {dimension_numbers = #tpu.dot_dimension_numbers<[1], [0], [0], [1], [0, 0, 1, 1], [], []>} : vector<128x36xbf16>, vector<36x128xbf16>, vector<128x128xf32> -> vector<128x128xf32>
      %c0_6 = arith.constant 0 : index
      %c0_7 = arith.constant 0 : index
      %13 = vector.load %arg4[%c0_6, %c0_7] : memref<1x128xf32, #tpu.memory_space<vmem>>, vector<1x128xf32>
      %14 = vector.broadcast %13 : vector<1x128xf32> to vector<128x128xf32>
      %15 = arith.addf %12, %14 : vector<128x128xf32>
      %cst_8 = arith.constant 0.000000e+00 : f32
      %16 = vector.broadcast %cst_8 : f32 to vector<128x128xf32>
      %17 = arith.maximumf %15, %16 : vector<128x128xf32>
      %c0_9 = arith.constant 0 : index
      %c0_10 = arith.constant 0 : index
      %18 = vector.load %arg5[%c0_9, %c0_10] : memref<1x128xf32, #tpu.memory_space<vmem>>, vector<1x128xf32>
      %c0_11 = arith.constant 0 : index
      %c0_12 = arith.constant 0 : index
      %c0_13 = arith.constant 0 : index
      %19 = vector.load %arg6[%c0_11, %c0_12, %c0_13] : memref<1x128x1xf32, #tpu.memory_space<vmem>>, vector<1x128x1xf32>
      %20 = vector.shape_cast %19 : vector<1x128x1xf32> to vector<128x1xf32>
      %21 = vector.broadcast %18 : vector<1x128xf32> to vector<128x128xf32>
      %22 = vector.broadcast %20 : vector<128x1xf32> to vector<128x128xf32>
      %23 = arith.mulf %21, %22 : vector<128x128xf32>
      %24 = arith.addf %17, %23 : vector<128x128xf32>
      %c0_14 = arith.constant 0 : index
      %c0_15 = arith.constant 0 : index
      %25 = vector.load %arg7[%c0_14, %c0_15] : memref<128x1xf32, #tpu.memory_space<vmem>>, vector<128x1xf32>
      %26 = vector.broadcast %25 : vector<128x1xf32> to vector<128x128xf32>
      %27 = arith.mulf %24, %26 : vector<128x128xf32>
      %28 = arith.truncf %27 : vector<128x128xf32> to vector<128x128xbf16>
      %c0_16 = arith.constant 0 : index
      %c0_17 = arith.constant 0 : index
      %c0_18 = arith.constant 0 : index
      %29 = vector.load %arg8[%c0_16, %c0_17, %c0_18] : memref<1x128x128xbf16, #tpu.memory_space<vmem>>, vector<1x128x128xbf16>
      %30 = vector.shape_cast %29 : vector<1x128x128xbf16> to vector<128x128xbf16>
      %31 = vector.shape_cast %28 : vector<128x128xbf16> to vector<1x128x128xbf16>
      tpu.vector_store %arg8[%c0_16, %c0_17, %c0_18], %31 {strides = array<i32>} : memref<1x128x128xbf16, #tpu.memory_space<vmem>>, vector<1x128x128xbf16>,
    } else {
    }
    return
  }
  func.func @transform_0(%arg0: i32, %arg1: i32) -> (i32, i32, i32) {
    %c1_i32 = arith.constant 1 : i32
    %0 = arith.subi %arg1, %c1_i32 : i32
    %c0_i32 = arith.constant 0 : i32
    %1 = arith.maxsi %0, %c0_i32 : i32
    %c2_i32 = arith.constant 2 : i32
    %2 = arith.minsi %1, %c2_i32 : i32
    %c0_i32_0 = arith.constant 0 : i32
    %c0_i32_1 = arith.constant 0 : i32
    return %arg0, %2, %c0_i32_0 : i32, i32, i32
  }
  func.func @transform_1(%arg0: i32, %arg1: i32) -> (i32, i32) {
    %c0_i32 = arith.constant 0 : i32
    %c0_i32_0 = arith.constant 0 : i32
    %c0_i32_1 = arith.constant 0 : i32
    return %c0_i32, %c0_i32_0 : i32, i32
  }
  func.func @transform_2(%arg0: i32, %arg1: i32) -> (i32, i32) {
    %c0_i32 = arith.constant 0 : i32
    %c0_i32_0 = arith.constant 0 : i32
    %c0_i32_1 = arith.constant 0 : i32
    return %c0_i32, %c0_i32_0 : i32, i32
  }
  func.func @transform_3(%arg0: i32, %arg1: i32) -> (i32, i32) {
    %c0_i32 = arith.constant 0 : i32
    %c0_i32_0 = arith.constant 0 : i32
    %c0_i32_1 = arith.constant 0 : i32
    return %c0_i32, %c0_i32_0 : i32, i32
  }
  func.func @transform_4(%arg0: i32, %arg1: i32) -> (i32, i32, i32) {
    %c1_i32 = arith.constant 1 : i32
    %0 = arith.subi %arg1, %c1_i32 : i32
    %c0_i32 = arith.constant 0 : i32
    %1 = arith.maxsi %0, %c0_i32 : i32
    %c2_i32 = arith.constant 2 : i32
    %2 = arith.minsi %1, %c2_i32 : i32
    %c0_i32_0 = arith.constant 0 : i32
    %c0_i32_1 = arith.constant 0 : i32
    return %arg0, %2, %c0_i32_0 : i32, i32, i32
  }
  func.func @transform_5(%arg0: i32, %arg1: i32) -> (i32, i32) {
    %c1_i32 = arith.constant 1 : i32
    %0 = arith.subi %arg1, %c1_i32 : i32
    %c0_i32 = arith.constant 0 : i32
    %1 = arith.maxsi %0, %c0_i32 : i32
    %c2_i32 = arith.constant 2 : i32
    %2 = arith.minsi %1, %c2_i32 : i32
    %c0_i32_0 = arith.constant 0 : i32
    %c0_i32_1 = arith.constant 0 : i32
    return %2, %c0_i32_0 : i32, i32
  }
  func.func @transform_6(%arg0: i32, %arg1: i32) -> (i32, i32, i32) {
    %c0_i32 = arith.constant 0 : i32
    %c0_i32_0 = arith.constant 0 : i32
    return %arg0, %arg1, %c0_i32 : i32, i32, i32
  }
}

module attributes {stable_mosaic.version = 11 : i64} {
  func.func @conv_mid_kernel(%arg0: i32, %arg1: i32, %arg2: memref<2x640x128xbf16, #tpu.memory_space<any>>, %arg3: memref<1152x128xbf16, #tpu.memory_space<vmem>>, %arg4: memref<1x128xf32, #tpu.memory_space<vmem>>, %arg5: memref<1x128xf32, #tpu.memory_space<vmem>>, %arg6: memref<1x128x1xf32, #tpu.memory_space<vmem>>, %arg7: memref<128x1xf32, #tpu.memory_space<vmem>>, %arg8: memref<1x128x128xbf16, #tpu.memory_space<vmem>>, %arg9: memref<2x192x128xbf16, #tpu.memory_space<vmem>>, %arg10: memref<2x!tpu.dma_semaphore, #tpu.memory_space<semaphore_mem>>) attributes {dimension_semantics = [#tpu.dimension_semantics<parallel>, #tpu.dimension_semantics<arbitrary>], iteration_bounds = array<i64: 2, 5>, scalar_prefetch = 0 : i64, scratch_operands = 2 : i64, tpu.core_type = #tpu.core_type<tc>, window_params = [{}, {pipeline_mode = #tpu.pipeline_mode<synchronous>, transform_indices = @transform_1, window_bounds = array<i64: 1152, 128>}, {pipeline_mode = #tpu.pipeline_mode<synchronous>, transform_indices = @transform_2, window_bounds = array<i64: 1, 128>}, {pipeline_mode = #tpu.pipeline_mode<synchronous>, transform_indices = @transform_3, window_bounds = array<i64: 1, 128>}, {transform_indices = @transform_4, window_bounds = array<i64: 1, 128, 1>}, {transform_indices = @transform_5, window_bounds = array<i64: 128, 1>}, {transform_indices = @transform_6, window_bounds = array<i64: 1, 128, 128>}]} {
    %c1_i32 = arith.constant 1 : i32
    %0 = arith.subi %arg1, %c1_i32 : i32
    %c0_i32 = arith.constant 0 : i32
    %1 = arith.cmpi sge, %0, %c0_i32 : i32
    %c3_i32 = arith.constant 3 : i32
    %2 = arith.cmpi slt, %0, %c3_i32 : i32
    %3 = arith.andi %1, %2 : i1
    %true = arith.constant true
    %4 = arith.xori %3, %true : i1
    %5 = arith.extui %4 : i1 to i32
    %c0_i32_0 = arith.constant 0 : i32
    %6 = arith.cmpi ne, %5, %c0_i32_0 : i32
    scf.if %6 {
      %cst = arith.constant 0.000000e+00 : bf16
      %9 = vector.broadcast %cst : bf16 to vector<1x128x128xbf16>
      %c0 = arith.constant 0 : index
      %c0_2 = arith.constant 0 : index
      %c0_3 = arith.constant 0 : index
      %10 = vector.load %arg8[%c0, %c0_2, %c0_3] : memref<1x128x128xbf16, #tpu.memory_space<vmem>>, vector<1x128x128xbf16>
      tpu.vector_store %arg8[%c0, %c0_2, %c0_3], %9 {strides = array<i32>} : memref<1x128x128xbf16, #tpu.memory_space<vmem>>, vector<1x128x128xbf16>,
    } else {
    }
    %7 = arith.extui %3 : i1 to i32
    %c0_i32_1 = arith.constant 0 : i32
    %8 = arith.cmpi ne, %7, %c0_i32_1 : i32
    scf.if %8 {
      %c2_i32 = arith.constant 2 : i32
      %9 = arith.remsi %0, %c2_i32 : i32
      %c0_i32_2 = arith.constant 0 : i32
      %10 = arith.cmpi eq, %0, %c0_i32_2 : i32
      %11 = arith.extui %10 : i1 to i32
      %c0_i32_3 = arith.constant 0 : i32
      %12 = arith.cmpi ne, %11, %c0_i32_3 : i32
      scf.if %12 {
        %c128_i32_27 = arith.constant 128 : i32
        %60 = arith.muli %0, %c128_i32_27 : i32
        %c128_i32_28 = arith.constant 128 : i32
        %61 = arith.addi %c128_i32_28, %60 : i32
        %c32_i32_29 = arith.constant 32 : i32
        %62 = arith.subi %61, %c32_i32_29 : i32
        %c0_i32_30 = arith.constant 0 : i32
        %63 = tpu.memref_slice %arg2[%arg0, %62, %c0_i32_30] : memref<2x640x128xbf16, #tpu.memory_space<any>> -> memref<1x192x128xbf16, #tpu.memory_space<any>>
        %64 = tpu.memref_squeeze %63 : memref<1x192x128xbf16, #tpu.memory_space<any>> -> memref<192x128xbf16, #tpu.memory_space<any>>
        %c0_i32_31 = arith.constant 0 : i32
        %c0_i32_32 = arith.constant 0 : i32
        %65 = tpu.memref_slice %arg9[%9, %c0_i32_31, %c0_i32_32] : memref<2x192x128xbf16, #tpu.memory_space<vmem>> -> memref<1x192x128xbf16, #tpu.memory_space<vmem>>
        %66 = tpu.memref_squeeze %65 : memref<1x192x128xbf16, #tpu.memory_space<vmem>> -> memref<192x128xbf16, #tpu.memory_space<vmem>>
        %67 = tpu.memref_slice %arg10[%9] : memref<2x!tpu.dma_semaphore, #tpu.memory_space<semaphore_mem>> -> memref<1x!tpu.dma_semaphore, #tpu.memory_space<semaphore_mem>>
        %68 = tpu.memref_squeeze %67 : memref<1x!tpu.dma_semaphore, #tpu.memory_space<semaphore_mem>> -> memref<!tpu.dma_semaphore, #tpu.memory_space<semaphore_mem>>
        tpu.enqueue_dma source(%64 : memref<192x128xbf16, #tpu.memory_space<any>>) target(%66 : memref<192x128xbf16, #tpu.memory_space<vmem>>) target_semaphore(%68 : memref<!tpu.dma_semaphore, #tpu.memory_space<semaphore_mem>>)
      } else {
      }
      %c128_i32 = arith.constant 128 : i32
      %13 = arith.muli %0, %c128_i32 : i32
      %c128_i32_4 = arith.constant 128 : i32
      %14 = arith.addi %c128_i32_4, %13 : i32
      %c32_i32 = arith.constant 32 : i32
      %15 = arith.subi %14, %c32_i32 : i32
      %c0_i32_5 = arith.constant 0 : i32
      %16 = tpu.memref_slice %arg2[%arg0, %15, %c0_i32_5] : memref<2x640x128xbf16, #tpu.memory_space<any>> -> memref<1x192x128xbf16, #tpu.memory_space<any>>
      %17 = tpu.memref_squeeze %16 : memref<1x192x128xbf16, #tpu.memory_space<any>> -> memref<192x128xbf16, #tpu.memory_space<any>>
      %c0_i32_6 = arith.constant 0 : i32
      %c0_i32_7 = arith.constant 0 : i32
      %18 = tpu.memref_slice %arg9[%9, %c0_i32_6, %c0_i32_7] : memref<2x192x128xbf16, #tpu.memory_space<vmem>> -> memref<1x192x128xbf16, #tpu.memory_space<vmem>>
      %19 = tpu.memref_squeeze %18 : memref<1x192x128xbf16, #tpu.memory_space<vmem>> -> memref<192x128xbf16, #tpu.memory_space<vmem>>
      %20 = tpu.memref_slice %arg10[%9] : memref<2x!tpu.dma_semaphore, #tpu.memory_space<semaphore_mem>> -> memref<1x!tpu.dma_semaphore, #tpu.memory_space<semaphore_mem>>
      %21 = tpu.memref_squeeze %20 : memref<1x!tpu.dma_semaphore, #tpu.memory_space<semaphore_mem>> -> memref<!tpu.dma_semaphore, #tpu.memory_space<semaphore_mem>>
      tpu.wait_dma2 semaphore(%21 : memref<!tpu.dma_semaphore, #tpu.memory_space<semaphore_mem>>) src(%17 : memref<192x128xbf16, #tpu.memory_space<any>>) dst(%19 : memref<192x128xbf16, #tpu.memory_space<vmem>>)
      %c1_i32_8 = arith.constant 1 : i32
      %22 = arith.addi %0, %c1_i32_8 : i32
      %c3_i32_9 = arith.constant 3 : i32
      %23 = arith.cmpi slt, %22, %c3_i32_9 : i32
      %24 = arith.extui %23 : i1 to i32
      %c0_i32_10 = arith.constant 0 : i32
      %25 = arith.cmpi ne, %24, %c0_i32_10 : i32
      scf.if %25 {
        %c1_i32_27 = arith.constant 1 : i32
        %60 = arith.addi %0, %c1_i32_27 : i32
        %c1_i32_28 = arith.constant 1 : i32
        %61 = arith.subi %c1_i32_28, %9 : i32
        %c128_i32_29 = arith.constant 128 : i32
        %62 = arith.muli %60, %c128_i32_29 : i32
        %c128_i32_30 = arith.constant 128 : i32
        %63 = arith.addi %c128_i32_30, %62 : i32
        %c32_i32_31 = arith.constant 32 : i32
        %64 = arith.subi %63, %c32_i32_31 : i32
        %c0_i32_32 = arith.constant 0 : i32
        %65 = tpu.memref_slice %arg2[%arg0, %64, %c0_i32_32] : memref<2x640x128xbf16, #tpu.memory_space<any>> -> memref<1x192x128xbf16, #tpu.memory_space<any>>
        %66 = tpu.memref_squeeze %65 : memref<1x192x128xbf16, #tpu.memory_space<any>> -> memref<192x128xbf16, #tpu.memory_space<any>>
        %c0_i32_33 = arith.constant 0 : i32
        %c0_i32_34 = arith.constant 0 : i32
        %67 = tpu.memref_slice %arg9[%61, %c0_i32_33, %c0_i32_34] : memref<2x192x128xbf16, #tpu.memory_space<vmem>> -> memref<1x192x128xbf16, #tpu.memory_space<vmem>>
        %68 = tpu.memref_squeeze %67 : memref<1x192x128xbf16, #tpu.memory_space<vmem>> -> memref<192x128xbf16, #tpu.memory_space<vmem>>
        %69 = tpu.memref_slice %arg10[%61] : memref<2x!tpu.dma_semaphore, #tpu.memory_space<semaphore_mem>> -> memref<1x!tpu.dma_semaphore, #tpu.memory_space<semaphore_mem>>
        %70 = tpu.memref_squeeze %69 : memref<1x!tpu.dma_semaphore, #tpu.memory_space<semaphore_mem>> -> memref<!tpu.dma_semaphore, #tpu.memory_space<semaphore_mem>>
        tpu.enqueue_dma source(%66 : memref<192x128xbf16, #tpu.memory_space<any>>) target(%68 : memref<192x128xbf16, #tpu.memory_space<vmem>>) target_semaphore(%70 : memref<!tpu.dma_semaphore, #tpu.memory_space<semaphore_mem>>)
      } else {
      }
      %26 = arith.index_cast %9 : i32 to index
      %c0 = arith.constant 0 : index
      %c0_11 = arith.constant 0 : index
      %27 = vector.load %arg9[%26, %c0, %c0_11] : memref<2x192x128xbf16, #tpu.memory_space<vmem>>, vector<1x192x128xbf16>
      %28 = vector.shape_cast %27 : vector<1x192x128xbf16> to vector<192x128xbf16>
      %29 = vector.extract_strided_slice %28 {offsets = [7, 0], sizes = [128, 128], strides = [1, 1]} : vector<192x128xbf16> to vector<128x128xbf16>
      %30 = vector.extract_strided_slice %28 {offsets = [8, 0], sizes = [128, 128], strides = [1, 1]} : vector<192x128xbf16> to vector<128x128xbf16>
      %31 = vector.extract_strided_slice %28 {offsets = [9, 0], sizes = [128, 128], strides = [1, 1]} : vector<192x128xbf16> to vector<128x128xbf16>
      %32 = vector.extract_strided_slice %28 {offsets = [31, 0], sizes = [128, 128], strides = [1, 1]} : vector<192x128xbf16> to vector<128x128xbf16>
      %33 = vector.extract_strided_slice %28 {offsets = [32, 0], sizes = [128, 128], strides = [1, 1]} : vector<192x128xbf16> to vector<128x128xbf16>
      %34 = vector.extract_strided_slice %28 {offsets = [33, 0], sizes = [128, 128], strides = [1, 1]} : vector<192x128xbf16> to vector<128x128xbf16>
      %35 = vector.extract_strided_slice %28 {offsets = [55, 0], sizes = [128, 128], strides = [1, 1]} : vector<192x128xbf16> to vector<128x128xbf16>
      %36 = vector.extract_strided_slice %28 {offsets = [56, 0], sizes = [128, 128], strides = [1, 1]} : vector<192x128xbf16> to vector<128x128xbf16>
      %37 = vector.extract_strided_slice %28 {offsets = [57, 0], sizes = [128, 128], strides = [1, 1]} : vector<192x128xbf16> to vector<128x128xbf16>
      %38 = tpu.concatenate %29, %30, %31, %32, %33, %34, %35, %36, %37 in 1 : vector<128x128xbf16>, vector<128x128xbf16>, vector<128x128xbf16>, vector<128x128xbf16>, vector<128x128xbf16>, vector<128x128xbf16>, vector<128x128xbf16>, vector<128x128xbf16>, vector<128x128xbf16> -> vector<128x1152xbf16>
      %c0_12 = arith.constant 0 : index
      %c0_13 = arith.constant 0 : index
      %39 = vector.load %arg3[%c0_12, %c0_13] : memref<1152x128xbf16, #tpu.memory_space<vmem>>, vector<1152x128xbf16>
      %cst = arith.constant dense<0.000000e+00> : vector<128x128xf32>
      %40 = tpu.matmul %38, %39, %cst {dimension_numbers = #tpu.dot_dimension_numbers<[1], [0], [0], [1], [0, 0, 1, 1], [], []>} : vector<128x1152xbf16>, vector<1152x128xbf16>, vector<128x128xf32> -> vector<128x128xf32>
      %c0_14 = arith.constant 0 : index
      %c0_15 = arith.constant 0 : index
      %41 = vector.load %arg4[%c0_14, %c0_15] : memref<1x128xf32, #tpu.memory_space<vmem>>, vector<1x128xf32>
      %42 = vector.broadcast %41 : vector<1x128xf32> to vector<128x128xf32>
      %43 = arith.addf %40, %42 : vector<128x128xf32>
      %cst_16 = arith.constant 0.000000e+00 : f32
      %44 = vector.broadcast %cst_16 : f32 to vector<128x128xf32>
      %45 = arith.maximumf %43, %44 : vector<128x128xf32>
      %c0_17 = arith.constant 0 : index
      %c0_18 = arith.constant 0 : index
      %46 = vector.load %arg5[%c0_17, %c0_18] : memref<1x128xf32, #tpu.memory_space<vmem>>, vector<1x128xf32>
      %c0_19 = arith.constant 0 : index
      %c0_20 = arith.constant 0 : index
      %c0_21 = arith.constant 0 : index
      %47 = vector.load %arg6[%c0_19, %c0_20, %c0_21] : memref<1x128x1xf32, #tpu.memory_space<vmem>>, vector<1x128x1xf32>
      %48 = vector.shape_cast %47 : vector<1x128x1xf32> to vector<128x1xf32>
      %49 = vector.broadcast %46 : vector<1x128xf32> to vector<128x128xf32>
      %50 = vector.broadcast %48 : vector<128x1xf32> to vector<128x128xf32>
      %51 = arith.mulf %49, %50 : vector<128x128xf32>
      %52 = arith.addf %45, %51 : vector<128x128xf32>
      %c0_22 = arith.constant 0 : index
      %c0_23 = arith.constant 0 : index
      %53 = vector.load %arg7[%c0_22, %c0_23] : memref<128x1xf32, #tpu.memory_space<vmem>>, vector<128x1xf32>
      %54 = vector.broadcast %53 : vector<128x1xf32> to vector<128x128xf32>
      %55 = arith.mulf %52, %54 : vector<128x128xf32>
      %56 = arith.truncf %55 : vector<128x128xf32> to vector<128x128xbf16>
      %c0_24 = arith.constant 0 : index
      %c0_25 = arith.constant 0 : index
      %c0_26 = arith.constant 0 : index
      %57 = vector.load %arg8[%c0_24, %c0_25, %c0_26] : memref<1x128x128xbf16, #tpu.memory_space<vmem>>, vector<1x128x128xbf16>
      %58 = vector.shape_cast %57 : vector<1x128x128xbf16> to vector<128x128xbf16>
      %59 = vector.shape_cast %56 : vector<128x128xbf16> to vector<1x128x128xbf16>
      tpu.vector_store %arg8[%c0_24, %c0_25, %c0_26], %59 {strides = array<i32>} : memref<1x128x128xbf16, #tpu.memory_space<vmem>>, vector<1x128x128xbf16>,
    } else {
    }
    return
  }
  func.func @transform_1(%arg0: i32, %arg1: i32) -> (i32, i32) {
    %c0_i32 = arith.constant 0 : i32
    %c0_i32_0 = arith.constant 0 : i32
    %c0_i32_1 = arith.constant 0 : i32
    return %c0_i32, %c0_i32_0 : i32, i32
  }
  func.func @transform_2(%arg0: i32, %arg1: i32) -> (i32, i32) {
    %c0_i32 = arith.constant 0 : i32
    %c0_i32_0 = arith.constant 0 : i32
    %c0_i32_1 = arith.constant 0 : i32
    return %c0_i32, %c0_i32_0 : i32, i32
  }
  func.func @transform_3(%arg0: i32, %arg1: i32) -> (i32, i32) {
    %c0_i32 = arith.constant 0 : i32
    %c0_i32_0 = arith.constant 0 : i32
    %c0_i32_1 = arith.constant 0 : i32
    return %c0_i32, %c0_i32_0 : i32, i32
  }
  func.func @transform_4(%arg0: i32, %arg1: i32) -> (i32, i32, i32) {
    %c1_i32 = arith.constant 1 : i32
    %0 = arith.subi %arg1, %c1_i32 : i32
    %c0_i32 = arith.constant 0 : i32
    %1 = arith.maxsi %0, %c0_i32 : i32
    %c2_i32 = arith.constant 2 : i32
    %2 = arith.minsi %1, %c2_i32 : i32
    %c0_i32_0 = arith.constant 0 : i32
    %c0_i32_1 = arith.constant 0 : i32
    return %arg0, %2, %c0_i32_0 : i32, i32, i32
  }
  func.func @transform_5(%arg0: i32, %arg1: i32) -> (i32, i32) {
    %c1_i32 = arith.constant 1 : i32
    %0 = arith.subi %arg1, %c1_i32 : i32
    %c0_i32 = arith.constant 0 : i32
    %1 = arith.maxsi %0, %c0_i32 : i32
    %c2_i32 = arith.constant 2 : i32
    %2 = arith.minsi %1, %c2_i32 : i32
    %c0_i32_0 = arith.constant 0 : i32
    %c0_i32_1 = arith.constant 0 : i32
    return %2, %c0_i32_0 : i32, i32
  }
  func.func @transform_6(%arg0: i32, %arg1: i32) -> (i32, i32, i32) {
    %c0_i32 = arith.constant 0 : i32
    %c0_i32_0 = arith.constant 0 : i32
    return %arg0, %arg1, %c0_i32 : i32, i32, i32
  }
}

module attributes {stable_mosaic.version = 11 : i64} {
  func.func @conv_gumbel_kernel(%arg0: i32, %arg1: i32, %arg2: memref<2x640x128xbf16, #tpu.memory_space<any>>, %arg3: memref<1152x4xbf16, #tpu.memory_space<vmem>>, %arg4: memref<1x4xf32, #tpu.memory_space<vmem>>, %arg5: memref<1x128x4xf32, #tpu.memory_space<vmem>>, %arg6: memref<1x128x4xf32, #tpu.memory_space<vmem>>, %arg7: memref<2x192x128xbf16, #tpu.memory_space<vmem>>, %arg8: memref<2x!tpu.dma_semaphore, #tpu.memory_space<semaphore_mem>>) attributes {dimension_semantics = [#tpu.dimension_semantics<parallel>, #tpu.dimension_semantics<arbitrary>], iteration_bounds = array<i64: 2, 3>, scalar_prefetch = 0 : i64, scratch_operands = 2 : i64, tpu.core_type = #tpu.core_type<tc>, window_params = [{}, {pipeline_mode = #tpu.pipeline_mode<synchronous>, transform_indices = @transform_1, window_bounds = array<i64: 1152, 4>}, {pipeline_mode = #tpu.pipeline_mode<synchronous>, transform_indices = @transform_2, window_bounds = array<i64: 1, 4>}, {transform_indices = @transform_3, window_bounds = array<i64: 1, 128, 4>}, {transform_indices = @transform_4, window_bounds = array<i64: 1, 128, 4>}]} {
    %c2_i32 = arith.constant 2 : i32
    %0 = arith.remsi %arg1, %c2_i32 : i32
    %c0_i32 = arith.constant 0 : i32
    %1 = arith.cmpi eq, %arg1, %c0_i32 : i32
    %2 = arith.extui %1 : i1 to i32
    %c0_i32_0 = arith.constant 0 : i32
    %3 = arith.cmpi ne, %2, %c0_i32_0 : i32
    scf.if %3 {
      %c128_i32_19 = arith.constant 128 : i32
      %54 = arith.muli %arg1, %c128_i32_19 : i32
      %c128_i32_20 = arith.constant 128 : i32
      %55 = arith.addi %c128_i32_20, %54 : i32
      %c32_i32_21 = arith.constant 32 : i32
      %56 = arith.subi %55, %c32_i32_21 : i32
      %c0_i32_22 = arith.constant 0 : i32
      %57 = tpu.memref_slice %arg2[%arg0, %56, %c0_i32_22] : memref<2x640x128xbf16, #tpu.memory_space<any>> -> memref<1x192x128xbf16, #tpu.memory_space<any>>
      %58 = tpu.memref_squeeze %57 : memref<1x192x128xbf16, #tpu.memory_space<any>> -> memref<192x128xbf16, #tpu.memory_space<any>>
      %c0_i32_23 = arith.constant 0 : i32
      %c0_i32_24 = arith.constant 0 : i32
      %59 = tpu.memref_slice %arg7[%0, %c0_i32_23, %c0_i32_24] : memref<2x192x128xbf16, #tpu.memory_space<vmem>> -> memref<1x192x128xbf16, #tpu.memory_space<vmem>>
      %60 = tpu.memref_squeeze %59 : memref<1x192x128xbf16, #tpu.memory_space<vmem>> -> memref<192x128xbf16, #tpu.memory_space<vmem>>
      %61 = tpu.memref_slice %arg8[%0] : memref<2x!tpu.dma_semaphore, #tpu.memory_space<semaphore_mem>> -> memref<1x!tpu.dma_semaphore, #tpu.memory_space<semaphore_mem>>
      %62 = tpu.memref_squeeze %61 : memref<1x!tpu.dma_semaphore, #tpu.memory_space<semaphore_mem>> -> memref<!tpu.dma_semaphore, #tpu.memory_space<semaphore_mem>>
      tpu.enqueue_dma source(%58 : memref<192x128xbf16, #tpu.memory_space<any>>) target(%60 : memref<192x128xbf16, #tpu.memory_space<vmem>>) target_semaphore(%62 : memref<!tpu.dma_semaphore, #tpu.memory_space<semaphore_mem>>)
    } else {
    }
    %c128_i32 = arith.constant 128 : i32
    %4 = arith.muli %arg1, %c128_i32 : i32
    %c128_i32_1 = arith.constant 128 : i32
    %5 = arith.addi %c128_i32_1, %4 : i32
    %c32_i32 = arith.constant 32 : i32
    %6 = arith.subi %5, %c32_i32 : i32
    %c0_i32_2 = arith.constant 0 : i32
    %7 = tpu.memref_slice %arg2[%arg0, %6, %c0_i32_2] : memref<2x640x128xbf16, #tpu.memory_space<any>> -> memref<1x192x128xbf16, #tpu.memory_space<any>>
    %8 = tpu.memref_squeeze %7 : memref<1x192x128xbf16, #tpu.memory_space<any>> -> memref<192x128xbf16, #tpu.memory_space<any>>
    %c0_i32_3 = arith.constant 0 : i32
    %c0_i32_4 = arith.constant 0 : i32
    %9 = tpu.memref_slice %arg7[%0, %c0_i32_3, %c0_i32_4] : memref<2x192x128xbf16, #tpu.memory_space<vmem>> -> memref<1x192x128xbf16, #tpu.memory_space<vmem>>
    %10 = tpu.memref_squeeze %9 : memref<1x192x128xbf16, #tpu.memory_space<vmem>> -> memref<192x128xbf16, #tpu.memory_space<vmem>>
    %11 = tpu.memref_slice %arg8[%0] : memref<2x!tpu.dma_semaphore, #tpu.memory_space<semaphore_mem>> -> memref<1x!tpu.dma_semaphore, #tpu.memory_space<semaphore_mem>>
    %12 = tpu.memref_squeeze %11 : memref<1x!tpu.dma_semaphore, #tpu.memory_space<semaphore_mem>> -> memref<!tpu.dma_semaphore, #tpu.memory_space<semaphore_mem>>
    tpu.wait_dma2 semaphore(%12 : memref<!tpu.dma_semaphore, #tpu.memory_space<semaphore_mem>>) src(%8 : memref<192x128xbf16, #tpu.memory_space<any>>) dst(%10 : memref<192x128xbf16, #tpu.memory_space<vmem>>)
    %c1_i32 = arith.constant 1 : i32
    %13 = arith.addi %arg1, %c1_i32 : i32
    %c3_i32 = arith.constant 3 : i32
    %14 = arith.cmpi slt, %13, %c3_i32 : i32
    %15 = arith.extui %14 : i1 to i32
    %c0_i32_5 = arith.constant 0 : i32
    %16 = arith.cmpi ne, %15, %c0_i32_5 : i32
    scf.if %16 {
      %c1_i32_19 = arith.constant 1 : i32
      %54 = arith.addi %arg1, %c1_i32_19 : i32
      %c1_i32_20 = arith.constant 1 : i32
      %55 = arith.subi %c1_i32_20, %0 : i32
      %c128_i32_21 = arith.constant 128 : i32
      %56 = arith.muli %54, %c128_i32_21 : i32
      %c128_i32_22 = arith.constant 128 : i32
      %57 = arith.addi %c128_i32_22, %56 : i32
      %c32_i32_23 = arith.constant 32 : i32
      %58 = arith.subi %57, %c32_i32_23 : i32
      %c0_i32_24 = arith.constant 0 : i32
      %59 = tpu.memref_slice %arg2[%arg0, %58, %c0_i32_24] : memref<2x640x128xbf16, #tpu.memory_space<any>> -> memref<1x192x128xbf16, #tpu.memory_space<any>>
      %60 = tpu.memref_squeeze %59 : memref<1x192x128xbf16, #tpu.memory_space<any>> -> memref<192x128xbf16, #tpu.memory_space<any>>
      %c0_i32_25 = arith.constant 0 : i32
      %c0_i32_26 = arith.constant 0 : i32
      %61 = tpu.memref_slice %arg7[%55, %c0_i32_25, %c0_i32_26] : memref<2x192x128xbf16, #tpu.memory_space<vmem>> -> memref<1x192x128xbf16, #tpu.memory_space<vmem>>
      %62 = tpu.memref_squeeze %61 : memref<1x192x128xbf16, #tpu.memory_space<vmem>> -> memref<192x128xbf16, #tpu.memory_space<vmem>>
      %63 = tpu.memref_slice %arg8[%55] : memref<2x!tpu.dma_semaphore, #tpu.memory_space<semaphore_mem>> -> memref<1x!tpu.dma_semaphore, #tpu.memory_space<semaphore_mem>>
      %64 = tpu.memref_squeeze %63 : memref<1x!tpu.dma_semaphore, #tpu.memory_space<semaphore_mem>> -> memref<!tpu.dma_semaphore, #tpu.memory_space<semaphore_mem>>
      tpu.enqueue_dma source(%60 : memref<192x128xbf16, #tpu.memory_space<any>>) target(%62 : memref<192x128xbf16, #tpu.memory_space<vmem>>) target_semaphore(%64 : memref<!tpu.dma_semaphore, #tpu.memory_space<semaphore_mem>>)
    } else {
    }
    %17 = arith.index_cast %0 : i32 to index
    %c0 = arith.constant 0 : index
    %c0_6 = arith.constant 0 : index
    %18 = vector.load %arg7[%17, %c0, %c0_6] : memref<2x192x128xbf16, #tpu.memory_space<vmem>>, vector<1x192x128xbf16>
    %19 = vector.shape_cast %18 : vector<1x192x128xbf16> to vector<192x128xbf16>
    %20 = vector.extract_strided_slice %19 {offsets = [7, 0], sizes = [128, 128], strides = [1, 1]} : vector<192x128xbf16> to vector<128x128xbf16>
    %21 = vector.extract_strided_slice %19 {offsets = [8, 0], sizes = [128, 128], strides = [1, 1]} : vector<192x128xbf16> to vector<128x128xbf16>
    %22 = vector.extract_strided_slice %19 {offsets = [9, 0], sizes = [128, 128], strides = [1, 1]} : vector<192x128xbf16> to vector<128x128xbf16>
    %23 = vector.extract_strided_slice %19 {offsets = [31, 0], sizes = [128, 128], strides = [1, 1]} : vector<192x128xbf16> to vector<128x128xbf16>
    %24 = vector.extract_strided_slice %19 {offsets = [32, 0], sizes = [128, 128], strides = [1, 1]} : vector<192x128xbf16> to vector<128x128xbf16>
    %25 = vector.extract_strided_slice %19 {offsets = [33, 0], sizes = [128, 128], strides = [1, 1]} : vector<192x128xbf16> to vector<128x128xbf16>
    %26 = vector.extract_strided_slice %19 {offsets = [55, 0], sizes = [128, 128], strides = [1, 1]} : vector<192x128xbf16> to vector<128x128xbf16>
    %27 = vector.extract_strided_slice %19 {offsets = [56, 0], sizes = [128, 128], strides = [1, 1]} : vector<192x128xbf16> to vector<128x128xbf16>
    %28 = vector.extract_strided_slice %19 {offsets = [57, 0], sizes = [128, 128], strides = [1, 1]} : vector<192x128xbf16> to vector<128x128xbf16>
    %29 = tpu.concatenate %20, %21, %22, %23, %24, %25, %26, %27, %28 in 1 : vector<128x128xbf16>, vector<128x128xbf16>, vector<128x128xbf16>, vector<128x128xbf16>, vector<128x128xbf16>, vector<128x128xbf16>, vector<128x128xbf16>, vector<128x128xbf16>, vector<128x128xbf16> -> vector<128x1152xbf16>
    %c0_7 = arith.constant 0 : index
    %c0_8 = arith.constant 0 : index
    %30 = vector.load %arg3[%c0_7, %c0_8] : memref<1152x4xbf16, #tpu.memory_space<vmem>>, vector<1152x4xbf16>
    %cst = arith.constant dense<0.000000e+00> : vector<128x4xf32>
    %31 = tpu.matmul %29, %30, %cst {dimension_numbers = #tpu.dot_dimension_numbers<[1], [0], [0], [1], [0, 0, 1, 1], [], []>} : vector<128x1152xbf16>, vector<1152x4xbf16>, vector<128x4xf32> -> vector<128x4xf32>
    %c0_9 = arith.constant 0 : index
    %c0_10 = arith.constant 0 : index
    %32 = vector.load %arg4[%c0_9, %c0_10] : memref<1x4xf32, #tpu.memory_space<vmem>>, vector<1x4xf32>
    %33 = vector.broadcast %32 : vector<1x4xf32> to vector<128x4xf32>
    %34 = arith.addf %31, %33 : vector<128x4xf32>
    %c0_11 = arith.constant 0 : index
    %c0_12 = arith.constant 0 : index
    %c0_13 = arith.constant 0 : index
    %35 = vector.load %arg5[%c0_11, %c0_12, %c0_13] : memref<1x128x4xf32, #tpu.memory_space<vmem>>, vector<1x128x4xf32>
    %36 = vector.shape_cast %35 : vector<1x128x4xf32> to vector<128x4xf32>
    %37 = arith.addf %34, %36 : vector<128x4xf32>
    %cst_14 = arith.constant dense<0xFF800000> : vector<128xf32>
    %38 = vector.multi_reduction <maximumf>, %37, %cst_14 [1] : vector<128x4xf32> to vector<128xf32>
    %39 = vector.shape_cast %38 : vector<128xf32> to vector<128x1xf32>
    %40 = tpu.iota {dimensions = array<i32: 1>} : vector<128x4xi32>
    %41 = vector.broadcast %39 : vector<128x1xf32> to vector<128x4xf32>
    %42 = arith.cmpf oge, %37, %41 : vector<128x4xf32>
    %c4_i32 = arith.constant 4 : i32
    %43 = vector.broadcast %c4_i32 : i32 to vector<128x4xi32>
    %44 = arith.select %42, %40, %43 : vector<128x4xi1>, vector<128x4xi32>
    %cst_15 = arith.constant dense<2147483647> : vector<128xi32>
    %45 = vector.multi_reduction <minsi>, %44, %cst_15 [1] : vector<128x4xi32> to vector<128xi32>
    %46 = vector.shape_cast %45 : vector<128xi32> to vector<128x1xi32>
    %47 = vector.broadcast %46 : vector<128x1xi32> to vector<128x4xi32>
    %48 = arith.cmpi eq, %40, %47 : vector<128x4xi32>
    %49 = arith.extui %48 : vector<128x4xi1> to vector<128x4xi32>
    %50 = arith.sitofp %49 : vector<128x4xi32> to vector<128x4xf32>
    %c0_16 = arith.constant 0 : index
    %c0_17 = arith.constant 0 : index
    %c0_18 = arith.constant 0 : index
    %51 = vector.load %arg6[%c0_16, %c0_17, %c0_18] : memref<1x128x4xf32, #tpu.memory_space<vmem>>, vector<1x128x4xf32>
    %52 = vector.shape_cast %51 : vector<1x128x4xf32> to vector<128x4xf32>
    %53 = vector.shape_cast %50 : vector<128x4xf32> to vector<1x128x4xf32>
    tpu.vector_store %arg6[%c0_16, %c0_17, %c0_18], %53 {strides = array<i32>} : memref<1x128x4xf32, #tpu.memory_space<vmem>>, vector<1x128x4xf32>,
    return
  }
  func.func @transform_1(%arg0: i32, %arg1: i32) -> (i32, i32) {
    %c0_i32 = arith.constant 0 : i32
    %c0_i32_0 = arith.constant 0 : i32
    %c0_i32_1 = arith.constant 0 : i32
    return %c0_i32, %c0_i32_0 : i32, i32
  }
  func.func @transform_2(%arg0: i32, %arg1: i32) -> (i32, i32) {
    %c0_i32 = arith.constant 0 : i32
    %c0_i32_0 = arith.constant 0 : i32
    %c0_i32_1 = arith.constant 0 : i32
    return %c0_i32, %c0_i32_0 : i32, i32
  }
  func.func @transform_3(%arg0: i32, %arg1: i32) -> (i32, i32, i32) {
    %c0_i32 = arith.constant 0 : i32
    %c0_i32_0 = arith.constant 0 : i32
    return %arg0, %arg1, %c0_i32 : i32, i32, i32
  }
  func.func @transform_4(%arg0: i32, %arg1: i32) -> (i32, i32, i32) {
    %c0_i32 = arith.constant 0 : i32
    %c0_i32_0 = arith.constant 0 : i32
    return %arg0, %arg1, %c0_i32 : i32, i32, i32
  }
}

</mosaic_0001>

<llo_original>
// kernel: noise_net_forward.4
$region0: #{noise_net_forward.4}
  #allocation0 [shape = 'u32[]', space=smem, size = 0x4, offset = 0x4, fixed_abs, tag = 'smem constant byte address 0x4 - core index']
  #allocation1 [shape = 'u32[144,128]{1,0:T(1,128)}', space=vmem, size = 0x12000, scoped, tag = 'internal scratch']
  %s0 = inlined_call_operand.vmem [shape: bf16[2,384,36], index: 0, kind: input, shape index: {}]
  %s1 = inlined_call_operand.vmem [shape: bf16[36,128], index: 1, kind: input, shape index: {}]
  %s2 = inlined_call_operand.vmem [shape: f32[1,128], index: 2, kind: input, shape index: {}]
  %s3 = inlined_call_operand.vmem [shape: f32[1,128], index: 3, kind: input, shape index: {}]
  %s4 = inlined_call_operand.vmem [shape: f32[2,384,1], index: 4, kind: input, shape index: {}]
  %s5 = inlined_call_operand.vmem [shape: f32[384,1], index: 5, kind: input, shape index: {}]
  %s6 = inlined_call_operand.vmem [shape: bf16[2,640,128], index: 6, kind: output, shape index: {}]
  %s7 = sld [smem:[#allocation0]]
  $region65: #{noise_net_forward.4} parent=0
    _
  %s9 = ssub.s32 1, %s7
  %s10 = scalar_select 0, %s9, %s7
  loop: start=0, step=1, limit=12
  $region2: #{noise_net_forward.4} parent=0 // loop_pre_header
    _
  $region3: #{noise_net_forward.4} parent=0 // loop_header
    %s12 = sphi 0, %s16
    %p13 = scmp.ge.s32.totalorder %s12, 12
    %s19 = sphi 0, %s31
    %s20 = sphi 0, %s27
    %s21 = sphi 0, %s19
    %s22 = sphi 0, %s20
    %s23 = sphi 0, %s21
    %s24 = sphi 0, %s22
    %s46 = sphi 0, %s48
    %s49 = sphi 0, %s46
    %s50 = sphi 0, %s49
    %s66 = sphi 0, %s50
    %s70 = sphi 0, %s70
    %s72 = sphi 0, %s70
    %s73 = sphi 0, %s72
    %s87 = sphi 0, %s73
    %s91 = sphi 0, %s91
    %s93 = sphi 0, %s91
    %s94 = sphi 0, %s93
    %s108 = sphi 0, %s94
    %s112 = sphi 0, %s112
    %s114 = sphi 0, %s112
    %s115 = sphi 0, %s114
    %s129 = sphi 0, %s115
    %s147 = sphi 0, %s149
    %s150 = sphi 0, %s147
    %s151 = sphi 0, %s150
    %s167 = sphi 0, %s151
    %s183 = sphi 0, %s185
    %s186 = sphi 0, %s183
    %s187 = sphi 0, %s186
    %s203 = sphi 0, %s187
    %s211 = sphi 0, %s213
    %s214 = sphi 0, %s211
    %s215 = sphi 0, %s214
    %s231 = sphi 0, %s215
  $region4: #{noise_net_forward.4} parent=0 // loop_header_branch
    %15 = sbr.rel (%p13) target = $region8
  $region5: #{noise_net_forward.4} parent=0 // loop_body
    %s17 = ssub.s32 %s12, 1
    %s18 = ssub.s32 %s12, 2
    %s25 = sadd.s32 1, %s20
    %p26 = scmp.ge.s32.totalorder %s25, 5
    %s27 = scalar_select %p26, 0, %s25
    %s28 = sadd.s32 1, %s19
    %s29 = scalar_select %p26, %s28, %s19
    %p30 = scmp.ge.s32.totalorder %s29, 2
    %s31 = scalar_select %p30, 0, %s29
    %s32 = ssub.s32 %s20, 1
    %p33 = scmp.gt.s32.totalorder %s32, 0
    %s34 = scalar_select %p33, %s32, 0
    %p35 = scmp.lt.s32.totalorder %s34, 2
    %s36 = scalar_select %p35, %s34, 2
    %s37 = ssub.s32 %s27, 1
    %p38 = scmp.gt.s32.totalorder %s37, 0
    %s39 = scalar_select %p38, %s37, 0
    %p40 = scmp.lt.s32.totalorder %s39, 2
    %s41 = scalar_select %p40, %s39, 2
    %s42 = ssub.s32 %s19, %s31
    %s43 = ssub.s32 %s36, %s41
    %s44 = sor.u32 %s42, %s43
    %p45 = scmp.eq.s32.totalorder %s44, 0
    %s47 = sadd.s32 %s46, 1
    %s48 = scalar_select %p45, %s46, %s47
    %p51 = pneg %p45
    %p52 = scmp.eq.s32.totalorder %s12, 9
    %p53 = por %p51, %p52
    %p54 = scmp.ne.s32.totalorder %s46, %s49
    %p55 = scmp.eq.s32.totalorder %s12, 0
    %p56 = por %p54, %p55
    %p57 = scmp.ne.s32.totalorder %s46, %s49
    %p58 = scmp.eq.s32.totalorder %s17, 9
    %p59 = por %p57, %p58
    %p60 = scmp.ne.s32.totalorder %s49, %s50
    %p61 = scmp.eq.s32.totalorder %s17, 0
    %p62 = por %p60, %p61
    %p63 = scmp.ne.s32.totalorder %s49, %s50
    %p64 = scmp.eq.s32.totalorder %s18, 9
    %p65 = por %p63, %p64
    %p67 = scmp.ne.s32.totalorder %s50, %s66
    %p68 = scmp.eq.s32.totalorder %s18, 0
    %p69 = por %p67, %p68
    %s71 = sadd.s32 %s70, 1
    %p74 = scmp.eq.s32.totalorder %s12, 9
    %p75 = scmp.ne.s32.totalorder %s70, %s72
    %p76 = scmp.eq.s32.totalorder %s12, 0
    %p77 = por %p75, %p76
    %p78 = scmp.ne.s32.totalorder %s70, %s72
    %p79 = scmp.eq.s32.totalorder %s17, 9
    %p80 = por %p78, %p79
    %p81 = scmp.ne.s32.totalorder %s72, %s73
    %p82 = scmp.eq.s32.totalorder %s17, 0
    %p83 = por %p81, %p82
    %p84 = scmp.ne.s32.totalorder %s72, %s73
    %p85 = scmp.eq.s32.totalorder %s18, 9
    %p86 = por %p84, %p85
    %p88 = scmp.ne.s32.totalorder %s73, %s87
    %p89 = scmp.eq.s32.totalorder %s18, 0
    %p90 = por %p88, %p89
    %s92 = sadd.s32 %s91, 1
    %p95 = scmp.eq.s32.totalorder %s12, 9
    %p96 = scmp.ne.s32.totalorder %s91, %s93
    %p97 = scmp.eq.s32.totalorder %s12, 0
    %p98 = por %p96, %p97
    %p99 = scmp.ne.s32.totalorder %s91, %s93
    %p100 = scmp.eq.s32.totalorder %s17, 9
    %p101 = por %p99, %p100
    %p102 = scmp.ne.s32.totalorder %s93, %s94
    %p103 = scmp.eq.s32.totalorder %s17, 0
    %p104 = por %p102, %p103
    %p105 = scmp.ne.s32.totalorder %s93, %s94
    %p106 = scmp.eq.s32.totalorder %s18, 9
    %p107 = por %p105, %p106
    %p109 = scmp.ne.s32.totalorder %s94, %s108
    %p110 = scmp.eq.s32.totalorder %s18, 0
    %p111 = por %p109, %p110
    %s113 = sadd.s32 %s112, 1
    %p116 = scmp.eq.s32.totalorder %s12, 9
    %p117 = scmp.ne.s32.totalorder %s112, %s114
    %p118 = scmp.eq.s32.totalorder %s12, 0
    %p119 = por %p117, %p118
    %p120 = scmp.ne.s32.totalorder %s112, %s114
    %p121 = scmp.eq.s32.totalorder %s17, 9
    %p122 = por %p120, %p121
    %p123 = scmp.ne.s32.totalorder %s114, %s115
    %p124 = scmp.eq.s32.totalorder %s17, 0
    %p125 = por %p123, %p124
    %p126 = scmp.ne.s32.totalorder %s114, %s115
    %p127 = scmp.eq.s32.totalorder %s18, 9
    %p128 = por %p126, %p127
    %p130 = scmp.ne.s32.totalorder %s115, %s129
    %p131 = scmp.eq.s32.totalorder %s18, 0
    %p132 = por %p130, %p131
    %s133 = ssub.s32 %s20, 1
    %p134 = scmp.gt.s32.totalorder %s133, 0
    %s135 = scalar_select %p134, %s133, 0
    %p136 = scmp.lt.s32.totalorder %s135, 2
    %s137 = scalar_select %p136, %s135, 2
    %s138 = ssub.s32 %s27, 1
    %p139 = scmp.gt.s32.totalorder %s138, 0
    %s140 = scalar_select %p139, %s138, 0
    %p141 = scmp.lt.s32.totalorder %s140, 2
    %s142 = scalar_select %p141, %s140, 2
    %s143 = ssub.s32 %s19, %s31
    %s144 = ssub.s32 %s137, %s142
    %s145 = sor.u32 %s143, %s144
    %p146 = scmp.eq.s32.totalorder %s145, 0
    %s148 = sadd.s32 %s147, 1
    %s149 = scalar_select %p146, %s147, %s148
    %p152 = pneg %p146
    %p153 = scmp.eq.s32.totalorder %s12, 9
    %p154 = por %p152, %p153
    %p155 = scmp.ne.s32.totalorder %s147, %s150
    %p156 = scmp.eq.s32.totalorder %s12, 0
    %p157 = por %p155, %p156
    %p158 = scmp.ne.s32.totalorder %s147, %s150
    %p159 = scmp.eq.s32.totalorder %s17, 9
    %p160 = por %p158, %p159
    %p161 = scmp.ne.s32.totalorder %s150, %s151
    %p162 = scmp.eq.s32.totalorder %s17, 0
    %p163 = por %p161, %p162
    %p164 = scmp.ne.s32.totalorder %s150, %s151
    %p165 = scmp.eq.s32.totalorder %s18, 9
    %p166 = por %p164, %p165
    %p168 = scmp.ne.s32.totalorder %s151, %s167
    %p169 = scmp.eq.s32.totalorder %s18, 0
    %p170 = por %p168, %p169
    %s171 = ssub.s32 %s20, 1
    %p172 = scmp.gt.s32.totalorder %s171, 0
    %s173 = scalar_select %p172, %s171, 0
    %p174 = scmp.lt.s32.totalorder %s173, 2
    %s175 = scalar_select %p174, %s173, 2
    %s176 = ssub.s32 %s27, 1
    %p177 = scmp.gt.s32.totalorder %s176, 0
    %s178 = scalar_select %p177, %s176, 0
    %p179 = scmp.lt.s32.totalorder %s178, 2
    %s180 = scalar_select %p179, %s178, 2
    %s181 = ssub.s32 %s175, %s180
    %p182 = scmp.eq.s32.totalorder %s181, 0
    %s184 = sadd.s32 %s183, 1
    %s185 = scalar_select %p182, %s183, %s184
    %p188 = pneg %p182
    %p189 = scmp.eq.s32.totalorder %s12, 9
    %p190 = por %p188, %p189
    %p191 = scmp.ne.s32.totalorder %s183, %s186
    %p192 = scmp.eq.s32.totalorder %s12, 0
    %p193 = por %p191, %p192
    %p194 = scmp.ne.s32.totalorder %s183, %s186
    %p195 = scmp.eq.s32.totalorder %s17, 9
    %p196 = por %p194, %p195
    %p197 = scmp.ne.s32.totalorder %s186, %s187
    %p198 = scmp.eq.s32.totalorder %s17, 0
    %p199 = por %p197, %p198
    %p200 = scmp.ne.s32.totalorder %s186, %s187
    %p201 = scmp.eq.s32.totalorder %s18, 9
    %p202 = por %p200, %p201
    %p204 = scmp.ne.s32.totalorder %s187, %s203
    %p205 = scmp.eq.s32.totalorder %s18, 0
    %p206 = por %p204, %p205
    %s207 = ssub.s32 %s19, %s31
    %s208 = ssub.s32 %s20, %s27
    %s209 = sor.u32 %s207, %s208
    %p210 = scmp.eq.s32.totalorder %s209, 0
    %s212 = sadd.s32 %s211, 1
    %s213 = scalar_select %p210, %s211, %s212
    %p216 = pneg %p210
    %p217 = scmp.eq.s32.totalorder %s12, 9
    %p218 = por %p216, %p217
    %p219 = scmp.ne.s32.totalorder %s211, %s214
    %p220 = scmp.eq.s32.totalorder %s12, 0
    %p221 = por %p219, %p220
    %p222 = scmp.ne.s32.totalorder %s211, %s214
    %p223 = scmp.eq.s32.totalorder %s17, 9
    %p224 = por %p222, %p223
    %p225 = scmp.ne.s32.totalorder %s214, %s215
    %p226 = scmp.eq.s32.totalorder %s17, 0
    %p227 = por %p225, %p226
    %p228 = scmp.ne.s32.totalorder %s214, %s215
    %p229 = scmp.eq.s32.totalorder %s18, 9
    %p230 = por %p228, %p229
    %p232 = scmp.ne.s32.totalorder %s215, %s231
    %p233 = scmp.eq.s32.totalorder %s18, 0
    %p234 = por %p232, %p233
    %p235 = scmp.le.s32.totalorder 1, %s12
    %p236 = scmp.lt.s32.totalorder %s12, 11
    %p237 = pnand %p235, %p236
    %p238 = pneg %p237
    // Predicated region
    $region9: #{noise_net_forward.4} parent=5 // pred_check
      _
    $region10: #{noise_net_forward.4} parent=5 // pred_check_branch
      %240 = sbr.rel (%p237) target = $region12
    $region11: #{noise_net_forward.4} parent=5 // pred_region
      %s241 = ssub.s32 %s12, 1
      // Predicated region
      $region13: #{noise_net_forward.4} parent=11 // pred_check
        %p242 = pneg %p83
      $region14: #{noise_net_forward.4} parent=11 // pred_check_branch
        %244 = sbr.rel (%p242) target = $region16
      $region15: #{noise_net_forward.4} parent=11 // pred_region
        _
      $region16: #{noise_net_forward.4} parent=11 // pred_fallthru
        _
      // Predicated region
      $region17: #{noise_net_forward.4} parent=11 // pred_check
        %p245 = pneg %p104
      $region18: #{noise_net_forward.4} parent=11 // pred_check_branch
        %247 = sbr.rel (%p245) target = $region20
      $region19: #{noise_net_forward.4} parent=11 // pred_region
        _
      $region20: #{noise_net_forward.4} parent=11 // pred_fallthru
        _
      // Predicated region
      $region21: #{noise_net_forward.4} parent=11 // pred_check
        %p248 = pneg %p125
      $region22: #{noise_net_forward.4} parent=11 // pred_check_branch
        %250 = sbr.rel (%p248) target = $region24
      $region23: #{noise_net_forward.4} parent=11 // pred_region
        _
      $region24: #{noise_net_forward.4} parent=11 // pred_fallthru
        _
    $region12: #{noise_net_forward.4} parent=5 // pred_fallthru
      _
    %p251 = scmp.lt.s32.totalorder %s12, 10
    // Predicated region
    $region25: #{noise_net_forward.4} parent=5 // pred_check
      %p252 = pneg %p251
    $region26: #{noise_net_forward.4} parent=5 // pred_check_branch
      %254 = sbr.rel (%p252) target = $region28
    $region27: #{noise_net_forward.4} parent=5 // pred_region
      // Predicated region
      $region29: #{noise_net_forward.4} parent=27 // pred_check
        %p255 = pneg %p56
      $region30: #{noise_net_forward.4} parent=27 // pred_check_branch
        %257 = sbr.rel (%p255) target = $region32
      $region31: #{noise_net_forward.4} parent=27 // pred_region
        %s258 = ssub.s32 %s20, 1
        %p259 = scmp.gt.s32.totalorder %s258, 0
        %s260 = scalar_select %p259, %s258, 0
        %p261 = scmp.lt.s32.totalorder %s260, 2
        %s262 = scalar_select %p261, %s260, 2
        %s263 = smul.u32 16, %s262
        %p264 = scmp.lt.s32.totalorder %s19, 1
        %s265 = scalar_select %p264, %s19, 1
        %p266 = scmp.lt.s32.totalorder %s263, 47
        %s267 = scalar_select %p266, %s263, 47
        %s268 = smul.addr %s265, 48
        %s269 = sadd.s32 %s267, %s268
        %s270 = smul.addr %s269, 4
        %s271 = scalar_lea.vmem %s0, %s270
        %s272 = ssub.s32 %s20, 1
        %p273 = scmp.gt.s32.totalorder %s272, 0
        %s274 = scalar_select %p273, %s272, 0
        %p275 = scmp.lt.s32.totalorder %s274, 2
        %s276 = scalar_select %p275, %s274, 2
        %s277 = smul.u32 16, %s276
      $region32: #{noise_net_forward.4} parent=27 // pred_fallthru
        _
      // Predicated region
      $region33: #{noise_net_forward.4} parent=27 // pred_check
        %p278 = pneg %p157
      $region34: #{noise_net_forward.4} parent=27 // pred_check_branch
        %280 = sbr.rel (%p278) target = $region36
      $region35: #{noise_net_forward.4} parent=27 // pred_region
        %s281 = ssub.s32 %s20, 1
        %p282 = scmp.gt.s32.totalorder %s281, 0
        %s283 = scalar_select %p282, %s281, 0
        %p284 = scmp.lt.s32.totalorder %s283, 2
        %s285 = scalar_select %p284, %s283, 2
        %s286 = smul.u32 16, %s285
        %p287 = scmp.lt.s32.totalorder %s19, 1
        %s288 = scalar_select %p287, %s19, 1
        %p289 = scmp.lt.s32.totalorder %s286, 47
        %s290 = scalar_select %p289, %s286, 47
        %s291 = smul.addr %s288, 48
        %s292 = sadd.s32 %s290, %s291
        %s293 = smul.addr %s292, 8
        %s294 = scalar_lea.vmem %s4, %s293
        %s295 = ssub.s32 %s20, 1
        %p296 = scmp.gt.s32.totalorder %s295, 0
        %s297 = scalar_select %p296, %s295, 0
        %p298 = scmp.lt.s32.totalorder %s297, 2
        %s299 = scalar_select %p298, %s297, 2
        %s300 = smul.u32 16, %s299
      $region36: #{noise_net_forward.4} parent=27 // pred_fallthru
        _
      // Predicated region
      $region37: #{noise_net_forward.4} parent=27 // pred_check
        %p301 = pneg %p193
      $region38: #{noise_net_forward.4} parent=27 // pred_check_branch
        %303 = sbr.rel (%p301) target = $region40
      $region39: #{noise_net_forward.4} parent=27 // pred_region
        %s304 = ssub.s32 %s20, 1
        %p305 = scmp.gt.s32.totalorder %s304, 0
        %s306 = scalar_select %p305, %s304, 0
        %p307 = scmp.lt.s32.totalorder %s306, 2
        %s308 = scalar_select %p307, %s306, 2
        %s309 = smul.u32 16, %s308
        %p310 = scmp.lt.s32.totalorder %s309, 47
        %s311 = scalar_select %p310, %s309, 47
        %s312 = smul.addr %s311, 8
        %s313 = scalar_lea.vmem %s5, %s312
        %s314 = ssub.s32 %s20, 1
        %p315 = scmp.gt.s32.totalorder %s314, 0
        %s316 = scalar_select %p315, %s314, 0
        %p317 = scmp.lt.s32.totalorder %s316, 2
        %s318 = scalar_select %p317, %s316, 2
        %s319 = smul.u32 16, %s318
      $region40: #{noise_net_forward.4} parent=27 // pred_fallthru
        _
    $region28: #{noise_net_forward.4} parent=5 // pred_fallthru
      _
    %p320 = scmp.le.s32.totalorder 1, %s12
    %p321 = scmp.lt.s32.totalorder %s12, 11
    %p322 = pnand %p320, %p321
    %p323 = pneg %p322
    // Predicated region
    $region41: #{noise_net_forward.4} parent=5 // pred_check
      _
    $region42: #{noise_net_forward.4} parent=5 // pred_check_branch
      %325 = sbr.rel (%p322) target = $region44
    $region43: #{noise_net_forward.4} parent=5 // pred_region
      %s326 = ssub.s32 %s12, 1
      %s327 = ssub.s32 %s22, 1
      %p328 = scmp.gt.s32.totalorder %s327, 0
      %s329 = scalar_select %p328, %s327, 0
      %p330 = scmp.lt.s32.totalorder %s329, 2
      %s331 = scalar_select %p330, %s329, 2
      %s332 = smul.u32 16, %s331
      %p333 = scmp.lt.s32.totalorder %s21, 1
      %s334 = scalar_select %p333, %s21, 1
      %p335 = scmp.lt.s32.totalorder %s332, 47
      %s336 = scalar_select %p335, %s332, 47
      %s337 = smul.addr %s334, 48
      %s338 = sadd.s32 %s336, %s337
      %s339 = smul.addr %s338, 4
      %s340 = scalar_lea.vmem %s0, %s339
      %p341 = pneg %p62
      %p342 = pneg %p59
      %p343 = pneg %p83
      %p344 = pneg %p80
      %p345 = pneg %p104
      %p346 = pneg %p101
      %p347 = pneg %p125
      %p348 = pneg %p122
      %s349 = ssub.s32 %s22, 1
      %p350 = scmp.gt.s32.totalorder %s349, 0
      %s351 = scalar_select %p350, %s349, 0
      %p352 = scmp.lt.s32.totalorder %s351, 2
      %s353 = scalar_select %p352, %s351, 2
      %s354 = smul.u32 16, %s353
      %p355 = scmp.lt.s32.totalorder %s21, 1
      %s356 = scalar_select %p355, %s21, 1
      %p357 = scmp.lt.s32.totalorder %s354, 47
      %s358 = scalar_select %p357, %s354, 47
      %s359 = smul.addr %s356, 48
      %s360 = sadd.s32 %s358, %s359
      %s361 = smul.addr %s360, 8
      %s362 = scalar_lea.vmem %s4, %s361
      %p363 = pneg %p163
      %p364 = pneg %p160
      %s365 = ssub.s32 %s22, 1
      %p366 = scmp.gt.s32.totalorder %s365, 0
      %s367 = scalar_select %p366, %s365, 0
      %p368 = scmp.lt.s32.totalorder %s367, 2
      %s369 = scalar_select %p368, %s367, 2
      %s370 = smul.u32 16, %s369
      %p371 = scmp.lt.s32.totalorder %s370, 47
      %s372 = scalar_select %p371, %s370, 47
      %s373 = smul.addr %s372, 8
      %s374 = scalar_lea.vmem %s5, %s373
      %p375 = pneg %p199
      %p376 = pneg %p196
      %p377 = pneg %p227
      %p378 = pneg %p224
      %s379 = smul.u32 16, %s22
      %p380 = scmp.lt.s32.totalorder %s21, 1
      %s381 = scalar_select %p380, %s21, 1
      %p382 = scmp.lt.s32.totalorder %s379, 79
      %s383 = scalar_select %p382, %s379, 79
      %s384 = smul.addr %s381, 80
      %s385 = sadd.s32 %s383, %s384
      %s386 = smul.addr %s385, 4
      %s387 = scalar_lea.vmem %s6, %s386
      %s388 = ssub.s32 %s22, 1
      %p389 = scmp.gt.s32.totalorder %s388, 0
      %s390 = scalar_select %p389, %s388, 0
      %p391 = scmp.lt.s32.totalorder %s390, 2
      %s392 = scalar_select %p391, %s390, 2
      %s393 = smul.u32 16, %s392
      %p394 = scmp.lt.s32.totalorder %s21, 1
      %s395 = scalar_select %p394, %s21, 1
      %p396 = scmp.lt.s32.totalorder %s393, 47
      %s397 = scalar_select %p396, %s393, 47
      %s398 = smul.addr %s395, 48
      %s399 = sadd.s32 %s397, %s398
      %s400 = smul.addr %s399, 4
      %s401 = scalar_lea.vmem %s0, %s400
      %s402 = ssub.s32 %s22, 1
      %p403 = scmp.gt.s32.totalorder %s402, 0
      %s404 = scalar_select %p403, %s402, 0
      %p405 = scmp.lt.s32.totalorder %s404, 2
      %s406 = scalar_select %p405, %s404, 2
      %s407 = smul.u32 16, %s406
      %s408 = ssub.s32 %s22, 1
      %p409 = scmp.gt.s32.totalorder %s408, 0
      %s410 = scalar_select %p409, %s408, 0
      %p411 = scmp.lt.s32.totalorder %s410, 2
      %s412 = scalar_select %p411, %s410, 2
      %s413 = smul.u32 16, %s412
      %p414 = scmp.lt.s32.totalorder %s21, 1
      %s415 = scalar_select %p414, %s21, 1
      %p416 = scmp.lt.s32.totalorder %s413, 47
      %s417 = scalar_select %p416, %s413, 47
      %s418 = smul.addr %s415, 48
      %s419 = sadd.s32 %s417, %s418
      %s420 = smul.addr %s419, 8
      %s421 = scalar_lea.vmem %s4, %s420
      %s422 = ssub.s32 %s22, 1
      %p423 = scmp.gt.s32.totalorder %s422, 0
      %s424 = scalar_select %p423, %s422, 0
      %p425 = scmp.lt.s32.totalorder %s424, 2
      %s426 = scalar_select %p425, %s424, 2
      %s427 = smul.u32 16, %s426
      %s428 = ssub.s32 %s22, 1
      %p429 = scmp.gt.s32.totalorder %s428, 0
      %s430 = scalar_select %p429, %s428, 0
      %p431 = scmp.lt.s32.totalorder %s430, 2
      %s432 = scalar_select %p431, %s430, 2
      %s433 = smul.u32 16, %s432
      %p434 = scmp.lt.s32.totalorder %s433, 47
      %s435 = scalar_select %p434, %s433, 47
      %s436 = smul.addr %s435, 8
      %s437 = scalar_lea.vmem %s5, %s436
      %s438 = ssub.s32 %s22, 1
      %p439 = scmp.gt.s32.totalorder %s438, 0
      %s440 = scalar_select %p439, %s438, 0
      %p441 = scmp.lt.s32.totalorder %s440, 2
      %s442 = scalar_select %p441, %s440, 2
      %s443 = smul.u32 16, %s442
      %s444 = smul.u32 16, %s22
      %p445 = scmp.lt.s32.totalorder %s21, 1
      %s446 = scalar_select %p445, %s21, 1
      %p447 = scmp.lt.s32.totalorder %s444, 79
      %s448 = scalar_select %p447, %s444, 79
      %s449 = smul.addr %s446, 80
      %s450 = sadd.s32 %s448, %s449
      %s451 = smul.addr %s450, 4
      %s452 = scalar_lea.vmem %s6, %s451
      %s453 = smul.u32 16, %s22
      %s455 = ssub.s32 %s22, 1
      %p456 = scmp.ge.s32.totalorder %s455, 0
      %p457 = scmp.lt.s32.totalorder %s455, 3
      %p458 = pnand %p456, %p457
      %p459 = pneg %p458
      // Predicated region
      $region45: #{noise_net_forward.4} parent=43 // pred_check
        _
      $region46: #{noise_net_forward.4} parent=43 // pred_check_branch
        %461 = sbr.rel (%p458) target = $region48
      $region47: #{noise_net_forward.4} parent=43 // pred_region
        %v462 = vld [vmem:[%s401] sm:$0xf]
        %v463 = vld [vmem:[%s401 + $0x4] sm:$0xf]
        %v464 = vld [vmem:[%s401 + $0x8] sm:$0xf]
        %v465 = vld [vmem:[%s401 + $0xc] sm:$0xf]
        %v466 = vld [vmem:[%s401 + $0x10] sm:$0xf]
        %v467 = vld [vmem:[%s401 + $0x14] sm:$0xf]
        %v468 = vld [vmem:[%s401 + $0x18] sm:$0xf]
        %v469 = vld [vmem:[%s401 + $0x1c] sm:$0xf]
        %v470 = vld [vmem:[%s401 + $0x20] sm:$0xf]
        %v471 = vld [vmem:[%s401 + $0x24] sm:$0xf]
        %v472 = vld [vmem:[%s401 + $0x28] sm:$0xf]
        %v473 = vld [vmem:[%s401 + $0x2c] sm:$0xf]
        %v474 = vld [vmem:[%s401 + $0x30] sm:$0xf]
        %v475 = vld [vmem:[%s401 + $0x34] sm:$0xf]
        %v476 = vld [vmem:[%s401 + $0x38] sm:$0xf]
        %v477 = vld [vmem:[%s401 + $0x3c] sm:$0xf]
        %v478 = vld [vmem:[%s1] sm:$0xf]
        %v479 = vld [vmem:[%s1 + $0x4] sm:$0xf]
        %v480 = vld [vmem:[%s1 + $0x8] sm:$0xf]
        %v481 = vld [vmem:[%s1 + $0xc] sm:$0xf]
        %v482 = vld [vmem:[%s1 + $0x10] sm:$0x3]
        %v483 = vld [vmem:[%s2] sm:$0x1]
        %v485 = vlaneseq
        %v486 = vshrl.u32 %v485, 7
        %v487 = vsub.s32 0, %v486
        %v488 = vrot.slane %v483, %v487
        %v506 = vunpack.c.l.b16 %v462
        %v507 = vunpack.c.l.b16 %v463
        %v508 = vunpack.c.l.b16 %v464
        %v509 = vunpack.c.l.b16 %v465
        %v510 = vunpack.c.l.b16 %v466
        %v511 = vunpack.c.l.b16 %v467
        %v512 = vunpack.c.l.b16 %v468
        %v513 = vunpack.c.l.b16 %v469
        %v514 = vunpack.c.l.b16 %v470
        %v515 = vunpack.c.l.b16 %v471
        %v516 = vunpack.c.l.b16 %v472
        %v517 = vunpack.c.l.b16 %v473
        %v518 = vunpack.c.l.b16 %v474
        %v519 = vunpack.c.l.b16 %v475
        %v520 = vunpack.c.l.b16 %v476
        %v521 = vunpack.c.l.b16 %v477
        %v522 = vpack.c.b16 %v507, %v506
        %v523 = vpack.c.b16 %v509, %v508
        %v524 = vpack.c.b16 %v511, %v510
        %v525 = vpack.c.b16 %v513, %v512
        %v526 = vpack.c.b16 %v515, %v514
        %v527 = vpack.c.b16 %v517, %v516
        %v528 = vpack.c.b16 %v519, %v518
        %v529 = vpack.c.b16 %v521, %v520
        %v535 = vunpack.c.l.b16 %v478
        %v536 = vunpack.c.l.b16 %v479
        %v537 = vunpack.c.l.b16 %v480
        %v538 = vunpack.c.l.b16 %v481
        %v539 = vunpack.c.l.b16 %v482
        %v540 = vpack.c.b16 %v536, %v535
        %v541 = vpack.c.b16 %v538, %v537
        %v542 = vpack.c.b16 %v539, %v539
        %vm545 = vcmask 293888
        %v547 = vsel %vm545, %v522, 0
        %v550 = vsel %vm545, %v523, 0
        %v553 = vsel %vm545, %v524, 0
        %v556 = vsel %vm545, %v525, 0
        %v559 = vsel %vm545, %v526, 0
        %v562 = vsel %vm545, %v527, 0
        %v565 = vsel %vm545, %v528, 0
        %v568 = vsel %vm545, %v529, 0
        %vm570 = vcmask 1041408
        %v572 = vsel %vm570, %v542, 0
        %574 = vmatprep.subr.bf16.mxu0 0
        %575 = vmatpush1.bf16.msra.mxu0 %v540
        %576 = vmatprep.subr.bf16.mxu0 0
        %577 = vmatpush1.bf16.msra.mxu0 %v541
        %578 = vmatprep.subr.bf16.mxu0 0
        %579 = vmatpush1.bf16.msra.mxu0 %v572
        %580 = vmatprep.subr.bf16.mxu0 0
        %581 = vmatpush1.bf16.msra.mxu0 0
        %582 = vmatprep.subr.bf16.mxu0 0
        %583 = vmatpush1.bf16.msra.mxu0 0
        %584 = vmatprep.subr.bf16.mxu0 0
        %585 = vmatpush1.bf16.msra.mxu0 0
        %586 = vmatprep.subr.bf16.mxu0 0
        %587 = vmatpush1.bf16.msra.mxu0 0
        %588 = vmatprep.subr.bf16.mxu0 0
        %589 = vmatpush1.bf16.msra.mxu0 0
        %590 = vmatprep.subr.bf16.mxu0 0
        %591 = vmatpush1.bf16.msra.mxu0 0
        %592 = vmatprep.subr.bf16.mxu0 0
        %593 = vmatpush1.bf16.msra.mxu0 0
        %594 = vmatprep.subr.bf16.mxu0 0
        %595 = vmatpush1.bf16.msra.mxu0 0
        %596 = vmatprep.subr.bf16.mxu0 0
        %597 = vmatpush1.bf16.msra.mxu0 0
        %598 = vmatprep.subr.bf16.mxu0 0
        %599 = vmatpush1.bf16.msra.mxu0 0
        %600 = vmatprep.subr.bf16.mxu0 0
        %601 = vmatpush1.bf16.msra.mxu0 0
        %602 = vmatprep.subr.bf16.mxu0 0
        %603 = vmatpush1.bf16.msra.mxu0 0
        %604 = vmatprep.subr.bf16.mxu0 0
        %605 = vmatpush1.bf16.msra.mxu0 0
        %606 = vmatprep.mubr.bf16.mxu0 0
        %607 = vmatmul.mubr.bf16.gmra.mrb[0].mxu0 %v547
        %v608 = vpop.f32.mrb[0].mxu0
        %v609 = vadd.f32 %v488, %v608
        %v610 = vpop.f32.mrb[0].mxu0
        %v611 = vpop.f32.mrb[0].mxu0
        %v612 = vadd.f32 %v488, %v611
        %v613 = vpop.f32.mrb[0].mxu0
        %614 = vmatprep.mubr.bf16.mxu0 0
        %615 = vmatmul.mubr.bf16.gmra.mrb[0].mxu0 %v550
        %v616 = vpop.f32.mrb[0].mxu0
        %v617 = vadd.f32 %v488, %v616
        %v618 = vpop.f32.mrb[0].mxu0
        %v619 = vpop.f32.mrb[0].mxu0
        %v620 = vadd.f32 %v488, %v619
        %v621 = vpop.f32.mrb[0].mxu0
        %622 = vmatprep.mubr.bf16.mxu0 0
        %623 = vmatmul.mubr.bf16.gmra.mrb[0].mxu0 %v553
        %v624 = vpop.f32.mrb[0].mxu0
        %v625 = vadd.f32 %v488, %v624
        %v626 = vpop.f32.mrb[0].mxu0
        %v627 = vpop.f32.mrb[0].mxu0
        %v628 = vadd.f32 %v488, %v627
        %v629 = vpop.f32.mrb[0].mxu0
        %630 = vmatprep.mubr.bf16.mxu0 0
        %631 = vmatmul.mubr.bf16.gmra.mrb[0].mxu0 %v556
        %v632 = vpop.f32.mrb[0].mxu0
        %v633 = vadd.f32 %v488, %v632
        %v634 = vpop.f32.mrb[0].mxu0
        %v635 = vpop.f32.mrb[0].mxu0
        %v636 = vadd.f32 %v488, %v635
        %v637 = vpop.f32.mrb[0].mxu0
        %638 = vmatprep.mubr.bf16.mxu0 0
        %639 = vmatmul.mubr.bf16.gmra.mrb[0].mxu0 %v559
        %v640 = vpop.f32.mrb[0].mxu0
        %v641 = vadd.f32 %v488, %v640
        %v642 = vpop.f32.mrb[0].mxu0
        %v643 = vpop.f32.mrb[0].mxu0
        %v644 = vadd.f32 %v488, %v643
        %v645 = vpop.f32.mrb[0].mxu0
        %646 = vmatprep.mubr.bf16.mxu0 0
        %647 = vmatmul.mubr.bf16.gmra.mrb[0].mxu0 %v562
        %v648 = vpop.f32.mrb[0].mxu0
        %v649 = vadd.f32 %v488, %v648
        %v650 = vpop.f32.mrb[0].mxu0
        %v651 = vpop.f32.mrb[0].mxu0
        %v652 = vadd.f32 %v488, %v651
        %v653 = vpop.f32.mrb[0].mxu0
        %654 = vmatprep.mubr.bf16.mxu0 0
        %655 = vmatmul.mubr.bf16.gmra.mrb[0].mxu0 %v565
        %v656 = vpop.f32.mrb[0].mxu0
        %v657 = vadd.f32 %v488, %v656
        %v658 = vpop.f32.mrb[0].mxu0
        %v659 = vpop.f32.mrb[0].mxu0
        %v660 = vadd.f32 %v488, %v659
        %v661 = vpop.f32.mrb[0].mxu0
        %662 = vmatprep.mubr.bf16.mxu0 0
        %663 = vmatmul.mubr.bf16.gmra.mrb[0].mxu0 %v568
        %v664 = vpop.f32.mrb[0].mxu0
        %v665 = vadd.f32 %v488, %v664
        %v666 = vpop.f32.mrb[0].mxu0
        %v667 = vpop.f32.mrb[0].mxu0
        %v668 = vadd.f32 %v488, %v667
        %v669 = vpop.f32.mrb[0].mxu0
        %670 = vdwg.mxu0
        %v671 = vmax.f32 %v609, 0.0
        %v672 = vmax.f32 %v612, 0.0
        %v673 = vmax.f32 %v617, 0.0
        %v674 = vmax.f32 %v620, 0.0
        %v675 = vmax.f32 %v625, 0.0
        %v676 = vmax.f32 %v628, 0.0
        %v677 = vmax.f32 %v633, 0.0
        %v678 = vmax.f32 %v636, 0.0
        %v679 = vmax.f32 %v641, 0.0
        %v680 = vmax.f32 %v644, 0.0
        %v681 = vmax.f32 %v649, 0.0
        %v682 = vmax.f32 %v652, 0.0
        %v683 = vmax.f32 %v657, 0.0
        %v684 = vmax.f32 %v660, 0.0
        %v685 = vmax.f32 %v665, 0.0
        %v686 = vmax.f32 %v668, 0.0
        %v687 = vld [vmem:[%s3] sm:$0x1]
        %v688 = vld [vmem:[%s421] sm:$0xff]
        %v689 = vld [vmem:[%s421 + $0x8] sm:$0xff]
        %v690 = vld [vmem:[%s421 + $0x10] sm:$0xff]
        %v691 = vld [vmem:[%s421 + $0x18] sm:$0xff]
        %v692 = vld [vmem:[%s421 + $0x20] sm:$0xff]
        %v693 = vld [vmem:[%s421 + $0x28] sm:$0xff]
        %v694 = vld [vmem:[%s421 + $0x30] sm:$0xff]
        %v695 = vld [vmem:[%s421 + $0x38] sm:$0xff]
        %v696 = vld [vmem:[%s421 + $0x40] sm:$0xff]
        %v697 = vld [vmem:[%s421 + $0x48] sm:$0xff]
        %v698 = vld [vmem:[%s421 + $0x50] sm:$0xff]
        %v699 = vld [vmem:[%s421 + $0x58] sm:$0xff]
        %v700 = vld [vmem:[%s421 + $0x60] sm:$0xff]
        %v701 = vld [vmem:[%s421 + $0x68] sm:$0xff]
        %v702 = vld [vmem:[%s421 + $0x70] sm:$0xff]
        %v703 = vld [vmem:[%s421 + $0x78] sm:$0xff]
        %v705 = vlaneseq
        %v706 = vshrl.u32 %v705, 7
        %v707 = vsub.s32 0, %v706
        %v708 = vrot.slane %v687, %v707
        %711 = vset.pattern.permute.xlu0 0
        %712 = vperm.xlu0 %711, %v688
        %v713 = vpop.permute.xlu0 %712
        %716 = vset.pattern.permute.xlu0 0
        %717 = vperm.xlu0 %716, %v689
        %v718 = vpop.permute.xlu0 %717
        %721 = vset.pattern.permute.xlu0 0
        %722 = vperm.xlu0 %721, %v690
        %v723 = vpop.permute.xlu0 %722
        %726 = vset.pattern.permute.xlu0 0
        %727 = vperm.xlu0 %726, %v691
        %v728 = vpop.permute.xlu0 %727
        %731 = vset.pattern.permute.xlu0 0
        %732 = vperm.xlu0 %731, %v692
        %v733 = vpop.permute.xlu0 %732
        %736 = vset.pattern.permute.xlu0 0
        %737 = vperm.xlu0 %736, %v693
        %v738 = vpop.permute.xlu0 %737
        %741 = vset.pattern.permute.xlu0 0
        %742 = vperm.xlu0 %741, %v694
        %v743 = vpop.permute.xlu0 %742
        %746 = vset.pattern.permute.xlu0 0
        %747 = vperm.xlu0 %746, %v695
        %v748 = vpop.permute.xlu0 %747
        %751 = vset.pattern.permute.xlu0 0
        %752 = vperm.xlu0 %751, %v696
        %v753 = vpop.permute.xlu0 %752
        %756 = vset.pattern.permute.xlu0 0
        %757 = vperm.xlu0 %756, %v697
        %v758 = vpop.permute.xlu0 %757
        %761 = vset.pattern.permute.xlu0 0
        %762 = vperm.xlu0 %761, %v698
        %v763 = vpop.permute.xlu0 %762
        %766 = vset.pattern.permute.xlu0 0
        %767 = vperm.xlu0 %766, %v699
        %v768 = vpop.permute.xlu0 %767
        %771 = vset.pattern.permute.xlu0 0
        %772 = vperm.xlu0 %771, %v700
        %v773 = vpop.permute.xlu0 %772
        %776 = vset.pattern.permute.xlu0 0
        %777 = vperm.xlu0 %776, %v701
        %v778 = vpop.permute.xlu0 %777
        %781 = vset.pattern.permute.xlu0 0
        %782 = vperm.xlu0 %781, %v702
        %v783 = vpop.permute.xlu0 %782
        %786 = vset.pattern.permute.xlu0 0
        %787 = vperm.xlu0 %786, %v703
        %v788 = vpop.permute.xlu0 %787
        %v790 = vmul.f32 %v708, %v713
        %v791 = vmul.f32 %v708, %v718
        %v792 = vmul.f32 %v708, %v723
        %v793 = vmul.f32 %v708, %v728
        %v794 = vmul.f32 %v708, %v733
        %v795 = vmul.f32 %v708, %v738
        %v796 = vmul.f32 %v708, %v743
        %v797 = vmul.f32 %v708, %v748
        %v798 = vmul.f32 %v708, %v753
        %v799 = vmul.f32 %v708, %v758
        %v800 = vmul.f32 %v708, %v763
        %v801 = vmul.f32 %v708, %v768
        %v802 = vmul.f32 %v708, %v773
        %v803 = vmul.f32 %v708, %v778
        %v804 = vmul.f32 %v708, %v783
        %v805 = vmul.f32 %v708, %v788
        %v806 = vadd.f32 %v671, %v790
        %v807 = vadd.f32 %v672, %v791
        %v808 = vadd.f32 %v673, %v792
        %v809 = vadd.f32 %v674, %v793
        %v810 = vadd.f32 %v675, %v794
        %v811 = vadd.f32 %v676, %v795
        %v812 = vadd.f32 %v677, %v796
        %v813 = vadd.f32 %v678, %v797
        %v814 = vadd.f32 %v679, %v798
        %v815 = vadd.f32 %v680, %v799
        %v816 = vadd.f32 %v681, %v800
        %v817 = vadd.f32 %v682, %v801
        %v818 = vadd.f32 %v683, %v802
        %v819 = vadd.f32 %v684, %v803
        %v820 = vadd.f32 %v685, %v804
        %v821 = vadd.f32 %v686, %v805
        %v822 = vld [vmem:[%s437] sm:$0xff]
        %v823 = vld [vmem:[%s437 + $0x8] sm:$0xff]
        %v824 = vld [vmem:[%s437 + $0x10] sm:$0xff]
        %v825 = vld [vmem:[%s437 + $0x18] sm:$0xff]
        %v826 = vld [vmem:[%s437 + $0x20] sm:$0xff]
        %v827 = vld [vmem:[%s437 + $0x28] sm:$0xff]
        %v828 = vld [vmem:[%s437 + $0x30] sm:$0xff]
        %v829 = vld [vmem:[%s437 + $0x38] sm:$0xff]
        %v830 = vld [vmem:[%s437 + $0x40] sm:$0xff]
        %v831 = vld [vmem:[%s437 + $0x48] sm:$0xff]
        %v832 = vld [vmem:[%s437 + $0x50] sm:$0xff]
        %v833 = vld [vmem:[%s437 + $0x58] sm:$0xff]
        %v834 = vld [vmem:[%s437 + $0x60] sm:$0xff]
        %v835 = vld [vmem:[%s437 + $0x68] sm:$0xff]
        %v836 = vld [vmem:[%s437 + $0x70] sm:$0xff]
        %v837 = vld [vmem:[%s437 + $0x78] sm:$0xff]
        %839 = vset.pattern.permute.xlu0 0
        %840 = vperm.xlu0 %839, %v822
        %v841 = vpop.permute.xlu0 %840
        %844 = vset.pattern.permute.xlu0 0
        %845 = vperm.xlu0 %844, %v823
        %v846 = vpop.permute.xlu0 %845
        %849 = vset.pattern.permute.xlu0 0
        %850 = vperm.xlu0 %849, %v824
        %v851 = vpop.permute.xlu0 %850
        %854 = vset.pattern.permute.xlu0 0
        %855 = vperm.xlu0 %854, %v825
        %v856 = vpop.permute.xlu0 %855
        %859 = vset.pattern.permute.xlu0 0
        %860 = vperm.xlu0 %859, %v826
        %v861 = vpop.permute.xlu0 %860
        %864 = vset.pattern.permute.xlu0 0
        %865 = vperm.xlu0 %864, %v827
        %v866 = vpop.permute.xlu0 %865
        %869 = vset.pattern.permute.xlu0 0
        %870 = vperm.xlu0 %869, %v828
        %v871 = vpop.permute.xlu0 %870
        %874 = vset.pattern.permute.xlu0 0
        %875 = vperm.xlu0 %874, %v829
        %v876 = vpop.permute.xlu0 %875
        %879 = vset.pattern.permute.xlu0 0
        %880 = vperm.xlu0 %879, %v830
        %v881 = vpop.permute.xlu0 %880
        %884 = vset.pattern.permute.xlu0 0
        %885 = vperm.xlu0 %884, %v831
        %v886 = vpop.permute.xlu0 %885
        %889 = vset.pattern.permute.xlu0 0
        %890 = vperm.xlu0 %889, %v832
        %v891 = vpop.permute.xlu0 %890
        %894 = vset.pattern.permute.xlu0 0
        %895 = vperm.xlu0 %894, %v833
        %v896 = vpop.permute.xlu0 %895
        %899 = vset.pattern.permute.xlu0 0
        %900 = vperm.xlu0 %899, %v834
        %v901 = vpop.permute.xlu0 %900
        %904 = vset.pattern.permute.xlu0 0
        %905 = vperm.xlu0 %904, %v835
        %v906 = vpop.permute.xlu0 %905
        %909 = vset.pattern.permute.xlu0 0
        %910 = vperm.xlu0 %909, %v836
        %v911 = vpop.permute.xlu0 %910
        %914 = vset.pattern.permute.xlu0 0
        %915 = vperm.xlu0 %914, %v837
        %v916 = vpop.permute.xlu0 %915
        %v918 = vmul.f32 %v806, %v841
        %v919 = vmul.f32 %v807, %v846
        %v920 = vmul.f32 %v808, %v851
        %v921 = vmul.f32 %v809, %v856
        %v922 = vmul.f32 %v810, %v861
        %v923 = vmul.f32 %v811, %v866
        %v924 = vmul.f32 %v812, %v871
        %v925 = vmul.f32 %v813, %v876
        %v926 = vmul.f32 %v814, %v881
        %v927 = vmul.f32 %v815, %v886
        %v928 = vmul.f32 %v816, %v891
        %v929 = vmul.f32 %v817, %v896
        %v930 = vmul.f32 %v818, %v901
        %v931 = vmul.f32 %v819, %v906
        %v932 = vmul.f32 %v820, %v911
        %v933 = vmul.f32 %v821, %v916
        %v934 = vpack.c.bf16 %v919, %v918
        %v935 = vpack.c.bf16 %v921, %v920
        %v936 = vpack.c.bf16 %v923, %v922
        %v937 = vpack.c.bf16 %v925, %v924
        %v938 = vpack.c.bf16 %v927, %v926
        %v939 = vpack.c.bf16 %v929, %v928
        %v940 = vpack.c.bf16 %v931, %v930
        %v941 = vpack.c.bf16 %v933, %v932
        %v950 = vunpack.c.l.b16 %v934
        %v951 = vunpack.c.h.b16 %v934
        %v952 = vunpack.c.l.b16 %v935
        %v953 = vunpack.c.h.b16 %v935
        %v954 = vunpack.c.l.b16 %v936
        %v955 = vunpack.c.h.b16 %v936
        %v956 = vunpack.c.l.b16 %v937
        %v957 = vunpack.c.h.b16 %v937
        %v958 = vunpack.c.l.b16 %v938
        %v959 = vunpack.c.h.b16 %v938
        %v960 = vunpack.c.l.b16 %v939
        %v961 = vunpack.c.h.b16 %v939
        %v962 = vunpack.c.l.b16 %v940
        %v963 = vunpack.c.h.b16 %v940
        %v964 = vunpack.c.l.b16 %v941
        %v965 = vunpack.c.h.b16 %v941
        %v966 = vpack.c.b16 %v950, %v950
        %v967 = vpack.c.b16 %v951, %v951
        %v968 = vpack.c.b16 %v952, %v952
        %v969 = vpack.c.b16 %v953, %v953
        %v970 = vpack.c.b16 %v954, %v954
        %v971 = vpack.c.b16 %v955, %v955
        %v972 = vpack.c.b16 %v956, %v956
        %v973 = vpack.c.b16 %v957, %v957
        %v974 = vpack.c.b16 %v958, %v958
        %v975 = vpack.c.b16 %v959, %v959
        %v976 = vpack.c.b16 %v960, %v960
        %v977 = vpack.c.b16 %v961, %v961
        %v978 = vpack.c.b16 %v962, %v962
        %v979 = vpack.c.b16 %v963, %v963
        %v980 = vpack.c.b16 %v964, %v964
        %v981 = vpack.c.b16 %v965, %v965
        %998 = vst [vmem:[%s452] sm:$0xf] %v966
        %999 = vst [vmem:[%s452 + $0x4] sm:$0xf] %v967
        %1000 = vst [vmem:[%s452 + $0x8] sm:$0xf] %v968
        %1001 = vst [vmem:[%s452 + $0xc] sm:$0xf] %v969
        %1002 = vst [vmem:[%s452 + $0x10] sm:$0xf] %v970
        %1003 = vst [vmem:[%s452 + $0x14] sm:$0xf] %v971
        %1004 = vst [vmem:[%s452 + $0x18] sm:$0xf] %v972
        %1005 = vst [vmem:[%s452 + $0x1c] sm:$0xf] %v973
        %1006 = vst [vmem:[%s452 + $0x20] sm:$0xf] %v974
        %1007 = vst [vmem:[%s452 + $0x24] sm:$0xf] %v975
        %1008 = vst [vmem:[%s452 + $0x28] sm:$0xf] %v976
        %1009 = vst [vmem:[%s452 + $0x2c] sm:$0xf] %v977
        %1010 = vst [vmem:[%s452 + $0x30] sm:$0xf] %v978
        %1011 = vst [vmem:[%s452 + $0x34] sm:$0xf] %v979
        %1012 = vst [vmem:[%s452 + $0x38] sm:$0xf] %v980
        %1013 = vst [vmem:[%s452 + $0x3c] sm:$0xf] %v981
      $region48: #{noise_net_forward.4} parent=43 // pred_fallthru
        _
      // Predicated region
      $region49: #{noise_net_forward.4} parent=43 // pred_check
        %p1014 = pneg %p458
      $region50: #{noise_net_forward.4} parent=43 // pred_check_branch
        %1016 = sbr.rel (%p1014) target = $region52
      $region51: #{noise_net_forward.4} parent=43 // pred_region
        %1017 = vst [vmem:[%s452] sm:$0xf] 0
        %1018 = vst [vmem:[%s452 + $0x4] sm:$0xf] 0
        %1019 = vst [vmem:[%s452 + $0x8] sm:$0xf] 0
        %1020 = vst [vmem:[%s452 + $0xc] sm:$0xf] 0
        %1021 = vst [vmem:[%s452 + $0x10] sm:$0xf] 0
        %1022 = vst [vmem:[%s452 + $0x14] sm:$0xf] 0
        %1023 = vst [vmem:[%s452 + $0x18] sm:$0xf] 0
        %1024 = vst [vmem:[%s452 + $0x1c] sm:$0xf] 0
        %1025 = vst [vmem:[%s452 + $0x20] sm:$0xf] 0
        %1026 = vst [vmem:[%s452 + $0x24] sm:$0xf] 0
        %1027 = vst [vmem:[%s452 + $0x28] sm:$0xf] 0
        %1028 = vst [vmem:[%s452 + $0x2c] sm:$0xf] 0
        %1029 = vst [vmem:[%s452 + $0x30] sm:$0xf] 0
        %1030 = vst [vmem:[%s452 + $0x34] sm:$0xf] 0
        %1031 = vst [vmem:[%s452 + $0x38] sm:$0xf] 0
        %1032 = vst [vmem:[%s452 + $0x3c] sm:$0xf] 0
      $region52: #{noise_net_forward.4} parent=43 // pred_fallthru
        _
      %s1033 = smul.u32 16, %s22
      %p1034 = scmp.lt.s32.totalorder %s21, 1
      %s1035 = scalar_select %p1034, %s21, 1
      %p1036 = scmp.lt.s32.totalorder %s1033, 79
      %s1037 = scalar_select %p1036, %s1033, 79
      %s1038 = smul.addr %s1035, 80
      %s1039 = sadd.s32 %s1037, %s1038
      %s1040 = smul.addr %s1039, 4
      %s1041 = scalar_lea.vmem %s6, %s1040
      // Predicated region
      $region53: #{noise_net_forward.4} parent=43 // pred_check
        %p1042 = pneg %p224
      $region54: #{noise_net_forward.4} parent=43 // pred_check_branch
        %1044 = sbr.rel (%p1042) target = $region56
      $region55: #{noise_net_forward.4} parent=43 // pred_region
        %s1045 = smul.u32 16, %s22
      $region56: #{noise_net_forward.4} parent=43 // pred_fallthru
        _
    $region44: #{noise_net_forward.4} parent=5 // pred_fallthru
      _
    %p1046 = scmp.le.s32.totalorder 2, %s12
    // Predicated region
    $region57: #{noise_net_forward.4} parent=5 // pred_check
      %p1047 = pneg %p1046
    $region58: #{noise_net_forward.4} parent=5 // pred_check_branch
      %1049 = sbr.rel (%p1047) target = $region60
    $region59: #{noise_net_forward.4} parent=5 // pred_region
      %s1050 = ssub.s32 %s12, 2
      // Predicated region
      $region61: #{noise_net_forward.4} parent=59 // pred_check
        %p1051 = pneg %p230
      $region62: #{noise_net_forward.4} parent=59 // pred_check_branch
        %1053 = sbr.rel (%p1051) target = $region64
      $region63: #{noise_net_forward.4} parent=59 // pred_region
        %s1054 = smul.u32 16, %s24
        %p1055 = scmp.lt.s32.totalorder %s23, 1
        %s1056 = scalar_select %p1055, %s23, 1
        %p1057 = scmp.lt.s32.totalorder %s1054, 79
        %s1058 = scalar_select %p1057, %s1054, 79
        %s1059 = smul.addr %s1056, 80
        %s1060 = sadd.s32 %s1058, %s1059
        %s1061 = smul.addr %s1060, 4
        %s1062 = scalar_lea.vmem %s6, %s1061
      $region64: #{noise_net_forward.4} parent=59 // pred_fallthru
        _
    $region60: #{noise_net_forward.4} parent=5 // pred_fallthru
      _
  $region6: #{noise_net_forward.4} parent=0 // loop_footer
    %s16 = sadd.s32 1, %s12
  $region7: #{noise_net_forward.4} parent=0 // loop_footer_branch
    %11 = sbr.rel target = $region3
  $region8: #{noise_net_forward.4} parent=0 // loop_exit
    _

// kernel: noise_net_forward.5
$region0: #{noise_net_forward.5}
  #allocation0 [shape = 'u32[]', space=smem, size = 0x4, offset = 0x4, fixed_abs, tag = 'smem constant byte address 0x4 - core index']
  #allocation1 [shape = 'u32[144,128]{1,0:T(1,128)}', space=vmem, size = 0x12000, scoped, tag = 'internal scratch']
  #allocation2 [shape = 'bf16[2,192,128]{2,1,0:T(16,128)(2,1)}', space=vmem, size = 0x18000, scoped, tag = 'scratch operand']
  #allocation3 [shape = 's32[2]{0}', space=sflag, size = 0x8, scoped, tag = 'scratch operand']
  #allocation4 [shape = 's32[]', space=sflag, size = 0x4, offset = 0, fixed_abs, tag = 'sflag constant byte address 0x0 - dummy sync flag']
  #allocation5 [shape = 's32[]', space=sflag, size = 0x4, offset = 0, fixed_abs, tag = 'sflag constant byte address 0x0 - dummy sync flag']
  %s0 = inlined_call_operand.vmem [shape: bf16[2,640,128], index: 0, kind: input, shape index: {}]
  %s1 = inlined_call_operand.vmem [shape: bf16[1152,128], index: 1, kind: input, shape index: {}]
  %s2 = inlined_call_operand.vmem [shape: f32[1,128], index: 2, kind: input, shape index: {}]
  %s3 = inlined_call_operand.vmem [shape: f32[1,128], index: 3, kind: input, shape index: {}]
  %s4 = inlined_call_operand.vmem [shape: f32[2,384,1], index: 4, kind: input, shape index: {}]
  %s5 = inlined_call_operand.vmem [shape: f32[384,1], index: 5, kind: input, shape index: {}]
  %s6 = inlined_call_operand.vmem [shape: bf16[2,640,128], index: 6, kind: output, shape index: {}]
  %s7 = sld [smem:[#allocation0]]
  $region137: #{noise_net_forward.5} parent=0
    _
  %s9 = ssub.s32 1, %s7
  %s10 = scalar_select 0, %s9, %s7
  loop: start=0, step=1, limit=12
  $region2: #{noise_net_forward.5} parent=0 // loop_pre_header
    _
  $region3: #{noise_net_forward.5} parent=0 // loop_header
    %s12 = sphi 0, %s16
    %p13 = scmp.ge.s32.totalorder %s12, 12
    %s19 = sphi 0, %s31
    %s20 = sphi 0, %s27
    %s21 = sphi 0, %s19
    %s22 = sphi 0, %s20
    %s23 = sphi 0, %s21
    %s24 = sphi 0, %s22
    %s32 = sphi 0, %s32
    %s34 = sphi 0, %s32
    %s35 = sphi 0, %s34
    %s49 = sphi 0, %s35
    %s53 = sphi 0, %s53
    %s55 = sphi 0, %s53
    %s56 = sphi 0, %s55
    %s70 = sphi 0, %s56
    %s74 = sphi 0, %s74
    %s76 = sphi 0, %s74
    %s77 = sphi 0, %s76
    %s91 = sphi 0, %s77
    %s109 = sphi 0, %s111
    %s112 = sphi 0, %s109
    %s113 = sphi 0, %s112
    %s129 = sphi 0, %s113
    %s145 = sphi 0, %s147
    %s148 = sphi 0, %s145
    %s149 = sphi 0, %s148
    %s165 = sphi 0, %s149
    %s173 = sphi 0, %s175
    %s176 = sphi 0, %s173
    %s177 = sphi 0, %s176
    %s193 = sphi 0, %s177
  $region4: #{noise_net_forward.5} parent=0 // loop_header_branch
    %15 = sbr.rel (%p13) target = $region8
  $region5: #{noise_net_forward.5} parent=0 // loop_body
    %s17 = ssub.s32 %s12, 1
    %s18 = ssub.s32 %s12, 2
    %s25 = sadd.s32 1, %s20
    %p26 = scmp.ge.s32.totalorder %s25, 5
    %s27 = scalar_select %p26, 0, %s25
    %s28 = sadd.s32 1, %s19
    %s29 = scalar_select %p26, %s28, %s19
    %p30 = scmp.ge.s32.totalorder %s29, 2
    %s31 = scalar_select %p30, 0, %s29
    %s33 = sadd.s32 %s32, 1
    %p36 = scmp.eq.s32.totalorder %s12, 9
    %p37 = scmp.ne.s32.totalorder %s32, %s34
    %p38 = scmp.eq.s32.totalorder %s12, 0
    %p39 = por %p37, %p38
    %p40 = scmp.ne.s32.totalorder %s32, %s34
    %p41 = scmp.eq.s32.totalorder %s17, 9
    %p42 = por %p40, %p41
    %p43 = scmp.ne.s32.totalorder %s34, %s35
    %p44 = scmp.eq.s32.totalorder %s17, 0
    %p45 = por %p43, %p44
    %p46 = scmp.ne.s32.totalorder %s34, %s35
    %p47 = scmp.eq.s32.totalorder %s18, 9
    %p48 = por %p46, %p47
    %p50 = scmp.ne.s32.totalorder %s35, %s49
    %p51 = scmp.eq.s32.totalorder %s18, 0
    %p52 = por %p50, %p51
    %s54 = sadd.s32 %s53, 1
    %p57 = scmp.eq.s32.totalorder %s12, 9
    %p58 = scmp.ne.s32.totalorder %s53, %s55
    %p59 = scmp.eq.s32.totalorder %s12, 0
    %p60 = por %p58, %p59
    %p61 = scmp.ne.s32.totalorder %s53, %s55
    %p62 = scmp.eq.s32.totalorder %s17, 9
    %p63 = por %p61, %p62
    %p64 = scmp.ne.s32.totalorder %s55, %s56
    %p65 = scmp.eq.s32.totalorder %s17, 0
    %p66 = por %p64, %p65
    %p67 = scmp.ne.s32.totalorder %s55, %s56
    %p68 = scmp.eq.s32.totalorder %s18, 9
    %p69 = por %p67, %p68
    %p71 = scmp.ne.s32.totalorder %s56, %s70
    %p72 = scmp.eq.s32.totalorder %s18, 0
    %p73 = por %p71, %p72
    %s75 = sadd.s32 %s74, 1
    %p78 = scmp.eq.s32.totalorder %s12, 9
    %p79 = scmp.ne.s32.totalorder %s74, %s76
    %p80 = scmp.eq.s32.totalorder %s12, 0
    %p81 = por %p79, %p80
    %p82 = scmp.ne.s32.totalorder %s74, %s76
    %p83 = scmp.eq.s32.totalorder %s17, 9
    %p84 = por %p82, %p83
    %p85 = scmp.ne.s32.totalorder %s76, %s77
    %p86 = scmp.eq.s32.totalorder %s17, 0
    %p87 = por %p85, %p86
    %p88 = scmp.ne.s32.totalorder %s76, %s77
    %p89 = scmp.eq.s32.totalorder %s18, 9
    %p90 = por %p88, %p89
    %p92 = scmp.ne.s32.totalorder %s77, %s91
    %p93 = scmp.eq.s32.totalorder %s18, 0
    %p94 = por %p92, %p93
    %s95 = ssub.s32 %s20, 1
    %p96 = scmp.gt.s32.totalorder %s95, 0
    %s97 = scalar_select %p96, %s95, 0
    %p98 = scmp.lt.s32.totalorder %s97, 2
    %s99 = scalar_select %p98, %s97, 2
    %s100 = ssub.s32 %s27, 1
    %p101 = scmp.gt.s32.totalorder %s100, 0
    %s102 = scalar_select %p101, %s100, 0
    %p103 = scmp.lt.s32.totalorder %s102, 2
    %s104 = scalar_select %p103, %s102, 2
    %s105 = ssub.s32 %s19, %s31
    %s106 = ssub.s32 %s99, %s104
    %s107 = sor.u32 %s105, %s106
    %p108 = scmp.eq.s32.totalorder %s107, 0
    %s110 = sadd.s32 %s109, 1
    %s111 = scalar_select %p108, %s109, %s110
    %p114 = pneg %p108
    %p115 = scmp.eq.s32.totalorder %s12, 9
    %p116 = por %p114, %p115
    %p117 = scmp.ne.s32.totalorder %s109, %s112
    %p118 = scmp.eq.s32.totalorder %s12, 0
    %p119 = por %p117, %p118
    %p120 = scmp.ne.s32.totalorder %s109, %s112
    %p121 = scmp.eq.s32.totalorder %s17, 9
    %p122 = por %p120, %p121
    %p123 = scmp.ne.s32.totalorder %s112, %s113
    %p124 = scmp.eq.s32.totalorder %s17, 0
    %p125 = por %p123, %p124
    %p126 = scmp.ne.s32.totalorder %s112, %s113
    %p127 = scmp.eq.s32.totalorder %s18, 9
    %p128 = por %p126, %p127
    %p130 = scmp.ne.s32.totalorder %s113, %s129
    %p131 = scmp.eq.s32.totalorder %s18, 0
    %p132 = por %p130, %p131
    %s133 = ssub.s32 %s20, 1
    %p134 = scmp.gt.s32.totalorder %s133, 0
    %s135 = scalar_select %p134, %s133, 0
    %p136 = scmp.lt.s32.totalorder %s135, 2
    %s137 = scalar_select %p136, %s135, 2
    %s138 = ssub.s32 %s27, 1
    %p139 = scmp.gt.s32.totalorder %s138, 0
    %s140 = scalar_select %p139, %s138, 0
    %p141 = scmp.lt.s32.totalorder %s140, 2
    %s142 = scalar_select %p141, %s140, 2
    %s143 = ssub.s32 %s137, %s142
    %p144 = scmp.eq.s32.totalorder %s143, 0
    %s146 = sadd.s32 %s145, 1
    %s147 = scalar_select %p144, %s145, %s146
    %p150 = pneg %p144
    %p151 = scmp.eq.s32.totalorder %s12, 9
    %p152 = por %p150, %p151
    %p153 = scmp.ne.s32.totalorder %s145, %s148
    %p154 = scmp.eq.s32.totalorder %s12, 0
    %p155 = por %p153, %p154
    %p156 = scmp.ne.s32.totalorder %s145, %s148
    %p157 = scmp.eq.s32.totalorder %s17, 9
    %p158 = por %p156, %p157
    %p159 = scmp.ne.s32.totalorder %s148, %s149
    %p160 = scmp.eq.s32.totalorder %s17, 0
    %p161 = por %p159, %p160
    %p162 = scmp.ne.s32.totalorder %s148, %s149
    %p163 = scmp.eq.s32.totalorder %s18, 9
    %p164 = por %p162, %p163
    %p166 = scmp.ne.s32.totalorder %s149, %s165
    %p167 = scmp.eq.s32.totalorder %s18, 0
    %p168 = por %p166, %p167
    %s169 = ssub.s32 %s19, %s31
    %s170 = ssub.s32 %s20, %s27
    %s171 = sor.u32 %s169, %s170
    %p172 = scmp.eq.s32.totalorder %s171, 0
    %s174 = sadd.s32 %s173, 1
    %s175 = scalar_select %p172, %s173, %s174
    %p178 = pneg %p172
    %p179 = scmp.eq.s32.totalorder %s12, 9
    %p180 = por %p178, %p179
    %p181 = scmp.ne.s32.totalorder %s173, %s176
    %p182 = scmp.eq.s32.totalorder %s12, 0
    %p183 = por %p181, %p182
    %p184 = scmp.ne.s32.totalorder %s173, %s176
    %p185 = scmp.eq.s32.totalorder %s17, 9
    %p186 = por %p184, %p185
    %p187 = scmp.ne.s32.totalorder %s176, %s177
    %p188 = scmp.eq.s32.totalorder %s17, 0
    %p189 = por %p187, %p188
    %p190 = scmp.ne.s32.totalorder %s176, %s177
    %p191 = scmp.eq.s32.totalorder %s18, 9
    %p192 = por %p190, %p191
    %p194 = scmp.ne.s32.totalorder %s177, %s193
    %p195 = scmp.eq.s32.totalorder %s18, 0
    %p196 = por %p194, %p195
    %p197 = scmp.le.s32.totalorder 1, %s12
    %p198 = scmp.lt.s32.totalorder %s12, 11
    %p199 = pnand %p197, %p198
    %p200 = pneg %p199
    // Predicated region
    $region9: #{noise_net_forward.5} parent=5 // pred_check
      _
    $region10: #{noise_net_forward.5} parent=5 // pred_check_branch
      %202 = sbr.rel (%p199) target = $region12
    $region11: #{noise_net_forward.5} parent=5 // pred_region
      %s203 = ssub.s32 %s12, 1
      // Predicated region
      $region13: #{noise_net_forward.5} parent=11 // pred_check
        %p204 = pneg %p45
      $region14: #{noise_net_forward.5} parent=11 // pred_check_branch
        %206 = sbr.rel (%p204) target = $region16
      $region15: #{noise_net_forward.5} parent=11 // pred_region
        _
      $region16: #{noise_net_forward.5} parent=11 // pred_fallthru
        _
      // Predicated region
      $region17: #{noise_net_forward.5} parent=11 // pred_check
        %p207 = pneg %p66
      $region18: #{noise_net_forward.5} parent=11 // pred_check_branch
        %209 = sbr.rel (%p207) target = $region20
      $region19: #{noise_net_forward.5} parent=11 // pred_region
        _
      $region20: #{noise_net_forward.5} parent=11 // pred_fallthru
        _
      // Predicated region
      $region21: #{noise_net_forward.5} parent=11 // pred_check
        %p210 = pneg %p87
      $region22: #{noise_net_forward.5} parent=11 // pred_check_branch
        %212 = sbr.rel (%p210) target = $region24
      $region23: #{noise_net_forward.5} parent=11 // pred_region
        _
      $region24: #{noise_net_forward.5} parent=11 // pred_fallthru
        _
    $region12: #{noise_net_forward.5} parent=5 // pred_fallthru
      _
    %p213 = scmp.lt.s32.totalorder %s12, 10
    // Predicated region
    $region25: #{noise_net_forward.5} parent=5 // pred_check
      %p214 = pneg %p213
    $region26: #{noise_net_forward.5} parent=5 // pred_check_branch
      %216 = sbr.rel (%p214) target = $region28
    $region27: #{noise_net_forward.5} parent=5 // pred_region
      // Predicated region
      $region29: #{noise_net_forward.5} parent=27 // pred_check
        %p217 = pneg %p119
      $region30: #{noise_net_forward.5} parent=27 // pred_check_branch
        %219 = sbr.rel (%p217) target = $region32
      $region31: #{noise_net_forward.5} parent=27 // pred_region
        %s220 = ssub.s32 %s20, 1
        %p221 = scmp.gt.s32.totalorder %s220, 0
        %s222 = scalar_select %p221, %s220, 0
        %p223 = scmp.lt.s32.totalorder %s222, 2
        %s224 = scalar_select %p223, %s222, 2
        %s225 = smul.u32 16, %s224
        %p226 = scmp.lt.s32.totalorder %s19, 1
        %s227 = scalar_select %p226, %s19, 1
        %p228 = scmp.lt.s32.totalorder %s225, 47
        %s229 = scalar_select %p228, %s225, 47
        %s230 = smul.addr %s227, 48
        %s231 = sadd.s32 %s229, %s230
        %s232 = smul.addr %s231, 8
        %s233 = scalar_lea.vmem %s4, %s232
        %s234 = ssub.s32 %s20, 1
        %p235 = scmp.gt.s32.totalorder %s234, 0
        %s236 = scalar_select %p235, %s234, 0
        %p237 = scmp.lt.s32.totalorder %s236, 2
        %s238 = scalar_select %p237, %s236, 2
        %s239 = smul.u32 16, %s238
      $region32: #{noise_net_forward.5} parent=27 // pred_fallthru
        _
      // Predicated region
      $region33: #{noise_net_forward.5} parent=27 // pred_check
        %p240 = pneg %p155
      $region34: #{noise_net_forward.5} parent=27 // pred_check_branch
        %242 = sbr.rel (%p240) target = $region36
      $region35: #{noise_net_forward.5} parent=27 // pred_region
        %s243 = ssub.s32 %s20, 1
        %p244 = scmp.gt.s32.totalorder %s243, 0
        %s245 = scalar_select %p244, %s243, 0
        %p246 = scmp.lt.s32.totalorder %s245, 2
        %s247 = scalar_select %p246, %s245, 2
        %s248 = smul.u32 16, %s247
        %p249 = scmp.lt.s32.totalorder %s248, 47
        %s250 = scalar_select %p249, %s248, 47
        %s251 = smul.addr %s250, 8
        %s252 = scalar_lea.vmem %s5, %s251
        %s253 = ssub.s32 %s20, 1
        %p254 = scmp.gt.s32.totalorder %s253, 0
        %s255 = scalar_select %p254, %s253, 0
        %p256 = scmp.lt.s32.totalorder %s255, 2
        %s257 = scalar_select %p256, %s255, 2
        %s258 = smul.u32 16, %s257
      $region36: #{noise_net_forward.5} parent=27 // pred_fallthru
        _
    $region28: #{noise_net_forward.5} parent=5 // pred_fallthru
      _
    %p259 = scmp.le.s32.totalorder 1, %s12
    %p260 = scmp.lt.s32.totalorder %s12, 11
    %p261 = pnand %p259, %p260
    %p262 = pneg %p261
    // Predicated region
    $region37: #{noise_net_forward.5} parent=5 // pred_check
      _
    $region38: #{noise_net_forward.5} parent=5 // pred_check_branch
      %264 = sbr.rel (%p261) target = $region40
    $region39: #{noise_net_forward.5} parent=5 // pred_region
      %s265 = ssub.s32 %s12, 1
      %p266 = pneg %p45
      %p267 = pneg %p42
      %p268 = pneg %p66
      %p269 = pneg %p63
      %p270 = pneg %p87
      %p271 = pneg %p84
      %s272 = ssub.s32 %s22, 1
      %p273 = scmp.gt.s32.totalorder %s272, 0
      %s274 = scalar_select %p273, %s272, 0
      %p275 = scmp.lt.s32.totalorder %s274, 2
      %s276 = scalar_select %p275, %s274, 2
      %s277 = smul.u32 16, %s276
      %p278 = scmp.lt.s32.totalorder %s21, 1
      %s279 = scalar_select %p278, %s21, 1
      %p280 = scmp.lt.s32.totalorder %s277, 47
      %s281 = scalar_select %p280, %s277, 47
      %s282 = smul.addr %s279, 48
      %s283 = sadd.s32 %s281, %s282
      %s284 = smul.addr %s283, 8
      %s285 = scalar_lea.vmem %s4, %s284
      %p286 = pneg %p125
      %p287 = pneg %p122
      %s288 = ssub.s32 %s22, 1
      %p289 = scmp.gt.s32.totalorder %s288, 0
      %s290 = scalar_select %p289, %s288, 0
      %p291 = scmp.lt.s32.totalorder %s290, 2
      %s292 = scalar_select %p291, %s290, 2
      %s293 = smul.u32 16, %s292
      %p294 = scmp.lt.s32.totalorder %s293, 47
      %s295 = scalar_select %p294, %s293, 47
      %s296 = smul.addr %s295, 8
      %s297 = scalar_lea.vmem %s5, %s296
      %p298 = pneg %p161
      %p299 = pneg %p158
      %p300 = pneg %p189
      %p301 = pneg %p186
      %s302 = smul.u32 16, %s22
      %p303 = scmp.lt.s32.totalorder %s21, 1
      %s304 = scalar_select %p303, %s21, 1
      %p305 = scmp.lt.s32.totalorder %s302, 79
      %s306 = scalar_select %p305, %s302, 79
      %s307 = smul.addr %s304, 80
      %s308 = sadd.s32 %s306, %s307
      %s309 = smul.addr %s308, 4
      %s310 = scalar_lea.vmem %s6, %s309
      %s311 = ssub.s32 %s22, 1
      %p312 = scmp.gt.s32.totalorder %s311, 0
      %s313 = scalar_select %p312, %s311, 0
      %p314 = scmp.lt.s32.totalorder %s313, 2
      %s315 = scalar_select %p314, %s313, 2
      %s316 = smul.u32 16, %s315
      %p317 = scmp.lt.s32.totalorder %s21, 1
      %s318 = scalar_select %p317, %s21, 1
      %p319 = scmp.lt.s32.totalorder %s316, 47
      %s320 = scalar_select %p319, %s316, 47
      %s321 = smul.addr %s318, 48
      %s322 = sadd.s32 %s320, %s321
      %s323 = smul.addr %s322, 8
      %s324 = scalar_lea.vmem %s4, %s323
      %s325 = ssub.s32 %s22, 1
      %p326 = scmp.gt.s32.totalorder %s325, 0
      %s327 = scalar_select %p326, %s325, 0
      %p328 = scmp.lt.s32.totalorder %s327, 2
      %s329 = scalar_select %p328, %s327, 2
      %s330 = smul.u32 16, %s329
      %s331 = ssub.s32 %s22, 1
      %p332 = scmp.gt.s32.totalorder %s331, 0
      %s333 = scalar_select %p332, %s331, 0
      %p334 = scmp.lt.s32.totalorder %s333, 2
      %s335 = scalar_select %p334, %s333, 2
      %s336 = smul.u32 16, %s335
      %p337 = scmp.lt.s32.totalorder %s336, 47
      %s338 = scalar_select %p337, %s336, 47
      %s339 = smul.addr %s338, 8
      %s340 = scalar_lea.vmem %s5, %s339
      %s341 = ssub.s32 %s22, 1
      %p342 = scmp.gt.s32.totalorder %s341, 0
      %s343 = scalar_select %p342, %s341, 0
      %p344 = scmp.lt.s32.totalorder %s343, 2
      %s345 = scalar_select %p344, %s343, 2
      %s346 = smul.u32 16, %s345
      %s347 = smul.u32 16, %s22
      %p348 = scmp.lt.s32.totalorder %s21, 1
      %s349 = scalar_select %p348, %s21, 1
      %p350 = scmp.lt.s32.totalorder %s347, 79
      %s351 = scalar_select %p350, %s347, 79
      %s352 = smul.addr %s349, 80
      %s353 = sadd.s32 %s351, %s352
      %s354 = smul.addr %s353, 4
      %s355 = scalar_lea.vmem %s6, %s354
      %s356 = smul.u32 16, %s22
      %s358 = ssub.s32 %s22, 1
      %p359 = scmp.ge.s32.totalorder %s358, 0
      %p360 = scmp.lt.s32.totalorder %s358, 3
      %p361 = pnand %p359, %p360
      %p362 = pneg %p361
      // Predicated region
      $region41: #{noise_net_forward.5} parent=39 // pred_check
        _
      $region42: #{noise_net_forward.5} parent=39 // pred_check_branch
        %364 = sbr.rel (%p361) target = $region44
      $region43: #{noise_net_forward.5} parent=39 // pred_region
        %p365 = scmp.lt.s32.totalorder %s358, 0
        %s366 = ssub.s32 0, %s358
        %s367 = scalar_select %p365, %s366, %s358
        %s368 = sand.u32 %s367, 1
        %s369 = ssub.s32 0, %s368
        %s370 = scalar_select %p365, %s369, %s368
        %p371 = scmp.eq.s32.totalorder %s358, 0
        // Predicated region
        $region45: #{noise_net_forward.5} parent=43 // pred_check
          %p372 = pneg %p371
        $region46: #{noise_net_forward.5} parent=43 // pred_check_branch
          %374 = sbr.rel (%p372) target = $region48
        $region47: #{noise_net_forward.5} parent=43 // pred_region
          %s375 = smul.u32 %s358, 128
          %s376 = sadd.s32 %s375, 96
          %s377 = sshra.s32 %s376, 3
          %s378 = sand.u32 %s376, 7
          %s379 = smul.u32 %s21, 80
          %s380 = sadd.s32 %s377, %s379
          %s381 = smul.addr %s380, 4
          %s382 = scalar_lea.vmem %s0, %s381
          %s383 = smul.u32 %s370, 12
          %s384 = smul.addr %s383, 8
          %s385 = scalar_lea.vmem [#allocation2], %s384
          %s386 = scalar_lea.sflag [#allocation3], %s370
          %p388 = scmp.lt.u32.totalorder 96, 8
          %p389 = pneg %p388
          // Predicated region
          $region49: #{noise_net_forward.5} parent=47 // pred_check
            _
          $region50: #{noise_net_forward.5} parent=47 // pred_check_branch
            %391 = sbr.rel (%p388) target = $region52
          $region51: #{noise_net_forward.5} parent=47 // pred_region
            %s406 = sand.u32 96, 7
            %p407 = scmp.eq.s32.totalorder %s406, 0
            // Predicated region
            $region64: #{noise_net_forward.5} parent=51 // pred_check
              %p408 = pneg %p407
            $region65: #{noise_net_forward.5} parent=51 // pred_check_branch
              %410 = sbr.rel (%p408) target = $region67
            $region66: #{noise_net_forward.5} parent=51 // pred_region
              loop: start=0, step=1, limit=1
              $region68: #{noise_net_forward.5} parent=66 // loop_pre_header
                _
              $region69: #{noise_net_forward.5} parent=66 // loop_header
                %s412 = sphi 0, %s416
                %p413 = scmp.ge.s32.totalorder %s412, 1
                %s417 = sphi %s382, %s382
                %s418 = sphi %s385, %s385
              $region70: #{noise_net_forward.5} parent=66 // loop_header_branch
                %415 = sbr.rel (%p413) target = $region74
              $region71: #{noise_net_forward.5} parent=66 // loop_body
                %v419 = vld [vmem:[%s417] sm:$0xff]
                %420 = vst [vmem:[%s418] sm:$0xff] %v419
                %v421 = vld [vmem:[%s417 + $0x8] sm:$0xff]
                %422 = vst [vmem:[%s418 + $0x8] sm:$0xff] %v421
                %v423 = vld [vmem:[%s417 + $0x10] sm:$0xff]
                %424 = vst [vmem:[%s418 + $0x10] sm:$0xff] %v423
                %v425 = vld [vmem:[%s417 + $0x18] sm:$0xff]
                %426 = vst [vmem:[%s418 + $0x18] sm:$0xff] %v425
                %v427 = vld [vmem:[%s417 + $0x20] sm:$0xff]
                %428 = vst [vmem:[%s418 + $0x20] sm:$0xff] %v427
                %v429 = vld [vmem:[%s417 + $0x28] sm:$0xff]
                %430 = vst [vmem:[%s418 + $0x28] sm:$0xff] %v429
                %v431 = vld [vmem:[%s417 + $0x30] sm:$0xff]
                %432 = vst [vmem:[%s418 + $0x30] sm:$0xff] %v431
                %v433 = vld [vmem:[%s417 + $0x38] sm:$0xff]
                %434 = vst [vmem:[%s418 + $0x38] sm:$0xff] %v433
                %v435 = vld [vmem:[%s417 + $0x40] sm:$0xff]
                %436 = vst [vmem:[%s418 + $0x40] sm:$0xff] %v435
                %v437 = vld [vmem:[%s417 + $0x48] sm:$0xff]
                %438 = vst [vmem:[%s418 + $0x48] sm:$0xff] %v437
                %v439 = vld [vmem:[%s417 + $0x50] sm:$0xff]
                %440 = vst [vmem:[%s418 + $0x50] sm:$0xff] %v439
                %v441 = vld [vmem:[%s417 + $0x58] sm:$0xff]
                %442 = vst [vmem:[%s418 + $0x58] sm:$0xff] %v441
              $region72: #{noise_net_forward.5} parent=66 // loop_footer
                %s416 = sadd.s32 1, %s412
              $region73: #{noise_net_forward.5} parent=66 // loop_footer_branch
                %411 = sbr.rel target = $region69
              $region74: #{noise_net_forward.5} parent=66 // loop_exit
                _
            $region67: #{noise_net_forward.5} parent=51 // pred_fallthru
              _
            %p443 = pneg %p407
            // Predicated region
            $region75: #{noise_net_forward.5} parent=51 // pred_check
              _
            $region76: #{noise_net_forward.5} parent=51 // pred_check_branch
              %445 = sbr.rel (%p407) target = $region78
            $region77: #{noise_net_forward.5} parent=51 // pred_region
              %s446 = sand.u32 96, 7
            $region78: #{noise_net_forward.5} parent=51 // pred_fallthru
              _
          $region52: #{noise_net_forward.5} parent=47 // pred_fallthru
            _
          // Predicated region
          $region53: #{noise_net_forward.5} parent=47 // pred_check
            %p392 = pneg %p388
          $region54: #{noise_net_forward.5} parent=47 // pred_check_branch
            %394 = sbr.rel (%p392) target = $region56
          $region55: #{noise_net_forward.5} parent=47 // pred_region
            %s395 = sshllo.u32 0, 96
            loop: start=0, step=1, limit=1
            $region57: #{noise_net_forward.5} parent=55 // loop_pre_header
              _
            $region58: #{noise_net_forward.5} parent=55 // loop_header
              %s397 = sphi 0, %s401
              %p398 = scmp.ge.s32.totalorder %s397, 1
              %s402 = sphi %s382, %s382
              %s403 = sphi %s385, %s385
            $region59: #{noise_net_forward.5} parent=55 // loop_header_branch
              %400 = sbr.rel (%p398) target = $region63
            $region60: #{noise_net_forward.5} parent=55 // loop_body
              %v404 = vld [vmem:[%s402] sm:%s395]
              %405 = vst [vmem:[%s403] sm:%s395] %v404
            $region61: #{noise_net_forward.5} parent=55 // loop_footer
              %s401 = sadd.s32 1, %s397
            $region62: #{noise_net_forward.5} parent=55 // loop_footer_branch
              %396 = sbr.rel target = $region58
            $region63: #{noise_net_forward.5} parent=55 // loop_exit
              _
          $region56: #{noise_net_forward.5} parent=47 // pred_fallthru
            _
          // Predicated region
          $region79: #{noise_net_forward.5} parent=47 // pred_check
            _
          $region80: #{noise_net_forward.5} parent=47 // pred_check_branch
            %449 = sbr.rel (0) target = $region82
          $region81: #{noise_net_forward.5} parent=47 // pred_region
            %450 = vsyncadd %s386, 1536
          $region82: #{noise_net_forward.5} parent=47 // pred_fallthru
            _
        $region48: #{noise_net_forward.5} parent=43 // pred_fallthru
          _
        %s451 = smul.u32 %s370, 12
        %s452 = smul.addr %s451, 8
        %s453 = scalar_lea.vmem [#allocation2], %s452
        %s454 = scalar_lea.sflag [#allocation3], %s370
        %s455 = smul.u32 4, 24
        %s456 = smul.u32 %s455, 1
        %s457 = sshll.u32 %s456, 4
        %458 = dma.done %s454, %s457
        %p459 = scmp.lt.s32.totalorder %s22, 3
        // Predicated region
        $region83: #{noise_net_forward.5} parent=43 // pred_check
          %p460 = pneg %p459
        $region84: #{noise_net_forward.5} parent=43 // pred_check_branch
          %462 = sbr.rel (%p460) target = $region86
        $region85: #{noise_net_forward.5} parent=43 // pred_region
          %s463 = ssub.s32 1, %s370
          %s464 = smul.u32 %s22, 128
          %s465 = sadd.s32 %s464, 96
          %s466 = sshra.s32 %s465, 3
          %s467 = sand.u32 %s465, 7
          %s468 = smul.u32 %s21, 80
          %s469 = sadd.s32 %s466, %s468
          %s470 = smul.addr %s469, 4
          %s471 = scalar_lea.vmem %s0, %s470
          %s472 = smul.u32 %s463, 12
          %s473 = smul.addr %s472, 8
          %s474 = scalar_lea.vmem [#allocation2], %s473
          %s475 = scalar_lea.sflag [#allocation3], %s463
          %p477 = scmp.lt.u32.totalorder 96, 8
          %p478 = pneg %p477
          // Predicated region
          $region87: #{noise_net_forward.5} parent=85 // pred_check
            _
          $region88: #{noise_net_forward.5} parent=85 // pred_check_branch
            %480 = sbr.rel (%p477) target = $region90
          $region89: #{noise_net_forward.5} parent=85 // pred_region
            %s495 = sand.u32 96, 7
            %p496 = scmp.eq.s32.totalorder %s495, 0
            // Predicated region
            $region102: #{noise_net_forward.5} parent=89 // pred_check
              %p497 = pneg %p496
            $region103: #{noise_net_forward.5} parent=89 // pred_check_branch
              %499 = sbr.rel (%p497) target = $region105
            $region104: #{noise_net_forward.5} parent=89 // pred_region
              loop: start=0, step=1, limit=1
              $region106: #{noise_net_forward.5} parent=104 // loop_pre_header
                _
              $region107: #{noise_net_forward.5} parent=104 // loop_header
                %s501 = sphi 0, %s505
                %p502 = scmp.ge.s32.totalorder %s501, 1
                %s506 = sphi %s471, %s471
                %s507 = sphi %s474, %s474
              $region108: #{noise_net_forward.5} parent=104 // loop_header_branch
                %504 = sbr.rel (%p502) target = $region112
              $region109: #{noise_net_forward.5} parent=104 // loop_body
                %v508 = vld [vmem:[%s506] sm:$0xff]
                %509 = vst [vmem:[%s507] sm:$0xff] %v508
                %v510 = vld [vmem:[%s506 + $0x8] sm:$0xff]
                %511 = vst [vmem:[%s507 + $0x8] sm:$0xff] %v510
                %v512 = vld [vmem:[%s506 + $0x10] sm:$0xff]
                %513 = vst [vmem:[%s507 + $0x10] sm:$0xff] %v512
                %v514 = vld [vmem:[%s506 + $0x18] sm:$0xff]
                %515 = vst [vmem:[%s507 + $0x18] sm:$0xff] %v514
                %v516 = vld [vmem:[%s506 + $0x20] sm:$0xff]
                %517 = vst [vmem:[%s507 + $0x20] sm:$0xff] %v516
                %v518 = vld [vmem:[%s506 + $0x28] sm:$0xff]
                %519 = vst [vmem:[%s507 + $0x28] sm:$0xff] %v518
                %v520 = vld [vmem:[%s506 + $0x30] sm:$0xff]
                %521 = vst [vmem:[%s507 + $0x30] sm:$0xff] %v520
                %v522 = vld [vmem:[%s506 + $0x38] sm:$0xff]
                %523 = vst [vmem:[%s507 + $0x38] sm:$0xff] %v522
                %v524 = vld [vmem:[%s506 + $0x40] sm:$0xff]
                %525 = vst [vmem:[%s507 + $0x40] sm:$0xff] %v524
                %v526 = vld [vmem:[%s506 + $0x48] sm:$0xff]
                %527 = vst [vmem:[%s507 + $0x48] sm:$0xff] %v526
                %v528 = vld [vmem:[%s506 + $0x50] sm:$0xff]
                %529 = vst [vmem:[%s507 + $0x50] sm:$0xff] %v528
                %v530 = vld [vmem:[%s506 + $0x58] sm:$0xff]
                %531 = vst [vmem:[%s507 + $0x58] sm:$0xff] %v530
              $region110: #{noise_net_forward.5} parent=104 // loop_footer
                %s505 = sadd.s32 1, %s501
              $region111: #{noise_net_forward.5} parent=104 // loop_footer_branch
                %500 = sbr.rel target = $region107
              $region112: #{noise_net_forward.5} parent=104 // loop_exit
                _
            $region105: #{noise_net_forward.5} parent=89 // pred_fallthru
              _
            %p532 = pneg %p496
            // Predicated region
            $region113: #{noise_net_forward.5} parent=89 // pred_check
              _
            $region114: #{noise_net_forward.5} parent=89 // pred_check_branch
              %534 = sbr.rel (%p496) target = $region116
            $region115: #{noise_net_forward.5} parent=89 // pred_region
              %s535 = sand.u32 96, 7
            $region116: #{noise_net_forward.5} parent=89 // pred_fallthru
              _
          $region90: #{noise_net_forward.5} parent=85 // pred_fallthru
            _
          // Predicated region
          $region91: #{noise_net_forward.5} parent=85 // pred_check
            %p481 = pneg %p477
          $region92: #{noise_net_forward.5} parent=85 // pred_check_branch
            %483 = sbr.rel (%p481) target = $region94
          $region93: #{noise_net_forward.5} parent=85 // pred_region
            %s484 = sshllo.u32 0, 96
            loop: start=0, step=1, limit=1
            $region95: #{noise_net_forward.5} parent=93 // loop_pre_header
              _
            $region96: #{noise_net_forward.5} parent=93 // loop_header
              %s486 = sphi 0, %s490
              %p487 = scmp.ge.s32.totalorder %s486, 1
              %s491 = sphi %s471, %s471
              %s492 = sphi %s474, %s474
            $region97: #{noise_net_forward.5} parent=93 // loop_header_branch
              %489 = sbr.rel (%p487) target = $region101
            $region98: #{noise_net_forward.5} parent=93 // loop_body
              %v493 = vld [vmem:[%s491] sm:%s484]
              %494 = vst [vmem:[%s492] sm:%s484] %v493
            $region99: #{noise_net_forward.5} parent=93 // loop_footer
              %s490 = sadd.s32 1, %s486
            $region100: #{noise_net_forward.5} parent=93 // loop_footer_branch
              %485 = sbr.rel target = $region96
            $region101: #{noise_net_forward.5} parent=93 // loop_exit
              _
          $region94: #{noise_net_forward.5} parent=85 // pred_fallthru
            _
          // Predicated region
          $region117: #{noise_net_forward.5} parent=85 // pred_check
            _
          $region118: #{noise_net_forward.5} parent=85 // pred_check_branch
            %538 = sbr.rel (0) target = $region120
          $region119: #{noise_net_forward.5} parent=85 // pred_region
            %539 = vsyncadd %s475, 1536
          $region120: #{noise_net_forward.5} parent=85 // pred_fallthru
            _
        $region86: #{noise_net_forward.5} parent=43 // pred_fallthru
          _
        %v540 = vld [vmem:[%s453] sm:$0xff]
        %v541 = vld [vmem:[%s453 + $0x8] sm:$0xff]
        %v542 = vld [vmem:[%s453 + $0x10] sm:$0xff]
        %v543 = vld [vmem:[%s453 + $0x18] sm:$0xff]
        %v544 = vld [vmem:[%s453 + $0x20] sm:$0xff]
        %v545 = vld [vmem:[%s453 + $0x28] sm:$0xff]
        %v546 = vld [vmem:[%s453 + $0x30] sm:$0xff]
        %v547 = vld [vmem:[%s453 + $0x38] sm:$0xff]
        %v548 = vld [vmem:[%s453 + $0x40] sm:$0xff]
        %v549 = vld [vmem:[%s453 + $0x48] sm:$0xff]
        %v550 = vld [vmem:[%s453 + $0x50] sm:$0xff]
        %v551 = vld [vmem:[%s453 + $0x58] sm:$0xff]
        %vm552 = vsmask.f32 7424
        %v554 = vshrl.u32 %v540, 16
        %v556 = vshll.u32 %v540, 16
        %v558 = vrot.slane %v556, 1
        %v559 = vor.u32 %v554, %v558
        %v561 = vshll.u32 %v541, 16
        %v563 = vrot.slane %v561, 1
        %v564 = vsel %vm552, %v559, %v563
        %v565 = vshrl.u32 %v541, 16
        %v567 = vor.u32 %v565, %v563
        %v569 = vshll.u32 %v542, 16
        %v571 = vrot.slane %v569, 1
        %v572 = vsel %vm552, %v567, %v571
        %v573 = vshrl.u32 %v542, 16
        %v575 = vor.u32 %v573, %v571
        %v577 = vshll.u32 %v543, 16
        %v579 = vrot.slane %v577, 1
        %v580 = vsel %vm552, %v575, %v579
        %v581 = vshrl.u32 %v543, 16
        %v583 = vor.u32 %v581, %v579
        %v585 = vshll.u32 %v544, 16
        %v587 = vrot.slane %v585, 1
        %v588 = vsel %vm552, %v583, %v587
        %v589 = vshrl.u32 %v544, 16
        %v591 = vor.u32 %v589, %v587
        %v593 = vshll.u32 %v545, 16
        %v595 = vrot.slane %v593, 1
        %v596 = vsel %vm552, %v591, %v595
        %v597 = vshrl.u32 %v545, 16
        %v599 = vor.u32 %v597, %v595
        %v601 = vshll.u32 %v546, 16
        %v603 = vrot.slane %v601, 1
        %v604 = vsel %vm552, %v599, %v603
        %v605 = vshrl.u32 %v546, 16
        %v607 = vor.u32 %v605, %v603
        %v609 = vshll.u32 %v547, 16
        %v611 = vrot.slane %v609, 1
        %v612 = vsel %vm552, %v607, %v611
        %v613 = vshrl.u32 %v547, 16
        %v615 = vor.u32 %v613, %v611
        %v617 = vshll.u32 %v548, 16
        %v619 = vrot.slane %v617, 1
        %v620 = vsel %vm552, %v615, %v619
        %v621 = vshrl.u32 %v548, 16
        %v623 = vor.u32 %v621, %v619
        %vm633 = vcmask 1046528
        %v634 = vrot.slane %v540, 1
        %v635 = vrot.slane %v541, 1
        %v636 = vsel %vm633, %v634, %v635
        %v637 = vrot.slane %v542, 1
        %v638 = vsel %vm633, %v635, %v637
        %v639 = vrot.slane %v543, 1
        %v640 = vsel %vm633, %v637, %v639
        %v641 = vrot.slane %v544, 1
        %v642 = vsel %vm633, %v639, %v641
        %v643 = vrot.slane %v545, 1
        %v644 = vsel %vm633, %v641, %v643
        %v645 = vrot.slane %v546, 1
        %v646 = vsel %vm633, %v643, %v645
        %v647 = vrot.slane %v547, 1
        %v648 = vsel %vm633, %v645, %v647
        %v649 = vrot.slane %v548, 1
        %v650 = vsel %vm633, %v647, %v649
        %vm652 = vcmask 1043456
        %v653 = vrot.slane %v541, 4
        %v654 = vrot.slane %v542, 4
        %v655 = vsel %vm652, %v653, %v654
        %v656 = vrot.slane %v543, 4
        %v657 = vsel %vm652, %v654, %v656
        %v658 = vrot.slane %v544, 4
        %v659 = vsel %vm652, %v656, %v658
        %v660 = vrot.slane %v545, 4
        %v661 = vsel %vm652, %v658, %v660
        %v662 = vrot.slane %v546, 4
        %v663 = vsel %vm652, %v660, %v662
        %v664 = vrot.slane %v547, 4
        %v665 = vsel %vm652, %v662, %v664
        %v666 = vrot.slane %v548, 4
        %v667 = vsel %vm652, %v664, %v666
        %v668 = vrot.slane %v549, 4
        %v669 = vsel %vm652, %v666, %v668
        %vm670 = vsmask.f32 3328
        %v671 = vrot.slane %v573, 4
        %v672 = vrot.slane %v569, 5
        %v673 = vor.u32 %v671, %v672
        %v674 = vrot.slane %v581, 4
        %v675 = vrot.slane %v577, 5
        %v676 = vor.u32 %v674, %v675
        %v677 = vsel %vm670, %v673, %v676
        %v678 = vrot.slane %v589, 4
        %v679 = vrot.slane %v585, 5
        %v680 = vor.u32 %v678, %v679
        %v681 = vsel %vm670, %v676, %v680
        %v682 = vrot.slane %v597, 4
        %v683 = vrot.slane %v593, 5
        %v684 = vor.u32 %v682, %v683
        %v685 = vsel %vm670, %v680, %v684
        %v686 = vrot.slane %v605, 4
        %v687 = vrot.slane %v601, 5
        %v688 = vor.u32 %v686, %v687
        %v689 = vsel %vm670, %v684, %v688
        %v690 = vrot.slane %v613, 4
        %v691 = vrot.slane %v609, 5
        %v692 = vor.u32 %v690, %v691
        %v693 = vsel %vm670, %v688, %v692
        %v694 = vrot.slane %v621, 4
        %v695 = vrot.slane %v617, 5
        %v696 = vor.u32 %v694, %v695
        %v697 = vsel %vm670, %v692, %v696
        %v699 = vshrl.u32 %v549, 16
        %v701 = vrot.slane %v699, 4
        %v702 = vshll.u32 %v549, 16
        %v704 = vrot.slane %v702, 5
        %v705 = vor.u32 %v701, %v704
        %v706 = vsel %vm670, %v696, %v705
        %vm708 = vcmask 1042432
        %v709 = vrot.slane %v542, 5
        %v710 = vrot.slane %v543, 5
        %v711 = vsel %vm708, %v709, %v710
        %v712 = vrot.slane %v544, 5
        %v713 = vsel %vm708, %v710, %v712
        %v714 = vrot.slane %v545, 5
        %v715 = vsel %vm708, %v712, %v714
        %v716 = vrot.slane %v546, 5
        %v717 = vsel %vm708, %v714, %v716
        %v718 = vrot.slane %v547, 5
        %v719 = vsel %vm708, %v716, %v718
        %v720 = vrot.slane %v548, 5
        %v721 = vsel %vm708, %v718, %v720
        %v722 = vrot.slane %v549, 5
        %v723 = vsel %vm708, %v720, %v722
        %v724 = vrot.slane %v550, 5
        %v725 = vsel %vm708, %v722, %v724
        %v726 = vrot.slane %v702, 1
        %v727 = vsel %vm552, %v623, %v726
        %v728 = vor.u32 %v699, %v726
        %v730 = vshll.u32 %v550, 16
        %v732 = vrot.slane %v730, 1
        %v733 = vsel %vm552, %v728, %v732
        %v734 = vshrl.u32 %v550, 16
        %v736 = vor.u32 %v734, %v732
        %v738 = vshll.u32 %v551, 16
        %v740 = vrot.slane %v738, 1
        %v741 = vsel %vm552, %v736, %v740
        %v742 = vshrl.u32 %v551, 16
        %v744 = vor.u32 %v742, %v740
        %v746 = vrot.slane %v549, 1
        %v747 = vsel %vm633, %v649, %v746
        %v748 = vrot.slane %v550, 1
        %v749 = vsel %vm633, %v746, %v748
        %v750 = vrot.slane %v551, 1
        %v751 = vsel %vm633, %v748, %v750
        %v752 = vld [vmem:[%s1] sm:$0xf]
        %v753 = vld [vmem:[%s1 + $0x4] sm:$0xf]
        %v754 = vld [vmem:[%s1 + $0x8] sm:$0xf]
        %v755 = vld [vmem:[%s1 + $0xc] sm:$0xf]
        %v756 = vld [vmem:[%s1 + $0x10] sm:$0xf]
        %v757 = vld [vmem:[%s1 + $0x14] sm:$0xf]
        %v758 = vld [vmem:[%s1 + $0x18] sm:$0xf]
        %v759 = vld [vmem:[%s1 + $0x1c] sm:$0xf]
        %v760 = vld [vmem:[%s1 + $0x20] sm:$0xf]
        %v761 = vld [vmem:[%s1 + $0x24] sm:$0xf]
        %v762 = vld [vmem:[%s1 + $0x28] sm:$0xf]
        %v763 = vld [vmem:[%s1 + $0x2c] sm:$0xf]
        %v764 = vld [vmem:[%s1 + $0x30] sm:$0xf]
        %v765 = vld [vmem:[%s1 + $0x34] sm:$0xf]
        %v766 = vld [vmem:[%s1 + $0x38] sm:$0xf]
        %v767 = vld [vmem:[%s1 + $0x3c] sm:$0xf]
        %v768 = vld [vmem:[%s1 + $0x40] sm:$0xf]
        %v769 = vld [vmem:[%s1 + $0x44] sm:$0xf]
        %v770 = vld [vmem:[%s1 + $0x48] sm:$0xf]
        %v771 = vld [vmem:[%s1 + $0x4c] sm:$0xf]
        %v772 = vld [vmem:[%s1 + $0x50] sm:$0xf]
        %v773 = vld [vmem:[%s1 + $0x54] sm:$0xf]
        %v774 = vld [vmem:[%s1 + $0x58] sm:$0xf]
        %v775 = vld [vmem:[%s1 + $0x5c] sm:$0xf]
        %v776 = vld [vmem:[%s1 + $0x60] sm:$0xf]
        %v777 = vld [vmem:[%s1 + $0x64] sm:$0xf]
        %v778 = vld [vmem:[%s1 + $0x68] sm:$0xf]
        %v779 = vld [vmem:[%s1 + $0x6c] sm:$0xf]
        %v780 = vld [vmem:[%s1 + $0x70] sm:$0xf]
        %v781 = vld [vmem:[%s1 + $0x74] sm:$0xf]
        %v782 = vld [vmem:[%s1 + $0x78] sm:$0xf]
        %v783 = vld [vmem:[%s1 + $0x7c] sm:$0xf]
        %v784 = vld [vmem:[%s1 + $0x80] sm:$0xf]
        %v785 = vld [vmem:[%s1 + $0x84] sm:$0xf]
        %v786 = vld [vmem:[%s1 + $0x88] sm:$0xf]
        %v787 = vld [vmem:[%s1 + $0x8c] sm:$0xf]
        %v788 = vld [vmem:[%s1 + $0x90] sm:$0xf]
        %v789 = vld [vmem:[%s1 + $0x94] sm:$0xf]
        %v790 = vld [vmem:[%s1 + $0x98] sm:$0xf]
        %v791 = vld [vmem:[%s1 + $0x9c] sm:$0xf]
        %v792 = vld [vmem:[%s1 + $0xa0] sm:$0xf]
        %v793 = vld [vmem:[%s1 + $0xa4] sm:$0xf]
        %v794 = vld [vmem:[%s1 + $0xa8] sm:$0xf]
        %v795 = vld [vmem:[%s1 + $0xac] sm:$0xf]
        %v796 = vld [vmem:[%s1 + $0xb0] sm:$0xf]
        %v797 = vld [vmem:[%s1 + $0xb4] sm:$0xf]
        %v798 = vld [vmem:[%s1 + $0xb8] sm:$0xf]
        %v799 = vld [vmem:[%s1 + $0xbc] sm:$0xf]
        %v800 = vld [vmem:[%s1 + $0xc0] sm:$0xf]
        %v801 = vld [vmem:[%s1 + $0xc4] sm:$0xf]
        %v802 = vld [vmem:[%s1 + $0xc8] sm:$0xf]
        %v803 = vld [vmem:[%s1 + $0xcc] sm:$0xf]
        %v804 = vld [vmem:[%s1 + $0xd0] sm:$0xf]
        %v805 = vld [vmem:[%s1 + $0xd4] sm:$0xf]
        %v806 = vld [vmem:[%s1 + $0xd8] sm:$0xf]
        %v807 = vld [vmem:[%s1 + $0xdc] sm:$0xf]
        %v808 = vld [vmem:[%s1 + $0xe0] sm:$0xf]
        %v809 = vld [vmem:[%s1 + $0xe4] sm:$0xf]
        %v810 = vld [vmem:[%s1 + $0xe8] sm:$0xf]
        %v811 = vld [vmem:[%s1 + $0xec] sm:$0xf]
        %v812 = vld [vmem:[%s1 + $0xf0] sm:$0xf]
        %v813 = vld [vmem:[%s1 + $0xf4] sm:$0xf]
        %v814 = vld [vmem:[%s1 + $0xf8] sm:$0xf]
        %v815 = vld [vmem:[%s1 + $0xfc] sm:$0xf]
        %v816 = vld [vmem:[%s1 + $0x100] sm:$0xf]
        %v817 = vld [vmem:[%s1 + $0x104] sm:$0xf]
        %v818 = vld [vmem:[%s1 + $0x108] sm:$0xf]
        %v819 = vld [vmem:[%s1 + $0x10c] sm:$0xf]
        %v820 = vld [vmem:[%s1 + $0x110] sm:$0xf]
        %v821 = vld [vmem:[%s1 + $0x114] sm:$0xf]
        %v822 = vld [vmem:[%s1 + $0x118] sm:$0xf]
        %v823 = vld [vmem:[%s1 + $0x11c] sm:$0xf]
        %v824 = vld [vmem:[%s1 + $0x120] sm:$0xf]
        %v825 = vld [vmem:[%s1 + $0x124] sm:$0xf]
        %v826 = vld [vmem:[%s1 + $0x128] sm:$0xf]
        %v827 = vld [vmem:[%s1 + $0x12c] sm:$0xf]
        %v828 = vld [vmem:[%s1 + $0x130] sm:$0xf]
        %v829 = vld [vmem:[%s1 + $0x134] sm:$0xf]
        %v830 = vld [vmem:[%s1 + $0x138] sm:$0xf]
        %v831 = vld [vmem:[%s1 + $0x13c] sm:$0xf]
        %v832 = vld [vmem:[%s1 + $0x140] sm:$0xf]
        %v833 = vld [vmem:[%s1 + $0x144] sm:$0xf]
        %v834 = vld [vmem:[%s1 + $0x148] sm:$0xf]
        %v835 = vld [vmem:[%s1 + $0x14c] sm:$0xf]
        %v836 = vld [vmem:[%s1 + $0x150] sm:$0xf]
        %v837 = vld [vmem:[%s1 + $0x154] sm:$0xf]
        %v838 = vld [vmem:[%s1 + $0x158] sm:$0xf]
        %v839 = vld [vmem:[%s1 + $0x15c] sm:$0xf]
        %v840 = vld [vmem:[%s1 + $0x160] sm:$0xf]
        %v841 = vld [vmem:[%s1 + $0x164] sm:$0xf]
        %v842 = vld [vmem:[%s1 + $0x168] sm:$0xf]
        %v843 = vld [vmem:[%s1 + $0x16c] sm:$0xf]
        %v844 = vld [vmem:[%s1 + $0x170] sm:$0xf]
        %v845 = vld [vmem:[%s1 + $0x174] sm:$0xf]
        %v846 = vld [vmem:[%s1 + $0x178] sm:$0xf]
        %v847 = vld [vmem:[%s1 + $0x17c] sm:$0xf]
        %v848 = vld [vmem:[%s1 + $0x180] sm:$0xf]
        %v849 = vld [vmem:[%s1 + $0x184] sm:$0xf]
        %v850 = vld [vmem:[%s1 + $0x188] sm:$0xf]
        %v851 = vld [vmem:[%s1 + $0x18c] sm:$0xf]
        %v852 = vld [vmem:[%s1 + $0x190] sm:$0xf]
        %v853 = vld [vmem:[%s1 + $0x194] sm:$0xf]
        %v854 = vld [vmem:[%s1 + $0x198] sm:$0xf]
        %v855 = vld [vmem:[%s1 + $0x19c] sm:$0xf]
        %v856 = vld [vmem:[%s1 + $0x1a0] sm:$0xf]
        %v857 = vld [vmem:[%s1 + $0x1a4] sm:$0xf]
        %v858 = vld [vmem:[%s1 + $0x1a8] sm:$0xf]
        %v859 = vld [vmem:[%s1 + $0x1ac] sm:$0xf]
        %v860 = vld [vmem:[%s1 + $0x1b0] sm:$0xf]
        %v861 = vld [vmem:[%s1 + $0x1b4] sm:$0xf]
        %v862 = vld [vmem:[%s1 + $0x1b8] sm:$0xf]
        %v863 = vld [vmem:[%s1 + $0x1bc] sm:$0xf]
        %v864 = vld [vmem:[%s1 + $0x1c0] sm:$0xf]
        %v865 = vld [vmem:[%s1 + $0x1c4] sm:$0xf]
        %v866 = vld [vmem:[%s1 + $0x1c8] sm:$0xf]
        %v867 = vld [vmem:[%s1 + $0x1cc] sm:$0xf]
        %v868 = vld [vmem:[%s1 + $0x1d0] sm:$0xf]
        %v869 = vld [vmem:[%s1 + $0x1d4] sm:$0xf]
        %v870 = vld [vmem:[%s1 + $0x1d8] sm:$0xf]
        %v871 = vld [vmem:[%s1 + $0x1dc] sm:$0xf]
        %v872 = vld [vmem:[%s1 + $0x1e0] sm:$0xf]
        %v873 = vld [vmem:[%s1 + $0x1e4] sm:$0xf]
        %v874 = vld [vmem:[%s1 + $0x1e8] sm:$0xf]
        %v875 = vld [vmem:[%s1 + $0x1ec] sm:$0xf]
        %v876 = vld [vmem:[%s1 + $0x1f0] sm:$0xf]
        %v877 = vld [vmem:[%s1 + $0x1f4] sm:$0xf]
        %v878 = vld [vmem:[%s1 + $0x1f8] sm:$0xf]
        %v879 = vld [vmem:[%s1 + $0x1fc] sm:$0xf]
        %v880 = vld [vmem:[%s1 + $0x200] sm:$0xf]
        %v881 = vld [vmem:[%s1 + $0x204] sm:$0xf]
        %v882 = vld [vmem:[%s1 + $0x208] sm:$0xf]
        %v883 = vld [vmem:[%s1 + $0x20c] sm:$0xf]
        %v884 = vld [vmem:[%s1 + $0x210] sm:$0xf]
        %v885 = vld [vmem:[%s1 + $0x214] sm:$0xf]
        %v886 = vld [vmem:[%s1 + $0x218] sm:$0xf]
        %v887 = vld [vmem:[%s1 + $0x21c] sm:$0xf]
        %v888 = vld [vmem:[%s1 + $0x220] sm:$0xf]
        %v889 = vld [vmem:[%s1 + $0x224] sm:$0xf]
        %v890 = vld [vmem:[%s1 + $0x228] sm:$0xf]
        %v891 = vld [vmem:[%s1 + $0x22c] sm:$0xf]
        %v892 = vld [vmem:[%s1 + $0x230] sm:$0xf]
        %v893 = vld [vmem:[%s1 + $0x234] sm:$0xf]
        %v894 = vld [vmem:[%s1 + $0x238] sm:$0xf]
        %v895 = vld [vmem:[%s1 + $0x23c] sm:$0xf]
        %v896 = vld [vmem:[%s2] sm:$0x1]
        %v898 = vlaneseq
        %v899 = vshrl.u32 %v898, 7
        %v900 = vsub.s32 0, %v899
        %v901 = vrot.slane %v896, %v900
        %vm903 = vsmask.f32 4352
        %v904 = vrot.slane %v554, 3
        %v905 = vrot.slane %v556, 4
        %v906 = vor.u32 %v904, %v905
        %v907 = vrot.slane %v565, 3
        %v908 = vrot.slane %v561, 4
        %v909 = vor.u32 %v907, %v908
        %v910 = vsel %vm903, %v906, %v909
        %v912 = vshrl.u32 %v564, 16
        %v914 = vrot.slane %v912, 3
        %v915 = vshll.u32 %v564, 16
        %v917 = vrot.slane %v915, 4
        %v918 = vor.u32 %v914, %v917
        %v920 = vshrl.u32 %v572, 16
        %v922 = vrot.slane %v920, 3
        %v923 = vshll.u32 %v572, 16
        %v925 = vrot.slane %v923, 4
        %v926 = vor.u32 %v922, %v925
        %v927 = vsel %vm903, %v918, %v926
        %v929 = vshrl.u32 %v636, 16
        %v931 = vrot.slane %v929, 3
        %v932 = vshll.u32 %v636, 16
        %v934 = vrot.slane %v932, 4
        %v935 = vor.u32 %v931, %v934
        %v937 = vshrl.u32 %v638, 16
        %v939 = vrot.slane %v937, 3
        %v940 = vshll.u32 %v638, 16
        %v942 = vrot.slane %v940, 4
        %v943 = vor.u32 %v939, %v942
        %v944 = vsel %vm903, %v935, %v943
        %v946 = vshrl.u32 %v655, 16
        %v948 = vrot.slane %v946, 3
        %v949 = vshll.u32 %v655, 16
        %v951 = vrot.slane %v949, 4
        %v952 = vor.u32 %v948, %v951
        %v954 = vshrl.u32 %v657, 16
        %v956 = vrot.slane %v954, 3
        %v957 = vshll.u32 %v657, 16
        %v959 = vrot.slane %v957, 4
        %v960 = vor.u32 %v956, %v959
        %v961 = vsel %vm903, %v952, %v960
        %v963 = vshrl.u32 %v673, 16
        %v965 = vrot.slane %v963, 3
        %v966 = vshll.u32 %v673, 16
        %v968 = vrot.slane %v966, 4
        %v969 = vor.u32 %v965, %v968
        %v971 = vshrl.u32 %v677, 16
        %v973 = vrot.slane %v971, 3
        %v974 = vshll.u32 %v677, 16
        %v976 = vrot.slane %v974, 4
        %v977 = vor.u32 %v973, %v976
        %v978 = vsel %vm903, %v969, %v977
        %v980 = vshrl.u32 %v709, 16
        %v982 = vrot.slane %v980, 3
        %v983 = vshll.u32 %v709, 16
        %v985 = vrot.slane %v983, 4
        %v986 = vor.u32 %v982, %v985
        %v988 = vshrl.u32 %v711, 16
        %v990 = vrot.slane %v988, 3
        %v991 = vshll.u32 %v711, 16
        %v993 = vrot.slane %v991, 4
        %v994 = vor.u32 %v990, %v993
        %v995 = vsel %vm903, %v986, %v994
        %v996 = vrot.slane %v581, 3
        %v997 = vrot.slane %v577, 4
        %v998 = vor.u32 %v996, %v997
        %v999 = vrot.slane %v589, 3
        %v1000 = vrot.slane %v585, 4
        %v1001 = vor.u32 %v999, %v1000
        %v1002 = vsel %vm903, %v998, %v1001
        %v1004 = vshrl.u32 %v588, 16
        %v1006 = vrot.slane %v1004, 3
        %v1007 = vshll.u32 %v588, 16
        %v1009 = vrot.slane %v1007, 4
        %v1010 = vor.u32 %v1006, %v1009
        %v1012 = vshrl.u32 %v596, 16
        %v1014 = vrot.slane %v1012, 3
        %v1015 = vshll.u32 %v596, 16
        %v1017 = vrot.slane %v1015, 4
        %v1018 = vor.u32 %v1014, %v1017
        %v1019 = vsel %vm903, %v1010, %v1018
        %v1021 = vshrl.u32 %v642, 16
        %v1023 = vrot.slane %v1021, 3
        %v1024 = vshll.u32 %v642, 16
        %v1026 = vrot.slane %v1024, 4
        %v1027 = vor.u32 %v1023, %v1026
        %v1029 = vshrl.u32 %v644, 16
        %v1031 = vrot.slane %v1029, 3
        %v1032 = vshll.u32 %v644, 16
        %v1034 = vrot.slane %v1032, 4
        %v1035 = vor.u32 %v1031, %v1034
        %v1036 = vsel %vm903, %v1027, %v1035
        %v1037 = vrot.slane %v573, 3
        %v1038 = vrot.slane %v569, 4
        %v1039 = vor.u32 %v1037, %v1038
        %v1040 = vsel %vm903, %v909, %v1039
        %v1042 = vshrl.u32 %v580, 16
        %v1044 = vrot.slane %v1042, 3
        %v1045 = vshll.u32 %v580, 16
        %v1047 = vrot.slane %v1045, 4
        %v1048 = vor.u32 %v1044, %v1047
        %v1049 = vsel %vm903, %v926, %v1048
        %v1051 = vshrl.u32 %v640, 16
        %v1053 = vrot.slane %v1051, 3
        %v1054 = vshll.u32 %v640, 16
        %v1056 = vrot.slane %v1054, 4
        %v1057 = vor.u32 %v1053, %v1056
        %v1058 = vsel %vm903, %v943, %v1057
        %v1060 = vshrl.u32 %v659, 16
        %v1062 = vrot.slane %v1060, 3
        %v1063 = vshll.u32 %v659, 16
        %v1065 = vrot.slane %v1063, 4
        %v1066 = vor.u32 %v1062, %v1065
        %v1067 = vsel %vm903, %v960, %v1066
        %v1069 = vshrl.u32 %v681, 16
        %v1071 = vrot.slane %v1069, 3
        %v1072 = vshll.u32 %v681, 16
        %v1074 = vrot.slane %v1072, 4
        %v1075 = vor.u32 %v1071, %v1074
        %v1076 = vsel %vm903, %v977, %v1075
        %v1078 = vshrl.u32 %v713, 16
        %v1080 = vrot.slane %v1078, 3
        %v1081 = vshll.u32 %v713, 16
        %v1083 = vrot.slane %v1081, 4
        %v1084 = vor.u32 %v1080, %v1083
        %v1085 = vsel %vm903, %v994, %v1084
        %v1086 = vrot.slane %v597, 3
        %v1087 = vrot.slane %v593, 4
        %v1088 = vor.u32 %v1086, %v1087
        %v1089 = vsel %vm903, %v1001, %v1088
        %v1091 = vshrl.u32 %v604, 16
        %v1093 = vrot.slane %v1091, 3
        %v1094 = vshll.u32 %v604, 16
        %v1096 = vrot.slane %v1094, 4
        %v1097 = vor.u32 %v1093, %v1096
        %v1098 = vsel %vm903, %v1018, %v1097
        %v1100 = vshrl.u32 %v646, 16
        %v1102 = vrot.slane %v1100, 3
        %v1103 = vshll.u32 %v646, 16
        %v1105 = vrot.slane %v1103, 4
        %v1106 = vor.u32 %v1102, %v1105
        %v1107 = vsel %vm903, %v1035, %v1106
        %v1108 = vsel %vm903, %v1039, %v998
        %v1109 = vsel %vm903, %v1048, %v1010
        %v1110 = vsel %vm903, %v1057, %v1027
        %v1112 = vshrl.u32 %v661, 16
        %v1114 = vrot.slane %v1112, 3
        %v1115 = vshll.u32 %v661, 16
        %v1117 = vrot.slane %v1115, 4
        %v1118 = vor.u32 %v1114, %v1117
        %v1119 = vsel %vm903, %v1066, %v1118
        %v1121 = vshrl.u32 %v685, 16
        %v1123 = vrot.slane %v1121, 3
        %v1124 = vshll.u32 %v685, 16
        %v1126 = vrot.slane %v1124, 4
        %v1127 = vor.u32 %v1123, %v1126
        %v1128 = vsel %vm903, %v1075, %v1127
        %v1130 = vshrl.u32 %v715, 16
        %v1132 = vrot.slane %v1130, 3
        %v1133 = vshll.u32 %v715, 16
        %v1135 = vrot.slane %v1133, 4
        %v1136 = vor.u32 %v1132, %v1135
        %v1137 = vsel %vm903, %v1084, %v1136
        %v1138 = vrot.slane %v605, 3
        %v1139 = vrot.slane %v601, 4
        %v1140 = vor.u32 %v1138, %v1139
        %v1141 = vsel %vm903, %v1088, %v1140
        %v1143 = vshrl.u32 %v612, 16
        %v1145 = vrot.slane %v1143, 3
        %v1146 = vshll.u32 %v612, 16
        %v1148 = vrot.slane %v1146, 4
        %v1149 = vor.u32 %v1145, %v1148
        %v1150 = vsel %vm903, %v1097, %v1149
        %v1152 = vshrl.u32 %v648, 16
        %v1154 = vrot.slane %v1152, 3
        %v1155 = vshll.u32 %v648, 16
        %v1157 = vrot.slane %v1155, 4
        %v1158 = vor.u32 %v1154, %v1157
        %v1159 = vsel %vm903, %v1106, %v1158
        %v1161 = vshrl.u32 %v663, 16
        %v1163 = vrot.slane %v1161, 3
        %v1164 = vshll.u32 %v663, 16
        %v1166 = vrot.slane %v1164, 4
        %v1167 = vor.u32 %v1163, %v1166
        %v1168 = vsel %vm903, %v1118, %v1167
        %v1170 = vshrl.u32 %v689, 16
        %v1172 = vrot.slane %v1170, 3
        %v1173 = vshll.u32 %v689, 16
        %v1175 = vrot.slane %v1173, 4
        %v1176 = vor.u32 %v1172, %v1175
        %v1177 = vsel %vm903, %v1127, %v1176
        %v1179 = vshrl.u32 %v717, 16
        %v1181 = vrot.slane %v1179, 3
        %v1182 = vshll.u32 %v717, 16
        %v1184 = vrot.slane %v1182, 4
        %v1185 = vor.u32 %v1181, %v1184
        %v1186 = vsel %vm903, %v1136, %v1185
        %v1187 = vrot.slane %v613, 3
        %v1188 = vrot.slane %v609, 4
        %v1189 = vor.u32 %v1187, %v1188
        %v1190 = vsel %vm903, %v1140, %v1189
        %v1192 = vshrl.u32 %v620, 16
        %v1194 = vrot.slane %v1192, 3
        %v1195 = vshll.u32 %v620, 16
        %v1197 = vrot.slane %v1195, 4
        %v1198 = vor.u32 %v1194, %v1197
        %v1199 = vsel %vm903, %v1149, %v1198
        %v1201 = vshrl.u32 %v650, 16
        %v1203 = vrot.slane %v1201, 3
        %v1204 = vshll.u32 %v650, 16
        %v1206 = vrot.slane %v1204, 4
        %v1207 = vor.u32 %v1203, %v1206
        %v1208 = vsel %vm903, %v1158, %v1207
        %v1210 = vshrl.u32 %v665, 16
        %v1212 = vrot.slane %v1210, 3
        %v1213 = vshll.u32 %v665, 16
        %v1215 = vrot.slane %v1213, 4
        %v1216 = vor.u32 %v1212, %v1215
        %v1217 = vsel %vm903, %v1167, %v1216
        %v1219 = vshrl.u32 %v693, 16
        %v1221 = vrot.slane %v1219, 3
        %v1222 = vshll.u32 %v693, 16
        %v1224 = vrot.slane %v1222, 4
        %v1225 = vor.u32 %v1221, %v1224
        %v1226 = vsel %vm903, %v1176, %v1225
        %v1228 = vshrl.u32 %v719, 16
        %v1230 = vrot.slane %v1228, 3
        %v1231 = vshll.u32 %v719, 16
        %v1233 = vrot.slane %v1231, 4
        %v1234 = vor.u32 %v1230, %v1233
        %v1235 = vsel %vm903, %v1185, %v1234
        %v1236 = vrot.slane %v621, 3
        %v1237 = vrot.slane %v617, 4
        %v1238 = vor.u32 %v1236, %v1237
        %v1239 = vsel %vm903, %v1189, %v1238
        %v1241 = vshrl.u32 %v727, 16
        %v1243 = vrot.slane %v1241, 3
        %v1244 = vshll.u32 %v727, 16
        %v1246 = vrot.slane %v1244, 4
        %v1247 = vor.u32 %v1243, %v1246
        %v1248 = vsel %vm903, %v1198, %v1247
        %v1250 = vshrl.u32 %v747, 16
        %v1252 = vrot.slane %v1250, 3
        %v1253 = vshll.u32 %v747, 16
        %v1255 = vrot.slane %v1253, 4
        %v1256 = vor.u32 %v1252, %v1255
        %v1257 = vsel %vm903, %v1207, %v1256
        %v1259 = vshrl.u32 %v667, 16
        %v1261 = vrot.slane %v1259, 3
        %v1262 = vshll.u32 %v667, 16
        %v1264 = vrot.slane %v1262, 4
        %v1265 = vor.u32 %v1261, %v1264
        %v1266 = vsel %vm903, %v1216, %v1265
        %v1268 = vshrl.u32 %v697, 16
        %v1270 = vrot.slane %v1268, 3
        %v1271 = vshll.u32 %v697, 16
        %v1273 = vrot.slane %v1271, 4
        %v1274 = vor.u32 %v1270, %v1273
        %v1275 = vsel %vm903, %v1225, %v1274
        %v1277 = vshrl.u32 %v721, 16
        %v1279 = vrot.slane %v1277, 3
        %v1280 = vshll.u32 %v721, 16
        %v1282 = vrot.slane %v1280, 4
        %v1283 = vor.u32 %v1279, %v1282
        %v1284 = vsel %vm903, %v1234, %v1283
        %v1285 = vrot.slane %v699, 3
        %v1286 = vrot.slane %v702, 4
        %v1287 = vor.u32 %v1285, %v1286
        %v1288 = vsel %vm903, %v1238, %v1287
        %v1290 = vshrl.u32 %v733, 16
        %v1292 = vrot.slane %v1290, 3
        %v1293 = vshll.u32 %v733, 16
        %v1295 = vrot.slane %v1293, 4
        %v1296 = vor.u32 %v1292, %v1295
        %v1297 = vsel %vm903, %v1247, %v1296
        %v1299 = vshrl.u32 %v749, 16
        %v1301 = vrot.slane %v1299, 3
        %v1302 = vshll.u32 %v749, 16
        %v1304 = vrot.slane %v1302, 4
        %v1305 = vor.u32 %v1301, %v1304
        %v1306 = vsel %vm903, %v1256, %v1305
        %v1308 = vshrl.u32 %v669, 16
        %v1310 = vrot.slane %v1308, 3
        %v1311 = vshll.u32 %v669, 16
        %v1313 = vrot.slane %v1311, 4
        %v1314 = vor.u32 %v1310, %v1313
        %v1315 = vsel %vm903, %v1265, %v1314
        %v1317 = vshrl.u32 %v706, 16
        %v1319 = vrot.slane %v1317, 3
        %v1320 = vshll.u32 %v706, 16
        %v1322 = vrot.slane %v1320, 4
        %v1323 = vor.u32 %v1319, %v1322
        %v1324 = vsel %vm903, %v1274, %v1323
        %v1326 = vshrl.u32 %v723, 16
        %v1328 = vrot.slane %v1326, 3
        %v1329 = vshll.u32 %v723, 16
        %v1331 = vrot.slane %v1329, 4
        %v1332 = vor.u32 %v1328, %v1331
        %v1333 = vsel %vm903, %v1283, %v1332
        %v1334 = vrot.slane %v734, 3
        %v1335 = vrot.slane %v730, 4
        %v1336 = vor.u32 %v1334, %v1335
        %v1337 = vsel %vm903, %v1287, %v1336
        %v1339 = vshrl.u32 %v741, 16
        %v1341 = vrot.slane %v1339, 3
        %v1342 = vshll.u32 %v741, 16
        %v1344 = vrot.slane %v1342, 4
        %v1345 = vor.u32 %v1341, %v1344
        %v1346 = vsel %vm903, %v1296, %v1345
        %v1348 = vshrl.u32 %v751, 16
        %v1350 = vrot.slane %v1348, 3
        %v1351 = vshll.u32 %v751, 16
        %v1353 = vrot.slane %v1351, 4
        %v1354 = vor.u32 %v1350, %v1353
        %v1355 = vsel %vm903, %v1305, %v1354
        %v1357 = vshrl.u32 %v623, 16
        %v1359 = vrot.slane %v1357, 3
        %v1360 = vshll.u32 %v623, 16
        %v1362 = vrot.slane %v1360, 4
        %v1363 = vor.u32 %v1359, %v1362
        %v1364 = vsel %vm903, %v1198, %v1363
        %v1366 = vshrl.u32 %v649, 16
        %v1368 = vrot.slane %v1366, 3
        %v1369 = vshll.u32 %v649, 16
        %v1371 = vrot.slane %v1369, 4
        %v1372 = vor.u32 %v1368, %v1371
        %v1373 = vsel %vm903, %v1207, %v1372
        %v1375 = vshrl.u32 %v668, 16
        %v1377 = vrot.slane %v1375, 3
        %v1378 = vshll.u32 %v668, 16
        %v1380 = vrot.slane %v1378, 4
        %v1381 = vor.u32 %v1377, %v1380
        %v1382 = vsel %vm903, %v1314, %v1381
        %v1384 = vshrl.u32 %v705, 16
        %v1386 = vrot.slane %v1384, 3
        %v1387 = vshll.u32 %v705, 16
        %v1389 = vrot.slane %v1387, 4
        %v1390 = vor.u32 %v1386, %v1389
        %v1391 = vsel %vm903, %v1323, %v1390
        %v1393 = vshrl.u32 %v725, 16
        %v1395 = vrot.slane %v1393, 3
        %v1396 = vshll.u32 %v725, 16
        %v1398 = vrot.slane %v1396, 4
        %v1399 = vor.u32 %v1395, %v1398
        %v1400 = vsel %vm903, %v1332, %v1399
        %v1401 = vrot.slane %v742, 3
        %v1402 = vrot.slane %v738, 4
        %v1403 = vor.u32 %v1401, %v1402
        %v1404 = vsel %vm903, %v1336, %v1403
        %v1406 = vshrl.u32 %v744, 16
        %v1408 = vrot.slane %v1406, 3
        %v1409 = vshll.u32 %v744, 16
        %v1411 = vrot.slane %v1409, 4
        %v1412 = vor.u32 %v1408, %v1411
        %v1413 = vsel %vm903, %v1345, %v1412
        %v1415 = vshrl.u32 %v750, 16
        %v1417 = vrot.slane %v1415, 3
        %v1418 = vshll.u32 %v750, 16
        %v1420 = vrot.slane %v1418, 4
        %v1421 = vor.u32 %v1417, %v1420
        %v1422 = vsel %vm903, %v1354, %v1421
        %v1626 = vunpack.c.l.b16 %v752
        %v1627 = vunpack.c.l.b16 %v753
        %v1628 = vunpack.c.l.b16 %v754
        %v1629 = vunpack.c.l.b16 %v755
        %v1630 = vunpack.c.l.b16 %v756
        %v1631 = vunpack.c.l.b16 %v757
        %v1632 = vunpack.c.l.b16 %v758
        %v1633 = vunpack.c.l.b16 %v759
        %v1634 = vunpack.c.l.b16 %v760
        %v1635 = vunpack.c.l.b16 %v761
        %v1636 = vunpack.c.l.b16 %v762
        %v1637 = vunpack.c.l.b16 %v763
        %v1638 = vunpack.c.l.b16 %v764
        %v1639 = vunpack.c.l.b16 %v765
        %v1640 = vunpack.c.l.b16 %v766
        %v1641 = vunpack.c.l.b16 %v767
        %v1642 = vunpack.c.l.b16 %v768
        %v1643 = vunpack.c.l.b16 %v769
        %v1644 = vunpack.c.l.b16 %v770
        %v1645 = vunpack.c.l.b16 %v771
        %v1646 = vunpack.c.l.b16 %v772
        %v1647 = vunpack.c.l.b16 %v773
        %v1648 = vunpack.c.l.b16 %v774
        %v1649 = vunpack.c.l.b16 %v775
        %v1650 = vunpack.c.l.b16 %v776
        %v1651 = vunpack.c.l.b16 %v777
        %v1652 = vunpack.c.l.b16 %v778
        %v1653 = vunpack.c.l.b16 %v779
        %v1654 = vunpack.c.l.b16 %v780
        %v1655 = vunpack.c.l.b16 %v781
        %v1656 = vunpack.c.l.b16 %v782
        %v1657 = vunpack.c.l.b16 %v783
        %v1658 = vunpack.c.l.b16 %v784
        %v1659 = vunpack.c.l.b16 %v785
        %v1660 = vunpack.c.l.b16 %v786
        %v1661 = vunpack.c.l.b16 %v787
        %v1662 = vunpack.c.l.b16 %v788
        %v1663 = vunpack.c.l.b16 %v789
        %v1664 = vunpack.c.l.b16 %v790
        %v1665 = vunpack.c.l.b16 %v791
        %v1666 = vunpack.c.l.b16 %v792
        %v1667 = vunpack.c.l.b16 %v793
        %v1668 = vunpack.c.l.b16 %v794
        %v1669 = vunpack.c.l.b16 %v795
        %v1670 = vunpack.c.l.b16 %v796
        %v1671 = vunpack.c.l.b16 %v797
        %v1672 = vunpack.c.l.b16 %v798
        %v1673 = vunpack.c.l.b16 %v799
        %v1674 = vunpack.c.l.b16 %v800
        %v1675 = vunpack.c.l.b16 %v801
        %v1676 = vunpack.c.l.b16 %v802
        %v1677 = vunpack.c.l.b16 %v803
        %v1678 = vunpack.c.l.b16 %v804
        %v1679 = vunpack.c.l.b16 %v805
        %v1680 = vunpack.c.l.b16 %v806
        %v1681 = vunpack.c.l.b16 %v807
        %v1682 = vunpack.c.l.b16 %v808
        %v1683 = vunpack.c.l.b16 %v809
        %v1684 = vunpack.c.l.b16 %v810
        %v1685 = vunpack.c.l.b16 %v811
        %v1686 = vunpack.c.l.b16 %v812
        %v1687 = vunpack.c.l.b16 %v813
        %v1688 = vunpack.c.l.b16 %v814
        %v1689 = vunpack.c.l.b16 %v815
        %v1690 = vunpack.c.l.b16 %v816
        %v1691 = vunpack.c.l.b16 %v817
        %v1692 = vunpack.c.l.b16 %v818
        %v1693 = vunpack.c.l.b16 %v819
        %v1694 = vunpack.c.l.b16 %v820
        %v1695 = vunpack.c.l.b16 %v821
        %v1696 = vunpack.c.l.b16 %v822
        %v1697 = vunpack.c.l.b16 %v823
        %v1698 = vunpack.c.l.b16 %v824
        %v1699 = vunpack.c.l.b16 %v825
        %v1700 = vunpack.c.l.b16 %v826
        %v1701 = vunpack.c.l.b16 %v827
        %v1702 = vunpack.c.l.b16 %v828
        %v1703 = vunpack.c.l.b16 %v829
        %v1704 = vunpack.c.l.b16 %v830
        %v1705 = vunpack.c.l.b16 %v831
        %v1706 = vunpack.c.l.b16 %v832
        %v1707 = vunpack.c.l.b16 %v833
        %v1708 = vunpack.c.l.b16 %v834
        %v1709 = vunpack.c.l.b16 %v835
        %v1710 = vunpack.c.l.b16 %v836
        %v1711 = vunpack.c.l.b16 %v837
        %v1712 = vunpack.c.l.b16 %v838
        %v1713 = vunpack.c.l.b16 %v839
        %v1714 = vunpack.c.l.b16 %v840
        %v1715 = vunpack.c.l.b16 %v841
        %v1716 = vunpack.c.l.b16 %v842
        %v1717 = vunpack.c.l.b16 %v843
        %v1718 = vunpack.c.l.b16 %v844
        %v1719 = vunpack.c.l.b16 %v845
        %v1720 = vunpack.c.l.b16 %v846
        %v1721 = vunpack.c.l.b16 %v847
        %v1722 = vunpack.c.l.b16 %v848
        %v1723 = vunpack.c.l.b16 %v849
        %v1724 = vunpack.c.l.b16 %v850
        %v1725 = vunpack.c.l.b16 %v851
        %v1726 = vunpack.c.l.b16 %v852
        %v1727 = vunpack.c.l.b16 %v853
        %v1728 = vunpack.c.l.b16 %v854
        %v1729 = vunpack.c.l.b16 %v855
        %v1730 = vunpack.c.l.b16 %v856
        %v1731 = vunpack.c.l.b16 %v857
        %v1732 = vunpack.c.l.b16 %v858
        %v1733 = vunpack.c.l.b16 %v859
        %v1734 = vunpack.c.l.b16 %v860
        %v1735 = vunpack.c.l.b16 %v861
        %v1736 = vunpack.c.l.b16 %v862
        %v1737 = vunpack.c.l.b16 %v863
        %v1738 = vunpack.c.l.b16 %v864
        %v1739 = vunpack.c.l.b16 %v865
        %v1740 = vunpack.c.l.b16 %v866
        %v1741 = vunpack.c.l.b16 %v867
        %v1742 = vunpack.c.l.b16 %v868
        %v1743 = vunpack.c.l.b16 %v869
        %v1744 = vunpack.c.l.b16 %v870
        %v1745 = vunpack.c.l.b16 %v871
        %v1746 = vunpack.c.l.b16 %v872
        %v1747 = vunpack.c.l.b16 %v873
        %v1748 = vunpack.c.l.b16 %v874
        %v1749 = vunpack.c.l.b16 %v875
        %v1750 = vunpack.c.l.b16 %v876
        %v1751 = vunpack.c.l.b16 %v877
        %v1752 = vunpack.c.l.b16 %v878
        %v1753 = vunpack.c.l.b16 %v879
        %v1754 = vunpack.c.l.b16 %v880
        %v1755 = vunpack.c.l.b16 %v881
        %v1756 = vunpack.c.l.b16 %v882
        %v1757 = vunpack.c.l.b16 %v883
        %v1758 = vunpack.c.l.b16 %v884
        %v1759 = vunpack.c.l.b16 %v885
        %v1760 = vunpack.c.l.b16 %v886
        %v1761 = vunpack.c.l.b16 %v887
        %v1762 = vunpack.c.l.b16 %v888
        %v1763 = vunpack.c.l.b16 %v889
        %v1764 = vunpack.c.l.b16 %v890
        %v1765 = vunpack.c.l.b16 %v891
        %v1766 = vunpack.c.l.b16 %v892
        %v1767 = vunpack.c.l.b16 %v893
        %v1768 = vunpack.c.l.b16 %v894
        %v1769 = vunpack.c.l.b16 %v895
        %v1770 = vpack.c.b16 %v1627, %v1626
        %v1771 = vpack.c.b16 %v1629, %v1628
        %v1772 = vpack.c.b16 %v1631, %v1630
        %v1773 = vpack.c.b16 %v1633, %v1632
        %v1774 = vpack.c.b16 %v1635, %v1634
        %v1775 = vpack.c.b16 %v1637, %v1636
        %v1776 = vpack.c.b16 %v1639, %v1638
        %v1777 = vpack.c.b16 %v1641, %v1640
        %v1778 = vpack.c.b16 %v1643, %v1642
        %v1779 = vpack.c.b16 %v1645, %v1644
        %v1780 = vpack.c.b16 %v1647, %v1646
        %v1781 = vpack.c.b16 %v1649, %v1648
        %v1782 = vpack.c.b16 %v1651, %v1650
        %v1783 = vpack.c.b16 %v1653, %v1652
        %v1784 = vpack.c.b16 %v1655, %v1654
        %v1785 = vpack.c.b16 %v1657, %v1656
        %v1786 = vpack.c.b16 %v1659, %v1658
        %v1787 = vpack.c.b16 %v1661, %v1660
        %v1788 = vpack.c.b16 %v1663, %v1662
        %v1789 = vpack.c.b16 %v1665, %v1664
        %v1790 = vpack.c.b16 %v1667, %v1666
        %v1791 = vpack.c.b16 %v1669, %v1668
        %v1792 = vpack.c.b16 %v1671, %v1670
        %v1793 = vpack.c.b16 %v1673, %v1672
        %v1794 = vpack.c.b16 %v1675, %v1674
        %v1795 = vpack.c.b16 %v1677, %v1676
        %v1796 = vpack.c.b16 %v1679, %v1678
        %v1797 = vpack.c.b16 %v1681, %v1680
        %v1798 = vpack.c.b16 %v1683, %v1682
        %v1799 = vpack.c.b16 %v1685, %v1684
        %v1800 = vpack.c.b16 %v1687, %v1686
        %v1801 = vpack.c.b16 %v1689, %v1688
        %v1802 = vpack.c.b16 %v1691, %v1690
        %v1803 = vpack.c.b16 %v1693, %v1692
        %v1804 = vpack.c.b16 %v1695, %v1694
        %v1805 = vpack.c.b16 %v1697, %v1696
        %v1806 = vpack.c.b16 %v1699, %v1698
        %v1807 = vpack.c.b16 %v1701, %v1700
        %v1808 = vpack.c.b16 %v1703, %v1702
        %v1809 = vpack.c.b16 %v1705, %v1704
        %v1810 = vpack.c.b16 %v1707, %v1706
        %v1811 = vpack.c.b16 %v1709, %v1708
        %v1812 = vpack.c.b16 %v1711, %v1710
        %v1813 = vpack.c.b16 %v1713, %v1712
        %v1814 = vpack.c.b16 %v1715, %v1714
        %v1815 = vpack.c.b16 %v1717, %v1716
        %v1816 = vpack.c.b16 %v1719, %v1718
        %v1817 = vpack.c.b16 %v1721, %v1720
        %v1818 = vpack.c.b16 %v1723, %v1722
        %v1819 = vpack.c.b16 %v1725, %v1724
        %v1820 = vpack.c.b16 %v1727, %v1726
        %v1821 = vpack.c.b16 %v1729, %v1728
        %v1822 = vpack.c.b16 %v1731, %v1730
        %v1823 = vpack.c.b16 %v1733, %v1732
        %v1824 = vpack.c.b16 %v1735, %v1734
        %v1825 = vpack.c.b16 %v1737, %v1736
        %v1826 = vpack.c.b16 %v1739, %v1738
        %v1827 = vpack.c.b16 %v1741, %v1740
        %v1828 = vpack.c.b16 %v1743, %v1742
        %v1829 = vpack.c.b16 %v1745, %v1744
        %v1830 = vpack.c.b16 %v1747, %v1746
        %v1831 = vpack.c.b16 %v1749, %v1748
        %v1832 = vpack.c.b16 %v1751, %v1750
        %v1833 = vpack.c.b16 %v1753, %v1752
        %v1834 = vpack.c.b16 %v1755, %v1754
        %v1835 = vpack.c.b16 %v1757, %v1756
        %v1836 = vpack.c.b16 %v1759, %v1758
        %v1837 = vpack.c.b16 %v1761, %v1760
        %v1838 = vpack.c.b16 %v1763, %v1762
        %v1839 = vpack.c.b16 %v1765, %v1764
        %v1840 = vpack.c.b16 %v1767, %v1766
        %v1841 = vpack.c.b16 %v1769, %v1768
        %1914 = vmatprep.subr.bf16.mxu0 0
        %1915 = vmatpush1.bf16.msra.mxu0 %v1770
        %1916 = vmatprep.subr.bf16.mxu0 0
        %1917 = vmatpush1.bf16.msra.mxu0 %v1771
        %1918 = vmatprep.subr.bf16.mxu0 0
        %1919 = vmatpush1.bf16.msra.mxu0 %v1772
        %1920 = vmatprep.subr.bf16.mxu0 0
        %1921 = vmatpush1.bf16.msra.mxu0 %v1773
        %1922 = vmatprep.subr.bf16.mxu0 0
        %1923 = vmatpush1.bf16.msra.mxu0 %v1774
        %1924 = vmatprep.subr.bf16.mxu0 0
        %1925 = vmatpush1.bf16.msra.mxu0 %v1775
        %1926 = vmatprep.subr.bf16.mxu0 0
        %1927 = vmatpush1.bf16.msra.mxu0 %v1776
        %1928 = vmatprep.subr.bf16.mxu0 0
        %1929 = vmatpush1.bf16.msra.mxu0 %v1777
        %1930 = vmatprep.subr.bf16.mxu0 0
        %1931 = vmatpush1.bf16.msra.mxu0 %v1778
        %1932 = vmatprep.subr.bf16.mxu0 0
        %1933 = vmatpush1.bf16.msra.mxu0 %v1779
        %1934 = vmatprep.subr.bf16.mxu0 0
        %1935 = vmatpush1.bf16.msra.mxu0 %v1780
        %1936 = vmatprep.subr.bf16.mxu0 0
        %1937 = vmatpush1.bf16.msra.mxu0 %v1781
        %1938 = vmatprep.subr.bf16.mxu0 0
        %1939 = vmatpush1.bf16.msra.mxu0 %v1782
        %1940 = vmatprep.subr.bf16.mxu0 0
        %1941 = vmatpush1.bf16.msra.mxu0 %v1783
        %1942 = vmatprep.subr.bf16.mxu0 0
        %1943 = vmatpush1.bf16.msra.mxu0 %v1784
        %1944 = vmatprep.subr.bf16.mxu0 0
        %1945 = vmatpush1.bf16.msra.mxu0 %v1785
        %1946 = vmatprep.mubr.bf16.mxu0 %v927
        %1947 = vmatmul.mubr.bf16.gmra.mrb[0].mxu0 %v910
        %v1948 = vpop.f32.mrb[0].mxu0
        %v1949 = vadd.f32 %v901, %v1948
        %v1950 = vpop.f32.mrb[0].mxu0
        %v1951 = vpop.f32.mrb[0].mxu0
        %v1952 = vadd.f32 %v901, %v1951
        %v1953 = vpop.f32.mrb[0].mxu0
        %1954 = vmatprep.mubr.bf16.mxu0 %v1049
        %1955 = vmatmul.mubr.bf16.gmra.mrb[0].mxu0 %v1040
        %v1956 = vpop.f32.mrb[0].mxu0
        %v1957 = vadd.f32 %v901, %v1956
        %v1958 = vpop.f32.mrb[0].mxu0
        %v1959 = vpop.f32.mrb[0].mxu0
        %v1960 = vadd.f32 %v901, %v1959
        %v1961 = vpop.f32.mrb[0].mxu0
        %1962 = vmatprep.mubr.bf16.mxu0 %v1109
        %1963 = vmatmul.mubr.bf16.gmra.mrb[0].mxu0 %v1108
        %v1964 = vpop.f32.mrb[0].mxu0
        %v1965 = vadd.f32 %v901, %v1964
        %v1966 = vpop.f32.mrb[0].mxu0
        %v1967 = vpop.f32.mrb[0].mxu0
        %v1968 = vadd.f32 %v901, %v1967
        %v1969 = vpop.f32.mrb[0].mxu0
        %1970 = vmatprep.mubr.bf16.mxu0 %v1019
        %1971 = vmatmul.mubr.bf16.gmra.mrb[0].mxu0 %v1002
        %v1972 = vpop.f32.mrb[0].mxu0
        %v1973 = vadd.f32 %v901, %v1972
        %v1974 = vpop.f32.mrb[0].mxu0
        %v1975 = vpop.f32.mrb[0].mxu0
        %v1976 = vadd.f32 %v901, %v1975
        %v1977 = vpop.f32.mrb[0].mxu0
        %1978 = vmatprep.mubr.bf16.mxu0 %v1098
        %1979 = vmatmul.mubr.bf16.gmra.mrb[0].mxu0 %v1089
        %v1980 = vpop.f32.mrb[0].mxu0
        %v1981 = vadd.f32 %v901, %v1980
        %v1982 = vpop.f32.mrb[0].mxu0
        %v1983 = vpop.f32.mrb[0].mxu0
        %v1984 = vadd.f32 %v901, %v1983
        %v1985 = vpop.f32.mrb[0].mxu0
        %1986 = vmatprep.mubr.bf16.mxu0 %v1150
        %1987 = vmatmul.mubr.bf16.gmra.mrb[0].mxu0 %v1141
        %v1988 = vpop.f32.mrb[0].mxu0
        %v1989 = vadd.f32 %v901, %v1988
        %v1990 = vpop.f32.mrb[0].mxu0
        %v1991 = vpop.f32.mrb[0].mxu0
        %v1992 = vadd.f32 %v901, %v1991
        %v1993 = vpop.f32.mrb[0].mxu0
        %1994 = vmatprep.mubr.bf16.mxu0 %v1199
        %1995 = vmatmul.mubr.bf16.gmra.mrb[0].mxu0 %v1190
        %v1996 = vpop.f32.mrb[0].mxu0
        %v1997 = vadd.f32 %v901, %v1996
        %v1998 = vpop.f32.mrb[0].mxu0
        %v1999 = vpop.f32.mrb[0].mxu0
        %v2000 = vadd.f32 %v901, %v1999
        %v2001 = vpop.f32.mrb[0].mxu0
        %2002 = vmatprep.mubr.bf16.mxu0 %v1364
        %2003 = vmatmul.mubr.bf16.gmra.mrb[0].mxu0 %v1239
        %v2004 = vpop.f32.mrb[0].mxu0
        %v2005 = vadd.f32 %v901, %v2004
        %v2006 = vpop.f32.mrb[0].mxu0
        %v2007 = vpop.f32.mrb[0].mxu0
        %v2008 = vadd.f32 %v901, %v2007
        %v2009 = vpop.f32.mrb[0].mxu0
        %2010 = vdwg.mxu0
        %2011 = vmatprep.subr.bf16.mxu0 0
        %2012 = vmatpush1.bf16.msra.mxu0 %v1786
        %2013 = vmatprep.subr.bf16.mxu0 0
        %2014 = vmatpush1.bf16.msra.mxu0 %v1787
        %2015 = vmatprep.subr.bf16.mxu0 0
        %2016 = vmatpush1.bf16.msra.mxu0 %v1788
        %2017 = vmatprep.subr.bf16.mxu0 0
        %2018 = vmatpush1.bf16.msra.mxu0 %v1789
        %2019 = vmatprep.subr.bf16.mxu0 0
        %2020 = vmatpush1.bf16.msra.mxu0 %v1790
        %2021 = vmatprep.subr.bf16.mxu0 0
        %2022 = vmatpush1.bf16.msra.mxu0 %v1791
        %2023 = vmatprep.subr.bf16.mxu0 0
        %2024 = vmatpush1.bf16.msra.mxu0 %v1792
        %2025 = vmatprep.subr.bf16.mxu0 0
        %2026 = vmatpush1.bf16.msra.mxu0 %v1793
        %2027 = vmatprep.subr.bf16.mxu0 0
        %2028 = vmatpush1.bf16.msra.mxu0 %v1794
        %2029 = vmatprep.subr.bf16.mxu0 0
        %2030 = vmatpush1.bf16.msra.mxu0 %v1795
        %2031 = vmatprep.subr.bf16.mxu0 0
        %2032 = vmatpush1.bf16.msra.mxu0 %v1796
        %2033 = vmatprep.subr.bf16.mxu0 0
        %2034 = vmatpush1.bf16.msra.mxu0 %v1797
        %2035 = vmatprep.subr.bf16.mxu0 0
        %2036 = vmatpush1.bf16.msra.mxu0 %v1798
        %2037 = vmatprep.subr.bf16.mxu0 0
        %2038 = vmatpush1.bf16.msra.mxu0 %v1799
        %2039 = vmatprep.subr.bf16.mxu0 0
        %2040 = vmatpush1.bf16.msra.mxu0 %v1800
        %2041 = vmatprep.subr.bf16.mxu0 0
        %2042 = vmatpush1.bf16.msra.mxu0 %v1801
        %2043 = vmatprep.mubr.bf16.mxu0 %v961
        %2044 = vmatmul.mubr.bf16.gmra.mrb[0].mxu0 %v944
        %v2045 = vpop.f32.mrb[0].mxu0
        %v2046 = vadd.f32 %v1949, %v2045
        %v2047 = vpop.f32.mrb[0].mxu0
        %v2048 = vpop.f32.mrb[0].mxu0
        %v2049 = vadd.f32 %v1952, %v2048
        %v2050 = vpop.f32.mrb[0].mxu0
        %2051 = vmatprep.mubr.bf16.mxu0 %v1067
        %2052 = vmatmul.mubr.bf16.gmra.mrb[0].mxu0 %v1058
        %v2053 = vpop.f32.mrb[0].mxu0
        %v2054 = vadd.f32 %v1957, %v2053
        %v2055 = vpop.f32.mrb[0].mxu0
        %v2056 = vpop.f32.mrb[0].mxu0
        %v2057 = vadd.f32 %v1960, %v2056
        %v2058 = vpop.f32.mrb[0].mxu0
        %2059 = vmatprep.mubr.bf16.mxu0 %v1119
        %2060 = vmatmul.mubr.bf16.gmra.mrb[0].mxu0 %v1110
        %v2061 = vpop.f32.mrb[0].mxu0
        %v2062 = vadd.f32 %v1965, %v2061
        %v2063 = vpop.f32.mrb[0].mxu0
        %v2064 = vpop.f32.mrb[0].mxu0
        %v2065 = vadd.f32 %v1968, %v2064
        %v2066 = vpop.f32.mrb[0].mxu0
        %2067 = vmatprep.mubr.bf16.mxu0 %v1168
        %2068 = vmatmul.mubr.bf16.gmra.mrb[0].mxu0 %v1036
        %v2069 = vpop.f32.mrb[0].mxu0
        %v2070 = vadd.f32 %v1973, %v2069
        %v2071 = vpop.f32.mrb[0].mxu0
        %v2072 = vpop.f32.mrb[0].mxu0
        %v2073 = vadd.f32 %v1976, %v2072
        %v2074 = vpop.f32.mrb[0].mxu0
        %2075 = vmatprep.mubr.bf16.mxu0 %v1217
        %2076 = vmatmul.mubr.bf16.gmra.mrb[0].mxu0 %v1107
        %v2077 = vpop.f32.mrb[0].mxu0
        %v2078 = vadd.f32 %v1981, %v2077
        %v2079 = vpop.f32.mrb[0].mxu0
        %v2080 = vpop.f32.mrb[0].mxu0
        %v2081 = vadd.f32 %v1984, %v2080
        %v2082 = vpop.f32.mrb[0].mxu0
        %2083 = vmatprep.mubr.bf16.mxu0 %v1266
        %2084 = vmatmul.mubr.bf16.gmra.mrb[0].mxu0 %v1159
        %v2085 = vpop.f32.mrb[0].mxu0
        %v2086 = vadd.f32 %v1989, %v2085
        %v2087 = vpop.f32.mrb[0].mxu0
        %v2088 = vpop.f32.mrb[0].mxu0
        %v2089 = vadd.f32 %v1992, %v2088
        %v2090 = vpop.f32.mrb[0].mxu0
        %2091 = vmatprep.mubr.bf16.mxu0 %v1315
        %2092 = vmatmul.mubr.bf16.gmra.mrb[0].mxu0 %v1208
        %v2093 = vpop.f32.mrb[0].mxu0
        %v2094 = vadd.f32 %v1997, %v2093
        %v2095 = vpop.f32.mrb[0].mxu0
        %v2096 = vpop.f32.mrb[0].mxu0
        %v2097 = vadd.f32 %v2000, %v2096
        %v2098 = vpop.f32.mrb[0].mxu0
        %2099 = vmatprep.mubr.bf16.mxu0 %v1382
        %2100 = vmatmul.mubr.bf16.gmra.mrb[0].mxu0 %v1373
        %v2101 = vpop.f32.mrb[0].mxu0
        %v2102 = vadd.f32 %v2005, %v2101
        %v2103 = vpop.f32.mrb[0].mxu0
        %v2104 = vpop.f32.mrb[0].mxu0
        %v2105 = vadd.f32 %v2008, %v2104
        %v2106 = vpop.f32.mrb[0].mxu0
        %2107 = vdwg.mxu0
        %2108 = vmatprep.subr.bf16.mxu0 0
        %2109 = vmatpush1.bf16.msra.mxu0 %v1802
        %2110 = vmatprep.subr.bf16.mxu0 0
        %2111 = vmatpush1.bf16.msra.mxu0 %v1803
        %2112 = vmatprep.subr.bf16.mxu0 0
        %2113 = vmatpush1.bf16.msra.mxu0 %v1804
        %2114 = vmatprep.subr.bf16.mxu0 0
        %2115 = vmatpush1.bf16.msra.mxu0 %v1805
        %2116 = vmatprep.subr.bf16.mxu0 0
        %2117 = vmatpush1.bf16.msra.mxu0 %v1806
        %2118 = vmatprep.subr.bf16.mxu0 0
        %2119 = vmatpush1.bf16.msra.mxu0 %v1807
        %2120 = vmatprep.subr.bf16.mxu0 0
        %2121 = vmatpush1.bf16.msra.mxu0 %v1808
        %2122 = vmatprep.subr.bf16.mxu0 0
        %2123 = vmatpush1.bf16.msra.mxu0 %v1809
        %2124 = vmatprep.subr.bf16.mxu0 0
        %2125 = vmatpush1.bf16.msra.mxu0 %v1810
        %2126 = vmatprep.subr.bf16.mxu0 0
        %2127 = vmatpush1.bf16.msra.mxu0 %v1811
        %2128 = vmatprep.subr.bf16.mxu0 0
        %2129 = vmatpush1.bf16.msra.mxu0 %v1812
        %2130 = vmatprep.subr.bf16.mxu0 0
        %2131 = vmatpush1.bf16.msra.mxu0 %v1813
        %2132 = vmatprep.subr.bf16.mxu0 0
        %2133 = vmatpush1.bf16.msra.mxu0 %v1814
        %2134 = vmatprep.subr.bf16.mxu0 0
        %2135 = vmatpush1.bf16.msra.mxu0 %v1815
        %2136 = vmatprep.subr.bf16.mxu0 0
        %2137 = vmatpush1.bf16.msra.mxu0 %v1816
        %2138 = vmatprep.subr.bf16.mxu0 0
        %2139 = vmatpush1.bf16.msra.mxu0 %v1817
        %2140 = vmatprep.mubr.bf16.mxu0 %v995
        %2141 = vmatmul.mubr.bf16.gmra.mrb[0].mxu0 %v978
        %v2142 = vpop.f32.mrb[0].mxu0
        %v2143 = vadd.f32 %v2046, %v2142
        %v2144 = vpop.f32.mrb[0].mxu0
        %v2145 = vpop.f32.mrb[0].mxu0
        %v2146 = vadd.f32 %v2049, %v2145
        %v2147 = vpop.f32.mrb[0].mxu0
        %2148 = vmatprep.mubr.bf16.mxu0 %v1085
        %2149 = vmatmul.mubr.bf16.gmra.mrb[0].mxu0 %v1076
        %v2150 = vpop.f32.mrb[0].mxu0
        %v2151 = vadd.f32 %v2054, %v2150
        %v2152 = vpop.f32.mrb[0].mxu0
        %v2153 = vpop.f32.mrb[0].mxu0
        %v2154 = vadd.f32 %v2057, %v2153
        %v2155 = vpop.f32.mrb[0].mxu0
        %2156 = vmatprep.mubr.bf16.mxu0 %v1137
        %2157 = vmatmul.mubr.bf16.gmra.mrb[0].mxu0 %v1128
        %v2158 = vpop.f32.mrb[0].mxu0
        %v2159 = vadd.f32 %v2062, %v2158
        %v2160 = vpop.f32.mrb[0].mxu0
        %v2161 = vpop.f32.mrb[0].mxu0
        %v2162 = vadd.f32 %v2065, %v2161
        %v2163 = vpop.f32.mrb[0].mxu0
        %2164 = vmatprep.mubr.bf16.mxu0 %v1186
        %2165 = vmatmul.mubr.bf16.gmra.mrb[0].mxu0 %v1177
        %v2166 = vpop.f32.mrb[0].mxu0
        %v2167 = vadd.f32 %v2070, %v2166
        %v2168 = vpop.f32.mrb[0].mxu0
        %v2169 = vpop.f32.mrb[0].mxu0
        %v2170 = vadd.f32 %v2073, %v2169
        %v2171 = vpop.f32.mrb[0].mxu0
        %2172 = vmatprep.mubr.bf16.mxu0 %v1235
        %2173 = vmatmul.mubr.bf16.gmra.mrb[0].mxu0 %v1226
        %v2174 = vpop.f32.mrb[0].mxu0
        %v2175 = vadd.f32 %v2078, %v2174
        %v2176 = vpop.f32.mrb[0].mxu0
        %v2177 = vpop.f32.mrb[0].mxu0
        %v2178 = vadd.f32 %v2081, %v2177
        %v2179 = vpop.f32.mrb[0].mxu0
        %2180 = vmatprep.mubr.bf16.mxu0 %v1284
        %2181 = vmatmul.mubr.bf16.gmra.mrb[0].mxu0 %v1275
        %v2182 = vpop.f32.mrb[0].mxu0
        %v2183 = vadd.f32 %v2086, %v2182
        %v2184 = vpop.f32.mrb[0].mxu0
        %v2185 = vpop.f32.mrb[0].mxu0
        %v2186 = vadd.f32 %v2089, %v2185
        %v2187 = vpop.f32.mrb[0].mxu0
        %2188 = vmatprep.mubr.bf16.mxu0 %v1333
        %2189 = vmatmul.mubr.bf16.gmra.mrb[0].mxu0 %v1324
        %v2190 = vpop.f32.mrb[0].mxu0
        %v2191 = vadd.f32 %v2094, %v2190
        %v2192 = vpop.f32.mrb[0].mxu0
        %v2193 = vpop.f32.mrb[0].mxu0
        %v2194 = vadd.f32 %v2097, %v2193
        %v2195 = vpop.f32.mrb[0].mxu0
        %2196 = vmatprep.mubr.bf16.mxu0 %v1400
        %2197 = vmatmul.mubr.bf16.gmra.mrb[0].mxu0 %v1391
        %v2198 = vpop.f32.mrb[0].mxu0
        %v2199 = vadd.f32 %v2102, %v2198
        %v2200 = vpop.f32.mrb[0].mxu0
        %v2201 = vpop.f32.mrb[0].mxu0
        %v2202 = vadd.f32 %v2105, %v2201
        %v2203 = vpop.f32.mrb[0].mxu0
        %2204 = vdwg.mxu0
        %2205 = vmatprep.subr.bf16.mxu0 0
        %2206 = vmatpush1.bf16.msra.mxu0 %v1818
        %2207 = vmatprep.subr.bf16.mxu0 0
        %2208 = vmatpush1.bf16.msra.mxu0 %v1819
        %2209 = vmatprep.subr.bf16.mxu0 0
        %2210 = vmatpush1.bf16.msra.mxu0 %v1820
        %2211 = vmatprep.subr.bf16.mxu0 0
        %2212 = vmatpush1.bf16.msra.mxu0 %v1821
        %2213 = vmatprep.subr.bf16.mxu0 0
        %2214 = vmatpush1.bf16.msra.mxu0 %v1822
        %2215 = vmatprep.subr.bf16.mxu0 0
        %2216 = vmatpush1.bf16.msra.mxu0 %v1823
        %2217 = vmatprep.subr.bf16.mxu0 0
        %2218 = vmatpush1.bf16.msra.mxu0 %v1824
        %2219 = vmatprep.subr.bf16.mxu0 0
        %2220 = vmatpush1.bf16.msra.mxu0 %v1825
        %2221 = vmatprep.subr.bf16.mxu0 0
        %2222 = vmatpush1.bf16.msra.mxu0 %v1826
        %2223 = vmatprep.subr.bf16.mxu0 0
        %2224 = vmatpush1.bf16.msra.mxu0 %v1827
        %2225 = vmatprep.subr.bf16.mxu0 0
        %2226 = vmatpush1.bf16.msra.mxu0 %v1828
        %2227 = vmatprep.subr.bf16.mxu0 0
        %2228 = vmatpush1.bf16.msra.mxu0 %v1829
        %2229 = vmatprep.subr.bf16.mxu0 0
        %2230 = vmatpush1.bf16.msra.mxu0 %v1830
        %2231 = vmatprep.subr.bf16.mxu0 0
        %2232 = vmatpush1.bf16.msra.mxu0 %v1831
        %2233 = vmatprep.subr.bf16.mxu0 0
        %2234 = vmatpush1.bf16.msra.mxu0 %v1832
        %2235 = vmatprep.subr.bf16.mxu0 0
        %2236 = vmatpush1.bf16.msra.mxu0 %v1833
        %2237 = vmatprep.mubr.bf16.mxu0 %v1019
        %2238 = vmatmul.mubr.bf16.gmra.mrb[0].mxu0 %v1002
        %v2239 = vpop.f32.mrb[0].mxu0
        %v2240 = vadd.f32 %v2143, %v2239
        %v2241 = vpop.f32.mrb[0].mxu0
        %v2242 = vpop.f32.mrb[0].mxu0
        %v2243 = vadd.f32 %v2146, %v2242
        %v2244 = vpop.f32.mrb[0].mxu0
        %2245 = vmatprep.mubr.bf16.mxu0 %v1098
        %2246 = vmatmul.mubr.bf16.gmra.mrb[0].mxu0 %v1089
        %v2247 = vpop.f32.mrb[0].mxu0
        %v2248 = vadd.f32 %v2151, %v2247
        %v2249 = vpop.f32.mrb[0].mxu0
        %v2250 = vpop.f32.mrb[0].mxu0
        %v2251 = vadd.f32 %v2154, %v2250
        %v2252 = vpop.f32.mrb[0].mxu0
        %2253 = vmatprep.mubr.bf16.mxu0 %v1150
        %2254 = vmatmul.mubr.bf16.gmra.mrb[0].mxu0 %v1141
        %v2255 = vpop.f32.mrb[0].mxu0
        %v2256 = vadd.f32 %v2159, %v2255
        %v2257 = vpop.f32.mrb[0].mxu0
        %v2258 = vpop.f32.mrb[0].mxu0
        %v2259 = vadd.f32 %v2162, %v2258
        %v2260 = vpop.f32.mrb[0].mxu0
        %2261 = vmatprep.mubr.bf16.mxu0 %v1199
        %2262 = vmatmul.mubr.bf16.gmra.mrb[0].mxu0 %v1190
        %v2263 = vpop.f32.mrb[0].mxu0
        %v2264 = vadd.f32 %v2167, %v2263
        %v2265 = vpop.f32.mrb[0].mxu0
        %v2266 = vpop.f32.mrb[0].mxu0
        %v2267 = vadd.f32 %v2170, %v2266
        %v2268 = vpop.f32.mrb[0].mxu0
        %2269 = vmatprep.mubr.bf16.mxu0 %v1248
        %2270 = vmatmul.mubr.bf16.gmra.mrb[0].mxu0 %v1239
        %v2271 = vpop.f32.mrb[0].mxu0
        %v2272 = vadd.f32 %v2175, %v2271
        %v2273 = vpop.f32.mrb[0].mxu0
        %v2274 = vpop.f32.mrb[0].mxu0
        %v2275 = vadd.f32 %v2178, %v2274
        %v2276 = vpop.f32.mrb[0].mxu0
        %2277 = vmatprep.mubr.bf16.mxu0 %v1297
        %2278 = vmatmul.mubr.bf16.gmra.mrb[0].mxu0 %v1288
        %v2279 = vpop.f32.mrb[0].mxu0
        %v2280 = vadd.f32 %v2183, %v2279
        %v2281 = vpop.f32.mrb[0].mxu0
        %v2282 = vpop.f32.mrb[0].mxu0
        %v2283 = vadd.f32 %v2186, %v2282
        %v2284 = vpop.f32.mrb[0].mxu0
        %2285 = vmatprep.mubr.bf16.mxu0 %v1346
        %2286 = vmatmul.mubr.bf16.gmra.mrb[0].mxu0 %v1337
        %v2287 = vpop.f32.mrb[0].mxu0
        %v2288 = vadd.f32 %v2191, %v2287
        %v2289 = vpop.f32.mrb[0].mxu0
        %v2290 = vpop.f32.mrb[0].mxu0
        %v2291 = vadd.f32 %v2194, %v2290
        %v2292 = vpop.f32.mrb[0].mxu0
        %2293 = vmatprep.mubr.bf16.mxu0 %v1413
        %2294 = vmatmul.mubr.bf16.gmra.mrb[0].mxu0 %v1404
        %v2295 = vpop.f32.mrb[0].mxu0
        %v2296 = vadd.f32 %v2199, %v2295
        %v2297 = vpop.f32.mrb[0].mxu0
        %v2298 = vpop.f32.mrb[0].mxu0
        %v2299 = vadd.f32 %v2202, %v2298
        %v2300 = vpop.f32.mrb[0].mxu0
        %2301 = vdwg.mxu0
        %2302 = vmatprep.subr.bf16.mxu0 0
        %2303 = vmatpush1.bf16.msra.mxu0 %v1834
        %2304 = vmatprep.subr.bf16.mxu0 0
        %2305 = vmatpush1.bf16.msra.mxu0 %v1835
        %2306 = vmatprep.subr.bf16.mxu0 0
        %2307 = vmatpush1.bf16.msra.mxu0 %v1836
        %2308 = vmatprep.subr.bf16.mxu0 0
        %2309 = vmatpush1.bf16.msra.mxu0 %v1837
        %2310 = vmatprep.subr.bf16.mxu0 0
        %2311 = vmatpush1.bf16.msra.mxu0 %v1838
        %2312 = vmatprep.subr.bf16.mxu0 0
        %2313 = vmatpush1.bf16.msra.mxu0 %v1839
        %2314 = vmatprep.subr.bf16.mxu0 0
        %2315 = vmatpush1.bf16.msra.mxu0 %v1840
        %2316 = vmatprep.subr.bf16.mxu0 0
        %2317 = vmatpush1.bf16.msra.mxu0 %v1841
        %2318 = vmatprep.subr.bf16.mxu0 0
        %2319 = vmatpush1.bf16.msra.mxu0 0
        %2320 = vmatprep.subr.bf16.mxu0 0
        %2321 = vmatpush1.bf16.msra.mxu0 0
        %2322 = vmatprep.subr.bf16.mxu0 0
        %2323 = vmatpush1.bf16.msra.mxu0 0
        %2324 = vmatprep.subr.bf16.mxu0 0
        %2325 = vmatpush1.bf16.msra.mxu0 0
        %2326 = vmatprep.subr.bf16.mxu0 0
        %2327 = vmatpush1.bf16.msra.mxu0 0
        %2328 = vmatprep.subr.bf16.mxu0 0
        %2329 = vmatpush1.bf16.msra.mxu0 0
        %2330 = vmatprep.subr.bf16.mxu0 0
        %2331 = vmatpush1.bf16.msra.mxu0 0
        %2332 = vmatprep.subr.bf16.mxu0 0
        %2333 = vmatpush1.bf16.msra.mxu0 0
        %2334 = vmatprep.mubr.bf16.mxu0 0
        %2335 = vmatmul.mubr.bf16.gmra.mrb[0].mxu0 %v1036
        %v2336 = vpop.f32.mrb[0].mxu0
        %v2337 = vadd.f32 %v2240, %v2336
        %v2338 = vpop.f32.mrb[0].mxu0
        %v2339 = vpop.f32.mrb[0].mxu0
        %v2340 = vadd.f32 %v2243, %v2339
        %v2341 = vpop.f32.mrb[0].mxu0
        %2342 = vmatprep.mubr.bf16.mxu0 0
        %2343 = vmatmul.mubr.bf16.gmra.mrb[0].mxu0 %v1107
        %v2344 = vpop.f32.mrb[0].mxu0
        %v2345 = vadd.f32 %v2248, %v2344
        %v2346 = vpop.f32.mrb[0].mxu0
        %v2347 = vpop.f32.mrb[0].mxu0
        %v2348 = vadd.f32 %v2251, %v2347
        %v2349 = vpop.f32.mrb[0].mxu0
        %2350 = vmatprep.mubr.bf16.mxu0 0
        %2351 = vmatmul.mubr.bf16.gmra.mrb[0].mxu0 %v1159
        %v2352 = vpop.f32.mrb[0].mxu0
        %v2353 = vadd.f32 %v2256, %v2352
        %v2354 = vpop.f32.mrb[0].mxu0
        %v2355 = vpop.f32.mrb[0].mxu0
        %v2356 = vadd.f32 %v2259, %v2355
        %v2357 = vpop.f32.mrb[0].mxu0
        %2358 = vmatprep.mubr.bf16.mxu0 0
        %2359 = vmatmul.mubr.bf16.gmra.mrb[0].mxu0 %v1208
        %v2360 = vpop.f32.mrb[0].mxu0
        %v2361 = vadd.f32 %v2264, %v2360
        %v2362 = vpop.f32.mrb[0].mxu0
        %v2363 = vpop.f32.mrb[0].mxu0
        %v2364 = vadd.f32 %v2267, %v2363
        %v2365 = vpop.f32.mrb[0].mxu0
        %2366 = vmatprep.mubr.bf16.mxu0 0
        %2367 = vmatmul.mubr.bf16.gmra.mrb[0].mxu0 %v1257
        %v2368 = vpop.f32.mrb[0].mxu0
        %v2369 = vadd.f32 %v2272, %v2368
        %v2370 = vpop.f32.mrb[0].mxu0
        %v2371 = vpop.f32.mrb[0].mxu0
        %v2372 = vadd.f32 %v2275, %v2371
        %v2373 = vpop.f32.mrb[0].mxu0
        %2374 = vmatprep.mubr.bf16.mxu0 0
        %2375 = vmatmul.mubr.bf16.gmra.mrb[0].mxu0 %v1306
        %v2376 = vpop.f32.mrb[0].mxu0
        %v2377 = vadd.f32 %v2280, %v2376
        %v2378 = vpop.f32.mrb[0].mxu0
        %v2379 = vpop.f32.mrb[0].mxu0
        %v2380 = vadd.f32 %v2283, %v2379
        %v2381 = vpop.f32.mrb[0].mxu0
        %2382 = vmatprep.mubr.bf16.mxu0 0
        %2383 = vmatmul.mubr.bf16.gmra.mrb[0].mxu0 %v1355
        %v2384 = vpop.f32.mrb[0].mxu0
        %v2385 = vadd.f32 %v2288, %v2384
        %v2386 = vpop.f32.mrb[0].mxu0
        %v2387 = vpop.f32.mrb[0].mxu0
        %v2388 = vadd.f32 %v2291, %v2387
        %v2389 = vpop.f32.mrb[0].mxu0
        %2390 = vmatprep.mubr.bf16.mxu0 0
        %2391 = vmatmul.mubr.bf16.gmra.mrb[0].mxu0 %v1422
        %v2392 = vpop.f32.mrb[0].mxu0
        %v2393 = vadd.f32 %v2296, %v2392
        %v2394 = vpop.f32.mrb[0].mxu0
        %v2395 = vpop.f32.mrb[0].mxu0
        %v2396 = vadd.f32 %v2299, %v2395
        %v2397 = vpop.f32.mrb[0].mxu0
        %2398 = vdwg.mxu0
        %v2399 = vmax.f32 %v2337, 0.0
        %v2400 = vmax.f32 %v2340, 0.0
        %v2401 = vmax.f32 %v2345, 0.0
        %v2402 = vmax.f32 %v2348, 0.0
        %v2403 = vmax.f32 %v2353, 0.0
        %v2404 = vmax.f32 %v2356, 0.0
        %v2405 = vmax.f32 %v2361, 0.0
        %v2406 = vmax.f32 %v2364, 0.0
        %v2407 = vmax.f32 %v2369, 0.0
        %v2408 = vmax.f32 %v2372, 0.0
        %v2409 = vmax.f32 %v2377, 0.0
        %v2410 = vmax.f32 %v2380, 0.0
        %v2411 = vmax.f32 %v2385, 0.0
        %v2412 = vmax.f32 %v2388, 0.0
        %v2413 = vmax.f32 %v2393, 0.0
        %v2414 = vmax.f32 %v2396, 0.0
        %v2415 = vld [vmem:[%s3] sm:$0x1]
        %v2416 = vld [vmem:[%s324] sm:$0xff]
        %v2417 = vld [vmem:[%s324 + $0x8] sm:$0xff]
        %v2418 = vld [vmem:[%s324 + $0x10] sm:$0xff]
        %v2419 = vld [vmem:[%s324 + $0x18] sm:$0xff]
        %v2420 = vld [vmem:[%s324 + $0x20] sm:$0xff]
        %v2421 = vld [vmem:[%s324 + $0x28] sm:$0xff]
        %v2422 = vld [vmem:[%s324 + $0x30] sm:$0xff]
        %v2423 = vld [vmem:[%s324 + $0x38] sm:$0xff]
        %v2424 = vld [vmem:[%s324 + $0x40] sm:$0xff]
        %v2425 = vld [vmem:[%s324 + $0x48] sm:$0xff]
        %v2426 = vld [vmem:[%s324 + $0x50] sm:$0xff]
        %v2427 = vld [vmem:[%s324 + $0x58] sm:$0xff]
        %v2428 = vld [vmem:[%s324 + $0x60] sm:$0xff]
        %v2429 = vld [vmem:[%s324 + $0x68] sm:$0xff]
        %v2430 = vld [vmem:[%s324 + $0x70] sm:$0xff]
        %v2431 = vld [vmem:[%s324 + $0x78] sm:$0xff]
        %v2433 = vlaneseq
        %v2434 = vshrl.u32 %v2433, 7
        %v2435 = vsub.s32 0, %v2434
        %v2436 = vrot.slane %v2415, %v2435
        %2439 = vset.pattern.permute.xlu0 0
        %2440 = vperm.xlu0 %2439, %v2416
        %v2441 = vpop.permute.xlu0 %2440
        %2444 = vset.pattern.permute.xlu0 0
        %2445 = vperm.xlu0 %2444, %v2417
        %v2446 = vpop.permute.xlu0 %2445
        %2449 = vset.pattern.permute.xlu0 0
        %2450 = vperm.xlu0 %2449, %v2418
        %v2451 = vpop.permute.xlu0 %2450
        %2454 = vset.pattern.permute.xlu0 0
        %2455 = vperm.xlu0 %2454, %v2419
        %v2456 = vpop.permute.xlu0 %2455
        %2459 = vset.pattern.permute.xlu0 0
        %2460 = vperm.xlu0 %2459, %v2420
        %v2461 = vpop.permute.xlu0 %2460
        %2464 = vset.pattern.permute.xlu0 0
        %2465 = vperm.xlu0 %2464, %v2421
        %v2466 = vpop.permute.xlu0 %2465
        %2469 = vset.pattern.permute.xlu0 0
        %2470 = vperm.xlu0 %2469, %v2422
        %v2471 = vpop.permute.xlu0 %2470
        %2474 = vset.pattern.permute.xlu0 0
        %2475 = vperm.xlu0 %2474, %v2423
        %v2476 = vpop.permute.xlu0 %2475
        %2479 = vset.pattern.permute.xlu0 0
        %2480 = vperm.xlu0 %2479, %v2424
        %v2481 = vpop.permute.xlu0 %2480
        %2484 = vset.pattern.permute.xlu0 0
        %2485 = vperm.xlu0 %2484, %v2425
        %v2486 = vpop.permute.xlu0 %2485
        %2489 = vset.pattern.permute.xlu0 0
        %2490 = vperm.xlu0 %2489, %v2426
        %v2491 = vpop.permute.xlu0 %2490
        %2494 = vset.pattern.permute.xlu0 0
        %2495 = vperm.xlu0 %2494, %v2427
        %v2496 = vpop.permute.xlu0 %2495
        %2499 = vset.pattern.permute.xlu0 0
        %2500 = vperm.xlu0 %2499, %v2428
        %v2501 = vpop.permute.xlu0 %2500
        %2504 = vset.pattern.permute.xlu0 0
        %2505 = vperm.xlu0 %2504, %v2429
        %v2506 = vpop.permute.xlu0 %2505
        %2509 = vset.pattern.permute.xlu0 0
        %2510 = vperm.xlu0 %2509, %v2430
        %v2511 = vpop.permute.xlu0 %2510
        %2514 = vset.pattern.permute.xlu0 0
        %2515 = vperm.xlu0 %2514, %v2431
        %v2516 = vpop.permute.xlu0 %2515
        %v2518 = vmul.f32 %v2436, %v2441
        %v2519 = vmul.f32 %v2436, %v2446
        %v2520 = vmul.f32 %v2436, %v2451
        %v2521 = vmul.f32 %v2436, %v2456
        %v2522 = vmul.f32 %v2436, %v2461
        %v2523 = vmul.f32 %v2436, %v2466
        %v2524 = vmul.f32 %v2436, %v2471
        %v2525 = vmul.f32 %v2436, %v2476
        %v2526 = vmul.f32 %v2436, %v2481
        %v2527 = vmul.f32 %v2436, %v2486
        %v2528 = vmul.f32 %v2436, %v2491
        %v2529 = vmul.f32 %v2436, %v2496
        %v2530 = vmul.f32 %v2436, %v2501
        %v2531 = vmul.f32 %v2436, %v2506
        %v2532 = vmul.f32 %v2436, %v2511
        %v2533 = vmul.f32 %v2436, %v2516
        %v2534 = vadd.f32 %v2399, %v2518
        %v2535 = vadd.f32 %v2400, %v2519
        %v2536 = vadd.f32 %v2401, %v2520
        %v2537 = vadd.f32 %v2402, %v2521
        %v2538 = vadd.f32 %v2403, %v2522
        %v2539 = vadd.f32 %v2404, %v2523
        %v2540 = vadd.f32 %v2405, %v2524
        %v2541 = vadd.f32 %v2406, %v2525
        %v2542 = vadd.f32 %v2407, %v2526
        %v2543 = vadd.f32 %v2408, %v2527
        %v2544 = vadd.f32 %v2409, %v2528
        %v2545 = vadd.f32 %v2410, %v2529
        %v2546 = vadd.f32 %v2411, %v2530
        %v2547 = vadd.f32 %v2412, %v2531
        %v2548 = vadd.f32 %v2413, %v2532
        %v2549 = vadd.f32 %v2414, %v2533
        %v2550 = vld [vmem:[%s340] sm:$0xff]
        %v2551 = vld [vmem:[%s340 + $0x8] sm:$0xff]
        %v2552 = vld [vmem:[%s340 + $0x10] sm:$0xff]
        %v2553 = vld [vmem:[%s340 + $0x18] sm:$0xff]
        %v2554 = vld [vmem:[%s340 + $0x20] sm:$0xff]
        %v2555 = vld [vmem:[%s340 + $0x28] sm:$0xff]
        %v2556 = vld [vmem:[%s340 + $0x30] sm:$0xff]
        %v2557 = vld [vmem:[%s340 + $0x38] sm:$0xff]
        %v2558 = vld [vmem:[%s340 + $0x40] sm:$0xff]
        %v2559 = vld [vmem:[%s340 + $0x48] sm:$0xff]
        %v2560 = vld [vmem:[%s340 + $0x50] sm:$0xff]
        %v2561 = vld [vmem:[%s340 + $0x58] sm:$0xff]
        %v2562 = vld [vmem:[%s340 + $0x60] sm:$0xff]
        %v2563 = vld [vmem:[%s340 + $0x68] sm:$0xff]
        %v2564 = vld [vmem:[%s340 + $0x70] sm:$0xff]
        %v2565 = vld [vmem:[%s340 + $0x78] sm:$0xff]
        %2567 = vset.pattern.permute.xlu0 0
        %2568 = vperm.xlu0 %2567, %v2550
        %v2569 = vpop.permute.xlu0 %2568
        %2572 = vset.pattern.permute.xlu0 0
        %2573 = vperm.xlu0 %2572, %v2551
        %v2574 = vpop.permute.xlu0 %2573
        %2577 = vset.pattern.permute.xlu0 0
        %2578 = vperm.xlu0 %2577, %v2552
        %v2579 = vpop.permute.xlu0 %2578
        %2582 = vset.pattern.permute.xlu0 0
        %2583 = vperm.xlu0 %2582, %v2553
        %v2584 = vpop.permute.xlu0 %2583
        %2587 = vset.pattern.permute.xlu0 0
        %2588 = vperm.xlu0 %2587, %v2554
        %v2589 = vpop.permute.xlu0 %2588
        %2592 = vset.pattern.permute.xlu0 0
        %2593 = vperm.xlu0 %2592, %v2555
        %v2594 = vpop.permute.xlu0 %2593
        %2597 = vset.pattern.permute.xlu0 0
        %2598 = vperm.xlu0 %2597, %v2556
        %v2599 = vpop.permute.xlu0 %2598
        %2602 = vset.pattern.permute.xlu0 0
        %2603 = vperm.xlu0 %2602, %v2557
        %v2604 = vpop.permute.xlu0 %2603
        %2607 = vset.pattern.permute.xlu0 0
        %2608 = vperm.xlu0 %2607, %v2558
        %v2609 = vpop.permute.xlu0 %2608
        %2612 = vset.pattern.permute.xlu0 0
        %2613 = vperm.xlu0 %2612, %v2559
        %v2614 = vpop.permute.xlu0 %2613
        %2617 = vset.pattern.permute.xlu0 0
        %2618 = vperm.xlu0 %2617, %v2560
        %v2619 = vpop.permute.xlu0 %2618
        %2622 = vset.pattern.permute.xlu0 0
        %2623 = vperm.xlu0 %2622, %v2561
        %v2624 = vpop.permute.xlu0 %2623
        %2627 = vset.pattern.permute.xlu0 0
        %2628 = vperm.xlu0 %2627, %v2562
        %v2629 = vpop.permute.xlu0 %2628
        %2632 = vset.pattern.permute.xlu0 0
        %2633 = vperm.xlu0 %2632, %v2563
        %v2634 = vpop.permute.xlu0 %2633
        %2637 = vset.pattern.permute.xlu0 0
        %2638 = vperm.xlu0 %2637, %v2564
        %v2639 = vpop.permute.xlu0 %2638
        %2642 = vset.pattern.permute.xlu0 0
        %2643 = vperm.xlu0 %2642, %v2565
        %v2644 = vpop.permute.xlu0 %2643
        %v2646 = vmul.f32 %v2534, %v2569
        %v2647 = vmul.f32 %v2535, %v2574
        %v2648 = vmul.f32 %v2536, %v2579
        %v2649 = vmul.f32 %v2537, %v2584
        %v2650 = vmul.f32 %v2538, %v2589
        %v2651 = vmul.f32 %v2539, %v2594
        %v2652 = vmul.f32 %v2540, %v2599
        %v2653 = vmul.f32 %v2541, %v2604
        %v2654 = vmul.f32 %v2542, %v2609
        %v2655 = vmul.f32 %v2543, %v2614
        %v2656 = vmul.f32 %v2544, %v2619
        %v2657 = vmul.f32 %v2545, %v2624
        %v2658 = vmul.f32 %v2546, %v2629
        %v2659 = vmul.f32 %v2547, %v2634
        %v2660 = vmul.f32 %v2548, %v2639
        %v2661 = vmul.f32 %v2549, %v2644
        %v2662 = vpack.c.bf16 %v2647, %v2646
        %v2663 = vpack.c.bf16 %v2649, %v2648
        %v2664 = vpack.c.bf16 %v2651, %v2650
        %v2665 = vpack.c.bf16 %v2653, %v2652
        %v2666 = vpack.c.bf16 %v2655, %v2654
        %v2667 = vpack.c.bf16 %v2657, %v2656
        %v2668 = vpack.c.bf16 %v2659, %v2658
        %v2669 = vpack.c.bf16 %v2661, %v2660
        %v2678 = vunpack.c.l.b16 %v2662
        %v2679 = vunpack.c.h.b16 %v2662
        %v2680 = vunpack.c.l.b16 %v2663
        %v2681 = vunpack.c.h.b16 %v2663
        %v2682 = vunpack.c.l.b16 %v2664
        %v2683 = vunpack.c.h.b16 %v2664
        %v2684 = vunpack.c.l.b16 %v2665
        %v2685 = vunpack.c.h.b16 %v2665
        %v2686 = vunpack.c.l.b16 %v2666
        %v2687 = vunpack.c.h.b16 %v2666
        %v2688 = vunpack.c.l.b16 %v2667
        %v2689 = vunpack.c.h.b16 %v2667
        %v2690 = vunpack.c.l.b16 %v2668
        %v2691 = vunpack.c.h.b16 %v2668
        %v2692 = vunpack.c.l.b16 %v2669
        %v2693 = vunpack.c.h.b16 %v2669
        %v2694 = vpack.c.b16 %v2678, %v2678
        %v2695 = vpack.c.b16 %v2679, %v2679
        %v2696 = vpack.c.b16 %v2680, %v2680
        %v2697 = vpack.c.b16 %v2681, %v2681
        %v2698 = vpack.c.b16 %v2682, %v2682
        %v2699 = vpack.c.b16 %v2683, %v2683
        %v2700 = vpack.c.b16 %v2684, %v2684
        %v2701 = vpack.c.b16 %v2685, %v2685
        %v2702 = vpack.c.b16 %v2686, %v2686
        %v2703 = vpack.c.b16 %v2687, %v2687
        %v2704 = vpack.c.b16 %v2688, %v2688
        %v2705 = vpack.c.b16 %v2689, %v2689
        %v2706 = vpack.c.b16 %v2690, %v2690
        %v2707 = vpack.c.b16 %v2691, %v2691
        %v2708 = vpack.c.b16 %v2692, %v2692
        %v2709 = vpack.c.b16 %v2693, %v2693
        %2726 = vst [vmem:[%s355] sm:$0xf] %v2694
        %2727 = vst [vmem:[%s355 + $0x4] sm:$0xf] %v2695
        %2728 = vst [vmem:[%s355 + $0x8] sm:$0xf] %v2696
        %2729 = vst [vmem:[%s355 + $0xc] sm:$0xf] %v2697
        %2730 = vst [vmem:[%s355 + $0x10] sm:$0xf] %v2698
        %2731 = vst [vmem:[%s355 + $0x14] sm:$0xf] %v2699
        %2732 = vst [vmem:[%s355 + $0x18] sm:$0xf] %v2700
        %2733 = vst [vmem:[%s355 + $0x1c] sm:$0xf] %v2701
        %2734 = vst [vmem:[%s355 + $0x20] sm:$0xf] %v2702
        %2735 = vst [vmem:[%s355 + $0x24] sm:$0xf] %v2703
        %2736 = vst [vmem:[%s355 + $0x28] sm:$0xf] %v2704
        %2737 = vst [vmem:[%s355 + $0x2c] sm:$0xf] %v2705
        %2738 = vst [vmem:[%s355 + $0x30] sm:$0xf] %v2706
        %2739 = vst [vmem:[%s355 + $0x34] sm:$0xf] %v2707
        %2740 = vst [vmem:[%s355 + $0x38] sm:$0xf] %v2708
        %2741 = vst [vmem:[%s355 + $0x3c] sm:$0xf] %v2709
      $region44: #{noise_net_forward.5} parent=39 // pred_fallthru
        _
      // Predicated region
      $region121: #{noise_net_forward.5} parent=39 // pred_check
        %p2742 = pneg %p361
      $region122: #{noise_net_forward.5} parent=39 // pred_check_branch
        %2744 = sbr.rel (%p2742) target = $region124
      $region123: #{noise_net_forward.5} parent=39 // pred_region
        %2745 = vst [vmem:[%s355] sm:$0xf] 0
        %2746 = vst [vmem:[%s355 + $0x4] sm:$0xf] 0
        %2747 = vst [vmem:[%s355 + $0x8] sm:$0xf] 0
        %2748 = vst [vmem:[%s355 + $0xc] sm:$0xf] 0
        %2749 = vst [vmem:[%s355 + $0x10] sm:$0xf] 0
        %2750 = vst [vmem:[%s355 + $0x14] sm:$0xf] 0
        %2751 = vst [vmem:[%s355 + $0x18] sm:$0xf] 0
        %2752 = vst [vmem:[%s355 + $0x1c] sm:$0xf] 0
        %2753 = vst [vmem:[%s355 + $0x20] sm:$0xf] 0
        %2754 = vst [vmem:[%s355 + $0x24] sm:$0xf] 0
        %2755 = vst [vmem:[%s355 + $0x28] sm:$0xf] 0
        %2756 = vst [vmem:[%s355 + $0x2c] sm:$0xf] 0
        %2757 = vst [vmem:[%s355 + $0x30] sm:$0xf] 0
        %2758 = vst [vmem:[%s355 + $0x34] sm:$0xf] 0
        %2759 = vst [vmem:[%s355 + $0x38] sm:$0xf] 0
        %2760 = vst [vmem:[%s355 + $0x3c] sm:$0xf] 0
      $region124: #{noise_net_forward.5} parent=39 // pred_fallthru
        _
      %s2761 = smul.u32 16, %s22
      %p2762 = scmp.lt.s32.totalorder %s21, 1
      %s2763 = scalar_select %p2762, %s21, 1
      %p2764 = scmp.lt.s32.totalorder %s2761, 79
      %s2765 = scalar_select %p2764, %s2761, 79
      %s2766 = smul.addr %s2763, 80
      %s2767 = sadd.s32 %s2765, %s2766
      %s2768 = smul.addr %s2767, 4
      %s2769 = scalar_lea.vmem %s6, %s2768
      // Predicated region
      $region125: #{noise_net_forward.5} parent=39 // pred_check
        %p2770 = pneg %p186
      $region126: #{noise_net_forward.5} parent=39 // pred_check_branch
        %2772 = sbr.rel (%p2770) target = $region128
      $region127: #{noise_net_forward.5} parent=39 // pred_region
        %s2773 = smul.u32 16, %s22
      $region128: #{noise_net_forward.5} parent=39 // pred_fallthru
        _
    $region40: #{noise_net_forward.5} parent=5 // pred_fallthru
      _
    %p2774 = scmp.le.s32.totalorder 2, %s12
    // Predicated region
    $region129: #{noise_net_forward.5} parent=5 // pred_check
      %p2775 = pneg %p2774
    $region130: #{noise_net_forward.5} parent=5 // pred_check_branch
      %2777 = sbr.rel (%p2775) target = $region132
    $region131: #{noise_net_forward.5} parent=5 // pred_region
      %s2778 = ssub.s32 %s12, 2
      // Predicated region
      $region133: #{noise_net_forward.5} parent=131 // pred_check
        %p2779 = pneg %p192
      $region134: #{noise_net_forward.5} parent=131 // pred_check_branch
        %2781 = sbr.rel (%p2779) target = $region136
      $region135: #{noise_net_forward.5} parent=131 // pred_region
        %s2782 = smul.u32 16, %s24
        %p2783 = scmp.lt.s32.totalorder %s23, 1
        %s2784 = scalar_select %p2783, %s23, 1
        %p2785 = scmp.lt.s32.totalorder %s2782, 79
        %s2786 = scalar_select %p2785, %s2782, 79
        %s2787 = smul.addr %s2784, 80
        %s2788 = sadd.s32 %s2786, %s2787
        %s2789 = smul.addr %s2788, 4
        %s2790 = scalar_lea.vmem %s6, %s2789
      $region136: #{noise_net_forward.5} parent=131 // pred_fallthru
        _
    $region132: #{noise_net_forward.5} parent=5 // pred_fallthru
      _
  $region6: #{noise_net_forward.5} parent=0 // loop_footer
    %s16 = sadd.s32 1, %s12
  $region7: #{noise_net_forward.5} parent=0 // loop_footer_branch
    %11 = sbr.rel target = $region3
  $region8: #{noise_net_forward.5} parent=0 // loop_exit
    _
  %2791 = vsyncmov [#allocation3]
  %s2792 = vpop.sfrf %2791
  %p2793 = scmp.eq.s32.totalorder %s2792, 0
  %p2794 = pneg %p2793
  %2796 = shalt.err (%p2794)
  %s2797 = scalar_lea.sflag [#allocation3], 1
  %2798 = vsyncmov %s2797
  %s2799 = vpop.sfrf %2798
  %p2800 = scmp.eq.s32.totalorder %s2799, 0
  %p2801 = pneg %p2800
  %2803 = shalt.err (%p2801)

// kernel: noise_net_forward.7
$region0: #{noise_net_forward.7}
  #allocation0 [shape = 'u32[]', space=smem, size = 0x4, offset = 0x4, fixed_abs, tag = 'smem constant byte address 0x4 - core index']
  #allocation1 [shape = 'u32[144,128]{1,0:T(1,128)}', space=vmem, size = 0x12000, scoped, tag = 'internal scratch']
  #allocation2 [shape = 'bf16[2,192,128]{2,1,0:T(16,128)(2,1)}', space=vmem, size = 0x18000, scoped, tag = 'scratch operand']
  #allocation3 [shape = 's32[2]{0}', space=sflag, size = 0x8, scoped, tag = 'scratch operand']
  #allocation4 [shape = 's32[]', space=sflag, size = 0x4, offset = 0, fixed_abs, tag = 'sflag constant byte address 0x0 - dummy sync flag']
  #allocation5 [shape = 's32[]', space=sflag, size = 0x4, offset = 0, fixed_abs, tag = 'sflag constant byte address 0x0 - dummy sync flag']
  %s0 = inlined_call_operand.vmem [shape: bf16[2,640,128], index: 0, kind: input, shape index: {}]
  %s1 = inlined_call_operand.vmem [shape: bf16[1152,4], index: 1, kind: input, shape index: {}]
  %s2 = inlined_call_operand.vmem [shape: f32[1,4], index: 2, kind: input, shape index: {}]
  %s3 = inlined_call_operand.vmem [shape: f32[2,384,4], index: 3, kind: input, shape index: {}]
  %s4 = inlined_call_operand.vmem [shape: f32[2,384,4], index: 4, kind: output, shape index: {}]
  %s5 = sld [smem:[#allocation0]]
  $region121: #{noise_net_forward.7} parent=0
    _
  %s7 = ssub.s32 1, %s5
  %s8 = scalar_select 0, %s7, %s5
  loop: start=0, step=1, limit=8
  $region2: #{noise_net_forward.7} parent=0 // loop_pre_header
    _
  $region3: #{noise_net_forward.7} parent=0 // loop_header
    %s10 = sphi 0, %s14
    %p11 = scmp.ge.s32.totalorder %s10, 8
    %s17 = sphi 0, %s29
    %s18 = sphi 0, %s25
    %s19 = sphi 0, %s17
    %s20 = sphi 0, %s18
    %s21 = sphi 0, %s19
    %s22 = sphi 0, %s20
    %s30 = sphi 0, %s30
    %s32 = sphi 0, %s30
    %s33 = sphi 0, %s32
    %s47 = sphi 0, %s33
    %s51 = sphi 0, %s51
    %s53 = sphi 0, %s51
    %s54 = sphi 0, %s53
    %s68 = sphi 0, %s54
    %s76 = sphi 0, %s78
    %s79 = sphi 0, %s76
    %s80 = sphi 0, %s79
    %s96 = sphi 0, %s80
    %s104 = sphi 0, %s106
    %s107 = sphi 0, %s104
    %s108 = sphi 0, %s107
    %s124 = sphi 0, %s108
  $region4: #{noise_net_forward.7} parent=0 // loop_header_branch
    %13 = sbr.rel (%p11) target = $region8
  $region5: #{noise_net_forward.7} parent=0 // loop_body
    %s15 = ssub.s32 %s10, 1
    %s16 = ssub.s32 %s10, 2
    %s23 = sadd.s32 1, %s18
    %p24 = scmp.ge.s32.totalorder %s23, 3
    %s25 = scalar_select %p24, 0, %s23
    %s26 = sadd.s32 1, %s17
    %s27 = scalar_select %p24, %s26, %s17
    %p28 = scmp.ge.s32.totalorder %s27, 2
    %s29 = scalar_select %p28, 0, %s27
    %s31 = sadd.s32 %s30, 1
    %p34 = scmp.eq.s32.totalorder %s10, 5
    %p35 = scmp.ne.s32.totalorder %s30, %s32
    %p36 = scmp.eq.s32.totalorder %s10, 0
    %p37 = por %p35, %p36
    %p38 = scmp.ne.s32.totalorder %s30, %s32
    %p39 = scmp.eq.s32.totalorder %s15, 5
    %p40 = por %p38, %p39
    %p41 = scmp.ne.s32.totalorder %s32, %s33
    %p42 = scmp.eq.s32.totalorder %s15, 0
    %p43 = por %p41, %p42
    %p44 = scmp.ne.s32.totalorder %s32, %s33
    %p45 = scmp.eq.s32.totalorder %s16, 5
    %p46 = por %p44, %p45
    %p48 = scmp.ne.s32.totalorder %s33, %s47
    %p49 = scmp.eq.s32.totalorder %s16, 0
    %p50 = por %p48, %p49
    %s52 = sadd.s32 %s51, 1
    %p55 = scmp.eq.s32.totalorder %s10, 5
    %p56 = scmp.ne.s32.totalorder %s51, %s53
    %p57 = scmp.eq.s32.totalorder %s10, 0
    %p58 = por %p56, %p57
    %p59 = scmp.ne.s32.totalorder %s51, %s53
    %p60 = scmp.eq.s32.totalorder %s15, 5
    %p61 = por %p59, %p60
    %p62 = scmp.ne.s32.totalorder %s53, %s54
    %p63 = scmp.eq.s32.totalorder %s15, 0
    %p64 = por %p62, %p63
    %p65 = scmp.ne.s32.totalorder %s53, %s54
    %p66 = scmp.eq.s32.totalorder %s16, 5
    %p67 = por %p65, %p66
    %p69 = scmp.ne.s32.totalorder %s54, %s68
    %p70 = scmp.eq.s32.totalorder %s16, 0
    %p71 = por %p69, %p70
    %s72 = ssub.s32 %s17, %s29
    %s73 = ssub.s32 %s18, %s25
    %s74 = sor.u32 %s72, %s73
    %p75 = scmp.eq.s32.totalorder %s74, 0
    %s77 = sadd.s32 %s76, 1
    %s78 = scalar_select %p75, %s76, %s77
    %p81 = pneg %p75
    %p82 = scmp.eq.s32.totalorder %s10, 5
    %p83 = por %p81, %p82
    %p84 = scmp.ne.s32.totalorder %s76, %s79
    %p85 = scmp.eq.s32.totalorder %s10, 0
    %p86 = por %p84, %p85
    %p87 = scmp.ne.s32.totalorder %s76, %s79
    %p88 = scmp.eq.s32.totalorder %s15, 5
    %p89 = por %p87, %p88
    %p90 = scmp.ne.s32.totalorder %s79, %s80
    %p91 = scmp.eq.s32.totalorder %s15, 0
    %p92 = por %p90, %p91
    %p93 = scmp.ne.s32.totalorder %s79, %s80
    %p94 = scmp.eq.s32.totalorder %s16, 5
    %p95 = por %p93, %p94
    %p97 = scmp.ne.s32.totalorder %s80, %s96
    %p98 = scmp.eq.s32.totalorder %s16, 0
    %p99 = por %p97, %p98
    %s100 = ssub.s32 %s17, %s29
    %s101 = ssub.s32 %s18, %s25
    %s102 = sor.u32 %s100, %s101
    %p103 = scmp.eq.s32.totalorder %s102, 0
    %s105 = sadd.s32 %s104, 1
    %s106 = scalar_select %p103, %s104, %s105
    %p109 = pneg %p103
    %p110 = scmp.eq.s32.totalorder %s10, 5
    %p111 = por %p109, %p110
    %p112 = scmp.ne.s32.totalorder %s104, %s107
    %p113 = scmp.eq.s32.totalorder %s10, 0
    %p114 = por %p112, %p113
    %p115 = scmp.ne.s32.totalorder %s104, %s107
    %p116 = scmp.eq.s32.totalorder %s15, 5
    %p117 = por %p115, %p116
    %p118 = scmp.ne.s32.totalorder %s107, %s108
    %p119 = scmp.eq.s32.totalorder %s15, 0
    %p120 = por %p118, %p119
    %p121 = scmp.ne.s32.totalorder %s107, %s108
    %p122 = scmp.eq.s32.totalorder %s16, 5
    %p123 = por %p121, %p122
    %p125 = scmp.ne.s32.totalorder %s108, %s124
    %p126 = scmp.eq.s32.totalorder %s16, 0
    %p127 = por %p125, %p126
    %p128 = scmp.le.s32.totalorder 1, %s10
    %p129 = scmp.lt.s32.totalorder %s10, 7
    %p130 = pnand %p128, %p129
    %p131 = pneg %p130
    // Predicated region
    $region9: #{noise_net_forward.7} parent=5 // pred_check
      _
    $region10: #{noise_net_forward.7} parent=5 // pred_check_branch
      %133 = sbr.rel (%p130) target = $region12
    $region11: #{noise_net_forward.7} parent=5 // pred_region
      %s134 = ssub.s32 %s10, 1
      // Predicated region
      $region13: #{noise_net_forward.7} parent=11 // pred_check
        %p135 = pneg %p43
      $region14: #{noise_net_forward.7} parent=11 // pred_check_branch
        %137 = sbr.rel (%p135) target = $region16
      $region15: #{noise_net_forward.7} parent=11 // pred_region
        _
      $region16: #{noise_net_forward.7} parent=11 // pred_fallthru
        _
      // Predicated region
      $region17: #{noise_net_forward.7} parent=11 // pred_check
        %p138 = pneg %p64
      $region18: #{noise_net_forward.7} parent=11 // pred_check_branch
        %140 = sbr.rel (%p138) target = $region20
      $region19: #{noise_net_forward.7} parent=11 // pred_region
        _
      $region20: #{noise_net_forward.7} parent=11 // pred_fallthru
        _
    $region12: #{noise_net_forward.7} parent=5 // pred_fallthru
      _
    %p141 = scmp.lt.s32.totalorder %s10, 6
    // Predicated region
    $region21: #{noise_net_forward.7} parent=5 // pred_check
      %p142 = pneg %p141
    $region22: #{noise_net_forward.7} parent=5 // pred_check_branch
      %144 = sbr.rel (%p142) target = $region24
    $region23: #{noise_net_forward.7} parent=5 // pred_region
      // Predicated region
      $region25: #{noise_net_forward.7} parent=23 // pred_check
        %p145 = pneg %p86
      $region26: #{noise_net_forward.7} parent=23 // pred_check_branch
        %147 = sbr.rel (%p145) target = $region28
      $region27: #{noise_net_forward.7} parent=23 // pred_region
        %s148 = smul.u32 16, %s18
        %p149 = scmp.lt.s32.totalorder %s17, 1
        %s150 = scalar_select %p149, %s17, 1
        %p151 = scmp.lt.s32.totalorder %s148, 47
        %s152 = scalar_select %p151, %s148, 47
        %s153 = smul.addr %s150, 48
        %s154 = sadd.s32 %s152, %s153
        %s155 = smul.addr %s154, 8
        %s156 = scalar_lea.vmem %s3, %s155
        %s157 = smul.u32 16, %s18
      $region28: #{noise_net_forward.7} parent=23 // pred_fallthru
        _
    $region24: #{noise_net_forward.7} parent=5 // pred_fallthru
      _
    %p158 = scmp.le.s32.totalorder 1, %s10
    %p159 = scmp.lt.s32.totalorder %s10, 7
    %p160 = pnand %p158, %p159
    %p161 = pneg %p160
    // Predicated region
    $region29: #{noise_net_forward.7} parent=5 // pred_check
      _
    $region30: #{noise_net_forward.7} parent=5 // pred_check_branch
      %163 = sbr.rel (%p160) target = $region32
    $region31: #{noise_net_forward.7} parent=5 // pred_region
      %s164 = ssub.s32 %s10, 1
      %p165 = pneg %p43
      %p166 = pneg %p40
      %p167 = pneg %p64
      %p168 = pneg %p61
      %s169 = smul.u32 16, %s20
      %p170 = scmp.lt.s32.totalorder %s19, 1
      %s171 = scalar_select %p170, %s19, 1
      %p172 = scmp.lt.s32.totalorder %s169, 47
      %s173 = scalar_select %p172, %s169, 47
      %s174 = smul.addr %s171, 48
      %s175 = sadd.s32 %s173, %s174
      %s176 = smul.addr %s175, 8
      %s177 = scalar_lea.vmem %s3, %s176
      %p178 = pneg %p92
      %p179 = pneg %p89
      %p180 = pneg %p120
      %p181 = pneg %p117
      %s182 = smul.u32 16, %s20
      %p183 = scmp.lt.s32.totalorder %s19, 1
      %s184 = scalar_select %p183, %s19, 1
      %p185 = scmp.lt.s32.totalorder %s182, 47
      %s186 = scalar_select %p185, %s182, 47
      %s187 = smul.addr %s184, 48
      %s188 = sadd.s32 %s186, %s187
      %s189 = smul.addr %s188, 8
      %s190 = scalar_lea.vmem %s4, %s189
      %s191 = smul.u32 16, %s20
      %p192 = scmp.lt.s32.totalorder %s19, 1
      %s193 = scalar_select %p192, %s19, 1
      %p194 = scmp.lt.s32.totalorder %s191, 47
      %s195 = scalar_select %p194, %s191, 47
      %s196 = smul.addr %s193, 48
      %s197 = sadd.s32 %s195, %s196
      %s198 = smul.addr %s197, 8
      %s199 = scalar_lea.vmem %s3, %s198
      %s200 = smul.u32 16, %s20
      %s201 = smul.u32 16, %s20
      %p202 = scmp.lt.s32.totalorder %s19, 1
      %s203 = scalar_select %p202, %s19, 1
      %p204 = scmp.lt.s32.totalorder %s201, 47
      %s205 = scalar_select %p204, %s201, 47
      %s206 = smul.addr %s203, 48
      %s207 = sadd.s32 %s205, %s206
      %s208 = smul.addr %s207, 8
      %s209 = scalar_lea.vmem %s4, %s208
      %s210 = smul.u32 16, %s20
      %p212 = scmp.lt.s32.totalorder %s20, 0
      %s213 = ssub.s32 0, %s20
      %s214 = scalar_select %p212, %s213, %s20
      %s215 = sand.u32 %s214, 1
      %s216 = ssub.s32 0, %s215
      %s217 = scalar_select %p212, %s216, %s215
      %p218 = scmp.eq.s32.totalorder %s20, 0
      // Predicated region
      $region33: #{noise_net_forward.7} parent=31 // pred_check
        %p219 = pneg %p218
      $region34: #{noise_net_forward.7} parent=31 // pred_check_branch
        %221 = sbr.rel (%p219) target = $region36
      $region35: #{noise_net_forward.7} parent=31 // pred_region
        %s222 = smul.u32 %s20, 128
        %s223 = sadd.s32 %s222, 96
        %s224 = sshra.s32 %s223, 3
        %s225 = sand.u32 %s223, 7
        %s226 = smul.u32 %s19, 80
        %s227 = sadd.s32 %s224, %s226
        %s228 = smul.addr %s227, 4
        %s229 = scalar_lea.vmem %s0, %s228
        %s230 = smul.u32 %s217, 12
        %s231 = smul.addr %s230, 8
        %s232 = scalar_lea.vmem [#allocation2], %s231
        %s233 = scalar_lea.sflag [#allocation3], %s217
        %p235 = scmp.lt.u32.totalorder 96, 8
        %p236 = pneg %p235
        // Predicated region
        $region37: #{noise_net_forward.7} parent=35 // pred_check
          _
        $region38: #{noise_net_forward.7} parent=35 // pred_check_branch
          %238 = sbr.rel (%p235) target = $region40
        $region39: #{noise_net_forward.7} parent=35 // pred_region
          %s253 = sand.u32 96, 7
          %p254 = scmp.eq.s32.totalorder %s253, 0
          // Predicated region
          $region52: #{noise_net_forward.7} parent=39 // pred_check
            %p255 = pneg %p254
          $region53: #{noise_net_forward.7} parent=39 // pred_check_branch
            %257 = sbr.rel (%p255) target = $region55
          $region54: #{noise_net_forward.7} parent=39 // pred_region
            loop: start=0, step=1, limit=1
            $region56: #{noise_net_forward.7} parent=54 // loop_pre_header
              _
            $region57: #{noise_net_forward.7} parent=54 // loop_header
              %s259 = sphi 0, %s263
              %p260 = scmp.ge.s32.totalorder %s259, 1
              %s264 = sphi %s229, %s229
              %s265 = sphi %s232, %s232
            $region58: #{noise_net_forward.7} parent=54 // loop_header_branch
              %262 = sbr.rel (%p260) target = $region62
            $region59: #{noise_net_forward.7} parent=54 // loop_body
              %v266 = vld [vmem:[%s264] sm:$0xff]
              %267 = vst [vmem:[%s265] sm:$0xff] %v266
              %v268 = vld [vmem:[%s264 + $0x8] sm:$0xff]
              %269 = vst [vmem:[%s265 + $0x8] sm:$0xff] %v268
              %v270 = vld [vmem:[%s264 + $0x10] sm:$0xff]
              %271 = vst [vmem:[%s265 + $0x10] sm:$0xff] %v270
              %v272 = vld [vmem:[%s264 + $0x18] sm:$0xff]
              %273 = vst [vmem:[%s265 + $0x18] sm:$0xff] %v272
              %v274 = vld [vmem:[%s264 + $0x20] sm:$0xff]
              %275 = vst [vmem:[%s265 + $0x20] sm:$0xff] %v274
              %v276 = vld [vmem:[%s264 + $0x28] sm:$0xff]
              %277 = vst [vmem:[%s265 + $0x28] sm:$0xff] %v276
              %v278 = vld [vmem:[%s264 + $0x30] sm:$0xff]
              %279 = vst [vmem:[%s265 + $0x30] sm:$0xff] %v278
              %v280 = vld [vmem:[%s264 + $0x38] sm:$0xff]
              %281 = vst [vmem:[%s265 + $0x38] sm:$0xff] %v280
              %v282 = vld [vmem:[%s264 + $0x40] sm:$0xff]
              %283 = vst [vmem:[%s265 + $0x40] sm:$0xff] %v282
              %v284 = vld [vmem:[%s264 + $0x48] sm:$0xff]
              %285 = vst [vmem:[%s265 + $0x48] sm:$0xff] %v284
              %v286 = vld [vmem:[%s264 + $0x50] sm:$0xff]
              %287 = vst [vmem:[%s265 + $0x50] sm:$0xff] %v286
              %v288 = vld [vmem:[%s264 + $0x58] sm:$0xff]
              %289 = vst [vmem:[%s265 + $0x58] sm:$0xff] %v288
            $region60: #{noise_net_forward.7} parent=54 // loop_footer
              %s263 = sadd.s32 1, %s259
            $region61: #{noise_net_forward.7} parent=54 // loop_footer_branch
              %258 = sbr.rel target = $region57
            $region62: #{noise_net_forward.7} parent=54 // loop_exit
              _
          $region55: #{noise_net_forward.7} parent=39 // pred_fallthru
            _
          %p290 = pneg %p254
          // Predicated region
          $region63: #{noise_net_forward.7} parent=39 // pred_check
            _
          $region64: #{noise_net_forward.7} parent=39 // pred_check_branch
            %292 = sbr.rel (%p254) target = $region66
          $region65: #{noise_net_forward.7} parent=39 // pred_region
            %s293 = sand.u32 96, 7
          $region66: #{noise_net_forward.7} parent=39 // pred_fallthru
            _
        $region40: #{noise_net_forward.7} parent=35 // pred_fallthru
          _
        // Predicated region
        $region41: #{noise_net_forward.7} parent=35 // pred_check
          %p239 = pneg %p235
        $region42: #{noise_net_forward.7} parent=35 // pred_check_branch
          %241 = sbr.rel (%p239) target = $region44
        $region43: #{noise_net_forward.7} parent=35 // pred_region
          %s242 = sshllo.u32 0, 96
          loop: start=0, step=1, limit=1
          $region45: #{noise_net_forward.7} parent=43 // loop_pre_header
            _
          $region46: #{noise_net_forward.7} parent=43 // loop_header
            %s244 = sphi 0, %s248
            %p245 = scmp.ge.s32.totalorder %s244, 1
            %s249 = sphi %s229, %s229
            %s250 = sphi %s232, %s232
          $region47: #{noise_net_forward.7} parent=43 // loop_header_branch
            %247 = sbr.rel (%p245) target = $region51
          $region48: #{noise_net_forward.7} parent=43 // loop_body
            %v251 = vld [vmem:[%s249] sm:%s242]
            %252 = vst [vmem:[%s250] sm:%s242] %v251
          $region49: #{noise_net_forward.7} parent=43 // loop_footer
            %s248 = sadd.s32 1, %s244
          $region50: #{noise_net_forward.7} parent=43 // loop_footer_branch
            %243 = sbr.rel target = $region46
          $region51: #{noise_net_forward.7} parent=43 // loop_exit
            _
        $region44: #{noise_net_forward.7} parent=35 // pred_fallthru
          _
        // Predicated region
        $region67: #{noise_net_forward.7} parent=35 // pred_check
          _
        $region68: #{noise_net_forward.7} parent=35 // pred_check_branch
          %296 = sbr.rel (0) target = $region70
        $region69: #{noise_net_forward.7} parent=35 // pred_region
          %297 = vsyncadd %s233, 1536
        $region70: #{noise_net_forward.7} parent=35 // pred_fallthru
          _
      $region36: #{noise_net_forward.7} parent=31 // pred_fallthru
        _
      %s298 = smul.u32 %s217, 12
      %s299 = smul.addr %s298, 8
      %s300 = scalar_lea.vmem [#allocation2], %s299
      %s301 = scalar_lea.sflag [#allocation3], %s217
      %s302 = smul.u32 4, 24
      %s303 = smul.u32 %s302, 1
      %s304 = sshll.u32 %s303, 4
      %305 = dma.done %s301, %s304
      %s306 = sadd.s32 %s20, 1
      %p307 = scmp.lt.s32.totalorder %s306, 3
      // Predicated region
      $region71: #{noise_net_forward.7} parent=31 // pred_check
        %p308 = pneg %p307
      $region72: #{noise_net_forward.7} parent=31 // pred_check_branch
        %310 = sbr.rel (%p308) target = $region74
      $region73: #{noise_net_forward.7} parent=31 // pred_region
        %s311 = ssub.s32 1, %s217
        %s312 = smul.u32 %s306, 128
        %s313 = sadd.s32 %s312, 96
        %s314 = sshra.s32 %s313, 3
        %s315 = sand.u32 %s313, 7
        %s316 = smul.u32 %s19, 80
        %s317 = sadd.s32 %s314, %s316
        %s318 = smul.addr %s317, 4
        %s319 = scalar_lea.vmem %s0, %s318
        %s320 = smul.u32 %s311, 12
        %s321 = smul.addr %s320, 8
        %s322 = scalar_lea.vmem [#allocation2], %s321
        %s323 = scalar_lea.sflag [#allocation3], %s311
        %p325 = scmp.lt.u32.totalorder 96, 8
        %p326 = pneg %p325
        // Predicated region
        $region75: #{noise_net_forward.7} parent=73 // pred_check
          _
        $region76: #{noise_net_forward.7} parent=73 // pred_check_branch
          %328 = sbr.rel (%p325) target = $region78
        $region77: #{noise_net_forward.7} parent=73 // pred_region
          %s343 = sand.u32 96, 7
          %p344 = scmp.eq.s32.totalorder %s343, 0
          // Predicated region
          $region90: #{noise_net_forward.7} parent=77 // pred_check
            %p345 = pneg %p344
          $region91: #{noise_net_forward.7} parent=77 // pred_check_branch
            %347 = sbr.rel (%p345) target = $region93
          $region92: #{noise_net_forward.7} parent=77 // pred_region
            loop: start=0, step=1, limit=1
            $region94: #{noise_net_forward.7} parent=92 // loop_pre_header
              _
            $region95: #{noise_net_forward.7} parent=92 // loop_header
              %s349 = sphi 0, %s353
              %p350 = scmp.ge.s32.totalorder %s349, 1
              %s354 = sphi %s319, %s319
              %s355 = sphi %s322, %s322
            $region96: #{noise_net_forward.7} parent=92 // loop_header_branch
              %352 = sbr.rel (%p350) target = $region100
            $region97: #{noise_net_forward.7} parent=92 // loop_body
              %v356 = vld [vmem:[%s354] sm:$0xff]
              %357 = vst [vmem:[%s355] sm:$0xff] %v356
              %v358 = vld [vmem:[%s354 + $0x8] sm:$0xff]
              %359 = vst [vmem:[%s355 + $0x8] sm:$0xff] %v358
              %v360 = vld [vmem:[%s354 + $0x10] sm:$0xff]
              %361 = vst [vmem:[%s355 + $0x10] sm:$0xff] %v360
              %v362 = vld [vmem:[%s354 + $0x18] sm:$0xff]
              %363 = vst [vmem:[%s355 + $0x18] sm:$0xff] %v362
              %v364 = vld [vmem:[%s354 + $0x20] sm:$0xff]
              %365 = vst [vmem:[%s355 + $0x20] sm:$0xff] %v364
              %v366 = vld [vmem:[%s354 + $0x28] sm:$0xff]
              %367 = vst [vmem:[%s355 + $0x28] sm:$0xff] %v366
              %v368 = vld [vmem:[%s354 + $0x30] sm:$0xff]
              %369 = vst [vmem:[%s355 + $0x30] sm:$0xff] %v368
              %v370 = vld [vmem:[%s354 + $0x38] sm:$0xff]
              %371 = vst [vmem:[%s355 + $0x38] sm:$0xff] %v370
              %v372 = vld [vmem:[%s354 + $0x40] sm:$0xff]
              %373 = vst [vmem:[%s355 + $0x40] sm:$0xff] %v372
              %v374 = vld [vmem:[%s354 + $0x48] sm:$0xff]
              %375 = vst [vmem:[%s355 + $0x48] sm:$0xff] %v374
              %v376 = vld [vmem:[%s354 + $0x50] sm:$0xff]
              %377 = vst [vmem:[%s355 + $0x50] sm:$0xff] %v376
              %v378 = vld [vmem:[%s354 + $0x58] sm:$0xff]
              %379 = vst [vmem:[%s355 + $0x58] sm:$0xff] %v378
            $region98: #{noise_net_forward.7} parent=92 // loop_footer
              %s353 = sadd.s32 1, %s349
            $region99: #{noise_net_forward.7} parent=92 // loop_footer_branch
              %348 = sbr.rel target = $region95
            $region100: #{noise_net_forward.7} parent=92 // loop_exit
              _
          $region93: #{noise_net_forward.7} parent=77 // pred_fallthru
            _
          %p380 = pneg %p344
          // Predicated region
          $region101: #{noise_net_forward.7} parent=77 // pred_check
            _
          $region102: #{noise_net_forward.7} parent=77 // pred_check_branch
            %382 = sbr.rel (%p344) target = $region104
          $region103: #{noise_net_forward.7} parent=77 // pred_region
            %s383 = sand.u32 96, 7
          $region104: #{noise_net_forward.7} parent=77 // pred_fallthru
            _
        $region78: #{noise_net_forward.7} parent=73 // pred_fallthru
          _
        // Predicated region
        $region79: #{noise_net_forward.7} parent=73 // pred_check
          %p329 = pneg %p325
        $region80: #{noise_net_forward.7} parent=73 // pred_check_branch
          %331 = sbr.rel (%p329) target = $region82
        $region81: #{noise_net_forward.7} parent=73 // pred_region
          %s332 = sshllo.u32 0, 96
          loop: start=0, step=1, limit=1
          $region83: #{noise_net_forward.7} parent=81 // loop_pre_header
            _
          $region84: #{noise_net_forward.7} parent=81 // loop_header
            %s334 = sphi 0, %s338
            %p335 = scmp.ge.s32.totalorder %s334, 1
            %s339 = sphi %s319, %s319
            %s340 = sphi %s322, %s322
          $region85: #{noise_net_forward.7} parent=81 // loop_header_branch
            %337 = sbr.rel (%p335) target = $region89
          $region86: #{noise_net_forward.7} parent=81 // loop_body
            %v341 = vld [vmem:[%s339] sm:%s332]
            %342 = vst [vmem:[%s340] sm:%s332] %v341
          $region87: #{noise_net_forward.7} parent=81 // loop_footer
            %s338 = sadd.s32 1, %s334
          $region88: #{noise_net_forward.7} parent=81 // loop_footer_branch
            %333 = sbr.rel target = $region84
          $region89: #{noise_net_forward.7} parent=81 // loop_exit
            _
        $region82: #{noise_net_forward.7} parent=73 // pred_fallthru
          _
        // Predicated region
        $region105: #{noise_net_forward.7} parent=73 // pred_check
          _
        $region106: #{noise_net_forward.7} parent=73 // pred_check_branch
          %386 = sbr.rel (0) target = $region108
        $region107: #{noise_net_forward.7} parent=73 // pred_region
          %387 = vsyncadd %s323, 1536
        $region108: #{noise_net_forward.7} parent=73 // pred_fallthru
          _
      $region74: #{noise_net_forward.7} parent=31 // pred_fallthru
        _
      %v388 = vld [vmem:[%s300] sm:$0xff]
      %v389 = vld [vmem:[%s300 + $0x8] sm:$0xff]
      %v390 = vld [vmem:[%s300 + $0x10] sm:$0xff]
      %v391 = vld [vmem:[%s300 + $0x18] sm:$0xff]
      %v392 = vld [vmem:[%s300 + $0x20] sm:$0xff]
      %v393 = vld [vmem:[%s300 + $0x28] sm:$0xff]
      %v394 = vld [vmem:[%s300 + $0x30] sm:$0xff]
      %v395 = vld [vmem:[%s300 + $0x38] sm:$0xff]
      %v396 = vld [vmem:[%s300 + $0x40] sm:$0xff]
      %v397 = vld [vmem:[%s300 + $0x48] sm:$0xff]
      %v398 = vld [vmem:[%s300 + $0x50] sm:$0xff]
      %v399 = vld [vmem:[%s300 + $0x58] sm:$0xff]
      %vm400 = vsmask.f32 7424
      %v402 = vshrl.u32 %v388, 16
      %v404 = vshll.u32 %v388, 16
      %v406 = vrot.slane %v404, 1
      %v407 = vor.u32 %v402, %v406
      %v409 = vshll.u32 %v389, 16
      %v411 = vrot.slane %v409, 1
      %v412 = vsel %vm400, %v407, %v411
      %v413 = vshrl.u32 %v389, 16
      %v415 = vor.u32 %v413, %v411
      %v417 = vshll.u32 %v390, 16
      %v419 = vrot.slane %v417, 1
      %v420 = vsel %vm400, %v415, %v419
      %v421 = vshrl.u32 %v390, 16
      %v423 = vor.u32 %v421, %v419
      %v425 = vshll.u32 %v391, 16
      %v427 = vrot.slane %v425, 1
      %v428 = vsel %vm400, %v423, %v427
      %v429 = vshrl.u32 %v391, 16
      %v431 = vor.u32 %v429, %v427
      %v433 = vshll.u32 %v392, 16
      %v435 = vrot.slane %v433, 1
      %v436 = vsel %vm400, %v431, %v435
      %v437 = vshrl.u32 %v392, 16
      %v439 = vor.u32 %v437, %v435
      %v441 = vshll.u32 %v393, 16
      %v443 = vrot.slane %v441, 1
      %v444 = vsel %vm400, %v439, %v443
      %v445 = vshrl.u32 %v393, 16
      %v447 = vor.u32 %v445, %v443
      %v449 = vshll.u32 %v394, 16
      %v451 = vrot.slane %v449, 1
      %v452 = vsel %vm400, %v447, %v451
      %v453 = vshrl.u32 %v394, 16
      %v455 = vor.u32 %v453, %v451
      %v457 = vshll.u32 %v395, 16
      %v459 = vrot.slane %v457, 1
      %v460 = vsel %vm400, %v455, %v459
      %v461 = vshrl.u32 %v395, 16
      %v463 = vor.u32 %v461, %v459
      %v465 = vshll.u32 %v396, 16
      %v467 = vrot.slane %v465, 1
      %v468 = vsel %vm400, %v463, %v467
      %v469 = vshrl.u32 %v396, 16
      %v471 = vor.u32 %v469, %v467
      %vm481 = vcmask 1046528
      %v482 = vrot.slane %v388, 1
      %v483 = vrot.slane %v389, 1
      %v484 = vsel %vm481, %v482, %v483
      %v485 = vrot.slane %v390, 1
      %v486 = vsel %vm481, %v483, %v485
      %v487 = vrot.slane %v391, 1
      %v488 = vsel %vm481, %v485, %v487
      %v489 = vrot.slane %v392, 1
      %v490 = vsel %vm481, %v487, %v489
      %v491 = vrot.slane %v393, 1
      %v492 = vsel %vm481, %v489, %v491
      %v493 = vrot.slane %v394, 1
      %v494 = vsel %vm481, %v491, %v493
      %v495 = vrot.slane %v395, 1
      %v496 = vsel %vm481, %v493, %v495
      %v497 = vrot.slane %v396, 1
      %v498 = vsel %vm481, %v495, %v497
      %vm500 = vcmask 1043456
      %v501 = vrot.slane %v389, 4
      %v502 = vrot.slane %v390, 4
      %v503 = vsel %vm500, %v501, %v502
      %v504 = vrot.slane %v391, 4
      %v505 = vsel %vm500, %v502, %v504
      %v506 = vrot.slane %v392, 4
      %v507 = vsel %vm500, %v504, %v506
      %v508 = vrot.slane %v393, 4
      %v509 = vsel %vm500, %v506, %v508
      %v510 = vrot.slane %v394, 4
      %v511 = vsel %vm500, %v508, %v510
      %v512 = vrot.slane %v395, 4
      %v513 = vsel %vm500, %v510, %v512
      %v514 = vrot.slane %v396, 4
      %v515 = vsel %vm500, %v512, %v514
      %v516 = vrot.slane %v397, 4
      %v517 = vsel %vm500, %v514, %v516
      %vm518 = vsmask.f32 3328
      %v519 = vrot.slane %v421, 4
      %v520 = vrot.slane %v417, 5
      %v521 = vor.u32 %v519, %v520
      %v522 = vrot.slane %v429, 4
      %v523 = vrot.slane %v425, 5
      %v524 = vor.u32 %v522, %v523
      %v525 = vsel %vm518, %v521, %v524
      %v526 = vrot.slane %v437, 4
      %v527 = vrot.slane %v433, 5
      %v528 = vor.u32 %v526, %v527
      %v529 = vsel %vm518, %v524, %v528
      %v530 = vrot.slane %v445, 4
      %v531 = vrot.slane %v441, 5
      %v532 = vor.u32 %v530, %v531
      %v533 = vsel %vm518, %v528, %v532
      %v534 = vrot.slane %v453, 4
      %v535 = vrot.slane %v449, 5
      %v536 = vor.u32 %v534, %v535
      %v537 = vsel %vm518, %v532, %v536
      %v538 = vrot.slane %v461, 4
      %v539 = vrot.slane %v457, 5
      %v540 = vor.u32 %v538, %v539
      %v541 = vsel %vm518, %v536, %v540
      %v542 = vrot.slane %v469, 4
      %v543 = vrot.slane %v465, 5
      %v544 = vor.u32 %v542, %v543
      %v545 = vsel %vm518, %v540, %v544
      %v547 = vshrl.u32 %v397, 16
      %v549 = vrot.slane %v547, 4
      %v550 = vshll.u32 %v397, 16
      %v552 = vrot.slane %v550, 5
      %v553 = vor.u32 %v549, %v552
      %v554 = vsel %vm518, %v544, %v553
      %vm556 = vcmask 1042432
      %v557 = vrot.slane %v390, 5
      %v558 = vrot.slane %v391, 5
      %v559 = vsel %vm556, %v557, %v558
      %v560 = vrot.slane %v392, 5
      %v561 = vsel %vm556, %v558, %v560
      %v562 = vrot.slane %v393, 5
      %v563 = vsel %vm556, %v560, %v562
      %v564 = vrot.slane %v394, 5
      %v565 = vsel %vm556, %v562, %v564
      %v566 = vrot.slane %v395, 5
      %v567 = vsel %vm556, %v564, %v566
      %v568 = vrot.slane %v396, 5
      %v569 = vsel %vm556, %v566, %v568
      %v570 = vrot.slane %v397, 5
      %v571 = vsel %vm556, %v568, %v570
      %v572 = vrot.slane %v398, 5
      %v573 = vsel %vm556, %v570, %v572
      %v574 = vrot.slane %v550, 1
      %v575 = vsel %vm400, %v471, %v574
      %v576 = vor.u32 %v547, %v574
      %v578 = vshll.u32 %v398, 16
      %v580 = vrot.slane %v578, 1
      %v581 = vsel %vm400, %v576, %v580
      %v582 = vshrl.u32 %v398, 16
      %v584 = vor.u32 %v582, %v580
      %v586 = vshll.u32 %v399, 16
      %v588 = vrot.slane %v586, 1
      %v589 = vsel %vm400, %v584, %v588
      %v590 = vshrl.u32 %v399, 16
      %v592 = vor.u32 %v590, %v588
      %v594 = vrot.slane %v397, 1
      %v595 = vsel %vm481, %v497, %v594
      %v596 = vrot.slane %v398, 1
      %v597 = vsel %vm481, %v594, %v596
      %v598 = vrot.slane %v399, 1
      %v599 = vsel %vm481, %v596, %v598
      %v600 = vld [vmem:[%s1] sm:$0xf]
      %v601 = vld [vmem:[%s1 + $0x4] sm:$0xf]
      %v602 = vld [vmem:[%s1 + $0x8] sm:$0xf]
      %v603 = vld [vmem:[%s1 + $0xc] sm:$0xf]
      %v604 = vld [vmem:[%s1 + $0x10] sm:$0xf]
      %v605 = vld [vmem:[%s1 + $0x14] sm:$0xf]
      %v606 = vld [vmem:[%s1 + $0x18] sm:$0xf]
      %v607 = vld [vmem:[%s1 + $0x1c] sm:$0xf]
      %v608 = vld [vmem:[%s1 + $0x20] sm:$0xf]
      %v609 = vld [vmem:[%s1 + $0x24] sm:$0xf]
      %v610 = vld [vmem:[%s1 + $0x28] sm:$0xf]
      %v611 = vld [vmem:[%s1 + $0x2c] sm:$0xf]
      %v612 = vld [vmem:[%s1 + $0x30] sm:$0xf]
      %v613 = vld [vmem:[%s1 + $0x34] sm:$0xf]
      %v614 = vld [vmem:[%s1 + $0x38] sm:$0xf]
      %v615 = vld [vmem:[%s1 + $0x3c] sm:$0xf]
      %v616 = vld [vmem:[%s1 + $0x40] sm:$0xf]
      %v617 = vld [vmem:[%s1 + $0x44] sm:$0xf]
      %v618 = vld [vmem:[%s1 + $0x48] sm:$0xf]
      %v619 = vld [vmem:[%s1 + $0x4c] sm:$0xf]
      %v620 = vld [vmem:[%s1 + $0x50] sm:$0xf]
      %v621 = vld [vmem:[%s1 + $0x54] sm:$0xf]
      %v622 = vld [vmem:[%s1 + $0x58] sm:$0xf]
      %v623 = vld [vmem:[%s1 + $0x5c] sm:$0xf]
      %v624 = vld [vmem:[%s1 + $0x60] sm:$0xf]
      %v625 = vld [vmem:[%s1 + $0x64] sm:$0xf]
      %v626 = vld [vmem:[%s1 + $0x68] sm:$0xf]
      %v627 = vld [vmem:[%s1 + $0x6c] sm:$0xf]
      %v628 = vld [vmem:[%s1 + $0x70] sm:$0xf]
      %v629 = vld [vmem:[%s1 + $0x74] sm:$0xf]
      %v630 = vld [vmem:[%s1 + $0x78] sm:$0xf]
      %v631 = vld [vmem:[%s1 + $0x7c] sm:$0xf]
      %v632 = vld [vmem:[%s1 + $0x80] sm:$0xf]
      %v633 = vld [vmem:[%s1 + $0x84] sm:$0xf]
      %v634 = vld [vmem:[%s1 + $0x88] sm:$0xf]
      %v635 = vld [vmem:[%s1 + $0x8c] sm:$0xf]
      %v636 = vld [vmem:[%s1 + $0x90] sm:$0xf]
      %v637 = vld [vmem:[%s1 + $0x94] sm:$0xf]
      %v638 = vld [vmem:[%s1 + $0x98] sm:$0xf]
      %v639 = vld [vmem:[%s1 + $0x9c] sm:$0xf]
      %v640 = vld [vmem:[%s1 + $0xa0] sm:$0xf]
      %v641 = vld [vmem:[%s1 + $0xa4] sm:$0xf]
      %v642 = vld [vmem:[%s1 + $0xa8] sm:$0xf]
      %v643 = vld [vmem:[%s1 + $0xac] sm:$0xf]
      %v644 = vld [vmem:[%s1 + $0xb0] sm:$0xf]
      %v645 = vld [vmem:[%s1 + $0xb4] sm:$0xf]
      %v646 = vld [vmem:[%s1 + $0xb8] sm:$0xf]
      %v647 = vld [vmem:[%s1 + $0xbc] sm:$0xf]
      %v648 = vld [vmem:[%s1 + $0xc0] sm:$0xf]
      %v649 = vld [vmem:[%s1 + $0xc4] sm:$0xf]
      %v650 = vld [vmem:[%s1 + $0xc8] sm:$0xf]
      %v651 = vld [vmem:[%s1 + $0xcc] sm:$0xf]
      %v652 = vld [vmem:[%s1 + $0xd0] sm:$0xf]
      %v653 = vld [vmem:[%s1 + $0xd4] sm:$0xf]
      %v654 = vld [vmem:[%s1 + $0xd8] sm:$0xf]
      %v655 = vld [vmem:[%s1 + $0xdc] sm:$0xf]
      %v656 = vld [vmem:[%s1 + $0xe0] sm:$0xf]
      %v657 = vld [vmem:[%s1 + $0xe4] sm:$0xf]
      %v658 = vld [vmem:[%s1 + $0xe8] sm:$0xf]
      %v659 = vld [vmem:[%s1 + $0xec] sm:$0xf]
      %v660 = vld [vmem:[%s1 + $0xf0] sm:$0xf]
      %v661 = vld [vmem:[%s1 + $0xf4] sm:$0xf]
      %v662 = vld [vmem:[%s1 + $0xf8] sm:$0xf]
      %v663 = vld [vmem:[%s1 + $0xfc] sm:$0xf]
      %v664 = vld [vmem:[%s1 + $0x100] sm:$0xf]
      %v665 = vld [vmem:[%s1 + $0x104] sm:$0xf]
      %v666 = vld [vmem:[%s1 + $0x108] sm:$0xf]
      %v667 = vld [vmem:[%s1 + $0x10c] sm:$0xf]
      %v668 = vld [vmem:[%s1 + $0x110] sm:$0xf]
      %v669 = vld [vmem:[%s1 + $0x114] sm:$0xf]
      %v670 = vld [vmem:[%s1 + $0x118] sm:$0xf]
      %v671 = vld [vmem:[%s1 + $0x11c] sm:$0xf]
      %v672 = vld [vmem:[%s1 + $0x120] sm:$0xf]
      %v673 = vld [vmem:[%s1 + $0x124] sm:$0xf]
      %v674 = vld [vmem:[%s1 + $0x128] sm:$0xf]
      %v675 = vld [vmem:[%s1 + $0x12c] sm:$0xf]
      %v676 = vld [vmem:[%s1 + $0x130] sm:$0xf]
      %v677 = vld [vmem:[%s1 + $0x134] sm:$0xf]
      %v678 = vld [vmem:[%s1 + $0x138] sm:$0xf]
      %v679 = vld [vmem:[%s1 + $0x13c] sm:$0xf]
      %v680 = vld [vmem:[%s1 + $0x140] sm:$0xf]
      %v681 = vld [vmem:[%s1 + $0x144] sm:$0xf]
      %v682 = vld [vmem:[%s1 + $0x148] sm:$0xf]
      %v683 = vld [vmem:[%s1 + $0x14c] sm:$0xf]
      %v684 = vld [vmem:[%s1 + $0x150] sm:$0xf]
      %v685 = vld [vmem:[%s1 + $0x154] sm:$0xf]
      %v686 = vld [vmem:[%s1 + $0x158] sm:$0xf]
      %v687 = vld [vmem:[%s1 + $0x15c] sm:$0xf]
      %v688 = vld [vmem:[%s1 + $0x160] sm:$0xf]
      %v689 = vld [vmem:[%s1 + $0x164] sm:$0xf]
      %v690 = vld [vmem:[%s1 + $0x168] sm:$0xf]
      %v691 = vld [vmem:[%s1 + $0x16c] sm:$0xf]
      %v692 = vld [vmem:[%s1 + $0x170] sm:$0xf]
      %v693 = vld [vmem:[%s1 + $0x174] sm:$0xf]
      %v694 = vld [vmem:[%s1 + $0x178] sm:$0xf]
      %v695 = vld [vmem:[%s1 + $0x17c] sm:$0xf]
      %v696 = vld [vmem:[%s1 + $0x180] sm:$0xf]
      %v697 = vld [vmem:[%s1 + $0x184] sm:$0xf]
      %v698 = vld [vmem:[%s1 + $0x188] sm:$0xf]
      %v699 = vld [vmem:[%s1 + $0x18c] sm:$0xf]
      %v700 = vld [vmem:[%s1 + $0x190] sm:$0xf]
      %v701 = vld [vmem:[%s1 + $0x194] sm:$0xf]
      %v702 = vld [vmem:[%s1 + $0x198] sm:$0xf]
      %v703 = vld [vmem:[%s1 + $0x19c] sm:$0xf]
      %v704 = vld [vmem:[%s1 + $0x1a0] sm:$0xf]
      %v705 = vld [vmem:[%s1 + $0x1a4] sm:$0xf]
      %v706 = vld [vmem:[%s1 + $0x1a8] sm:$0xf]
      %v707 = vld [vmem:[%s1 + $0x1ac] sm:$0xf]
      %v708 = vld [vmem:[%s1 + $0x1b0] sm:$0xf]
      %v709 = vld [vmem:[%s1 + $0x1b4] sm:$0xf]
      %v710 = vld [vmem:[%s1 + $0x1b8] sm:$0xf]
      %v711 = vld [vmem:[%s1 + $0x1bc] sm:$0xf]
      %v712 = vld [vmem:[%s1 + $0x1c0] sm:$0xf]
      %v713 = vld [vmem:[%s1 + $0x1c4] sm:$0xf]
      %v714 = vld [vmem:[%s1 + $0x1c8] sm:$0xf]
      %v715 = vld [vmem:[%s1 + $0x1cc] sm:$0xf]
      %v716 = vld [vmem:[%s1 + $0x1d0] sm:$0xf]
      %v717 = vld [vmem:[%s1 + $0x1d4] sm:$0xf]
      %v718 = vld [vmem:[%s1 + $0x1d8] sm:$0xf]
      %v719 = vld [vmem:[%s1 + $0x1dc] sm:$0xf]
      %v720 = vld [vmem:[%s1 + $0x1e0] sm:$0xf]
      %v721 = vld [vmem:[%s1 + $0x1e4] sm:$0xf]
      %v722 = vld [vmem:[%s1 + $0x1e8] sm:$0xf]
      %v723 = vld [vmem:[%s1 + $0x1ec] sm:$0xf]
      %v724 = vld [vmem:[%s1 + $0x1f0] sm:$0xf]
      %v725 = vld [vmem:[%s1 + $0x1f4] sm:$0xf]
      %v726 = vld [vmem:[%s1 + $0x1f8] sm:$0xf]
      %v727 = vld [vmem:[%s1 + $0x1fc] sm:$0xf]
      %v728 = vld [vmem:[%s1 + $0x200] sm:$0xf]
      %v729 = vld [vmem:[%s1 + $0x204] sm:$0xf]
      %v730 = vld [vmem:[%s1 + $0x208] sm:$0xf]
      %v731 = vld [vmem:[%s1 + $0x20c] sm:$0xf]
      %v732 = vld [vmem:[%s1 + $0x210] sm:$0xf]
      %v733 = vld [vmem:[%s1 + $0x214] sm:$0xf]
      %v734 = vld [vmem:[%s1 + $0x218] sm:$0xf]
      %v735 = vld [vmem:[%s1 + $0x21c] sm:$0xf]
      %v736 = vld [vmem:[%s1 + $0x220] sm:$0xf]
      %v737 = vld [vmem:[%s1 + $0x224] sm:$0xf]
      %v738 = vld [vmem:[%s1 + $0x228] sm:$0xf]
      %v739 = vld [vmem:[%s1 + $0x22c] sm:$0xf]
      %v740 = vld [vmem:[%s1 + $0x230] sm:$0xf]
      %v741 = vld [vmem:[%s1 + $0x234] sm:$0xf]
      %v742 = vld [vmem:[%s1 + $0x238] sm:$0xf]
      %v743 = vld [vmem:[%s1 + $0x23c] sm:$0xf]
      %v744 = vld [vmem:[%s2] sm:$0x1]
      %v746 = vlaneseq
      %v747 = vshrl.u32 %v746, 7
      %v748 = vsub.s32 0, %v747
      %v749 = vrot.slane %v744, %v748
      %vm751 = vsmask.f32 4352
      %v752 = vrot.slane %v402, 3
      %v753 = vrot.slane %v404, 4
      %v754 = vor.u32 %v752, %v753
      %v755 = vrot.slane %v413, 3
      %v756 = vrot.slane %v409, 4
      %v757 = vor.u32 %v755, %v756
      %v758 = vsel %vm751, %v754, %v757
      %v760 = vshrl.u32 %v412, 16
      %v762 = vrot.slane %v760, 3
      %v763 = vshll.u32 %v412, 16
      %v765 = vrot.slane %v763, 4
      %v766 = vor.u32 %v762, %v765
      %v768 = vshrl.u32 %v420, 16
      %v770 = vrot.slane %v768, 3
      %v771 = vshll.u32 %v420, 16
      %v773 = vrot.slane %v771, 4
      %v774 = vor.u32 %v770, %v773
      %v775 = vsel %vm751, %v766, %v774
      %v777 = vshrl.u32 %v484, 16
      %v779 = vrot.slane %v777, 3
      %v780 = vshll.u32 %v484, 16
      %v782 = vrot.slane %v780, 4
      %v783 = vor.u32 %v779, %v782
      %v785 = vshrl.u32 %v486, 16
      %v787 = vrot.slane %v785, 3
      %v788 = vshll.u32 %v486, 16
      %v790 = vrot.slane %v788, 4
      %v791 = vor.u32 %v787, %v790
      %v792 = vsel %vm751, %v783, %v791
      %v794 = vshrl.u32 %v503, 16
      %v796 = vrot.slane %v794, 3
      %v797 = vshll.u32 %v503, 16
      %v799 = vrot.slane %v797, 4
      %v800 = vor.u32 %v796, %v799
      %v802 = vshrl.u32 %v505, 16
      %v804 = vrot.slane %v802, 3
      %v805 = vshll.u32 %v505, 16
      %v807 = vrot.slane %v805, 4
      %v808 = vor.u32 %v804, %v807
      %v809 = vsel %vm751, %v800, %v808
      %v811 = vshrl.u32 %v521, 16
      %v813 = vrot.slane %v811, 3
      %v814 = vshll.u32 %v521, 16
      %v816 = vrot.slane %v814, 4
      %v817 = vor.u32 %v813, %v816
      %v819 = vshrl.u32 %v525, 16
      %v821 = vrot.slane %v819, 3
      %v822 = vshll.u32 %v525, 16
      %v824 = vrot.slane %v822, 4
      %v825 = vor.u32 %v821, %v824
      %v826 = vsel %vm751, %v817, %v825
      %v828 = vshrl.u32 %v557, 16
      %v830 = vrot.slane %v828, 3
      %v831 = vshll.u32 %v557, 16
      %v833 = vrot.slane %v831, 4
      %v834 = vor.u32 %v830, %v833
      %v836 = vshrl.u32 %v559, 16
      %v838 = vrot.slane %v836, 3
      %v839 = vshll.u32 %v559, 16
      %v841 = vrot.slane %v839, 4
      %v842 = vor.u32 %v838, %v841
      %v843 = vsel %vm751, %v834, %v842
      %v844 = vrot.slane %v429, 3
      %v845 = vrot.slane %v425, 4
      %v846 = vor.u32 %v844, %v845
      %v847 = vrot.slane %v437, 3
      %v848 = vrot.slane %v433, 4
      %v849 = vor.u32 %v847, %v848
      %v850 = vsel %vm751, %v846, %v849
      %v852 = vshrl.u32 %v436, 16
      %v854 = vrot.slane %v852, 3
      %v855 = vshll.u32 %v436, 16
      %v857 = vrot.slane %v855, 4
      %v858 = vor.u32 %v854, %v857
      %v860 = vshrl.u32 %v444, 16
      %v862 = vrot.slane %v860, 3
      %v863 = vshll.u32 %v444, 16
      %v865 = vrot.slane %v863, 4
      %v866 = vor.u32 %v862, %v865
      %v867 = vsel %vm751, %v858, %v866
      %v869 = vshrl.u32 %v490, 16
      %v871 = vrot.slane %v869, 3
      %v872 = vshll.u32 %v490, 16
      %v874 = vrot.slane %v872, 4
      %v875 = vor.u32 %v871, %v874
      %v877 = vshrl.u32 %v492, 16
      %v879 = vrot.slane %v877, 3
      %v880 = vshll.u32 %v492, 16
      %v882 = vrot.slane %v880, 4
      %v883 = vor.u32 %v879, %v882
      %v884 = vsel %vm751, %v875, %v883
      %v885 = vrot.slane %v421, 3
      %v886 = vrot.slane %v417, 4
      %v887 = vor.u32 %v885, %v886
      %v888 = vsel %vm751, %v757, %v887
      %v890 = vshrl.u32 %v428, 16
      %v892 = vrot.slane %v890, 3
      %v893 = vshll.u32 %v428, 16
      %v895 = vrot.slane %v893, 4
      %v896 = vor.u32 %v892, %v895
      %v897 = vsel %vm751, %v774, %v896
      %v899 = vshrl.u32 %v488, 16
      %v901 = vrot.slane %v899, 3
      %v902 = vshll.u32 %v488, 16
      %v904 = vrot.slane %v902, 4
      %v905 = vor.u32 %v901, %v904
      %v906 = vsel %vm751, %v791, %v905
      %v908 = vshrl.u32 %v507, 16
      %v910 = vrot.slane %v908, 3
      %v911 = vshll.u32 %v507, 16
      %v913 = vrot.slane %v911, 4
      %v914 = vor.u32 %v910, %v913
      %v915 = vsel %vm751, %v808, %v914
      %v917 = vshrl.u32 %v529, 16
      %v919 = vrot.slane %v917, 3
      %v920 = vshll.u32 %v529, 16
      %v922 = vrot.slane %v920, 4
      %v923 = vor.u32 %v919, %v922
      %v924 = vsel %vm751, %v825, %v923
      %v926 = vshrl.u32 %v561, 16
      %v928 = vrot.slane %v926, 3
      %v929 = vshll.u32 %v561, 16
      %v931 = vrot.slane %v929, 4
      %v932 = vor.u32 %v928, %v931
      %v933 = vsel %vm751, %v842, %v932
      %v934 = vrot.slane %v445, 3
      %v935 = vrot.slane %v441, 4
      %v936 = vor.u32 %v934, %v935
      %v937 = vsel %vm751, %v849, %v936
      %v939 = vshrl.u32 %v452, 16
      %v941 = vrot.slane %v939, 3
      %v942 = vshll.u32 %v452, 16
      %v944 = vrot.slane %v942, 4
      %v945 = vor.u32 %v941, %v944
      %v946 = vsel %vm751, %v866, %v945
      %v948 = vshrl.u32 %v494, 16
      %v950 = vrot.slane %v948, 3
      %v951 = vshll.u32 %v494, 16
      %v953 = vrot.slane %v951, 4
      %v954 = vor.u32 %v950, %v953
      %v955 = vsel %vm751, %v883, %v954
      %v956 = vsel %vm751, %v887, %v846
      %v957 = vsel %vm751, %v896, %v858
      %v958 = vsel %vm751, %v905, %v875
      %v960 = vshrl.u32 %v509, 16
      %v962 = vrot.slane %v960, 3
      %v963 = vshll.u32 %v509, 16
      %v965 = vrot.slane %v963, 4
      %v966 = vor.u32 %v962, %v965
      %v967 = vsel %vm751, %v914, %v966
      %v969 = vshrl.u32 %v533, 16
      %v971 = vrot.slane %v969, 3
      %v972 = vshll.u32 %v533, 16
      %v974 = vrot.slane %v972, 4
      %v975 = vor.u32 %v971, %v974
      %v976 = vsel %vm751, %v923, %v975
      %v978 = vshrl.u32 %v563, 16
      %v980 = vrot.slane %v978, 3
      %v981 = vshll.u32 %v563, 16
      %v983 = vrot.slane %v981, 4
      %v984 = vor.u32 %v980, %v983
      %v985 = vsel %vm751, %v932, %v984
      %v986 = vrot.slane %v453, 3
      %v987 = vrot.slane %v449, 4
      %v988 = vor.u32 %v986, %v987
      %v989 = vsel %vm751, %v936, %v988
      %v991 = vshrl.u32 %v460, 16
      %v993 = vrot.slane %v991, 3
      %v994 = vshll.u32 %v460, 16
      %v996 = vrot.slane %v994, 4
      %v997 = vor.u32 %v993, %v996
      %v998 = vsel %vm751, %v945, %v997
      %v1000 = vshrl.u32 %v496, 16
      %v1002 = vrot.slane %v1000, 3
      %v1003 = vshll.u32 %v496, 16
      %v1005 = vrot.slane %v1003, 4
      %v1006 = vor.u32 %v1002, %v1005
      %v1007 = vsel %vm751, %v954, %v1006
      %v1009 = vshrl.u32 %v511, 16
      %v1011 = vrot.slane %v1009, 3
      %v1012 = vshll.u32 %v511, 16
      %v1014 = vrot.slane %v1012, 4
      %v1015 = vor.u32 %v1011, %v1014
      %v1016 = vsel %vm751, %v966, %v1015
      %v1018 = vshrl.u32 %v537, 16
      %v1020 = vrot.slane %v1018, 3
      %v1021 = vshll.u32 %v537, 16
      %v1023 = vrot.slane %v1021, 4
      %v1024 = vor.u32 %v1020, %v1023
      %v1025 = vsel %vm751, %v975, %v1024
      %v1027 = vshrl.u32 %v565, 16
      %v1029 = vrot.slane %v1027, 3
      %v1030 = vshll.u32 %v565, 16
      %v1032 = vrot.slane %v1030, 4
      %v1033 = vor.u32 %v1029, %v1032
      %v1034 = vsel %vm751, %v984, %v1033
      %v1035 = vrot.slane %v461, 3
      %v1036 = vrot.slane %v457, 4
      %v1037 = vor.u32 %v1035, %v1036
      %v1038 = vsel %vm751, %v988, %v1037
      %v1040 = vshrl.u32 %v468, 16
      %v1042 = vrot.slane %v1040, 3
      %v1043 = vshll.u32 %v468, 16
      %v1045 = vrot.slane %v1043, 4
      %v1046 = vor.u32 %v1042, %v1045
      %v1047 = vsel %vm751, %v997, %v1046
      %v1049 = vshrl.u32 %v498, 16
      %v1051 = vrot.slane %v1049, 3
      %v1052 = vshll.u32 %v498, 16
      %v1054 = vrot.slane %v1052, 4
      %v1055 = vor.u32 %v1051, %v1054
      %v1056 = vsel %vm751, %v1006, %v1055
      %v1058 = vshrl.u32 %v513, 16
      %v1060 = vrot.slane %v1058, 3
      %v1061 = vshll.u32 %v513, 16
      %v1063 = vrot.slane %v1061, 4
      %v1064 = vor.u32 %v1060, %v1063
      %v1065 = vsel %vm751, %v1015, %v1064
      %v1067 = vshrl.u32 %v541, 16
      %v1069 = vrot.slane %v1067, 3
      %v1070 = vshll.u32 %v541, 16
      %v1072 = vrot.slane %v1070, 4
      %v1073 = vor.u32 %v1069, %v1072
      %v1074 = vsel %vm751, %v1024, %v1073
      %v1076 = vshrl.u32 %v567, 16
      %v1078 = vrot.slane %v1076, 3
      %v1079 = vshll.u32 %v567, 16
      %v1081 = vrot.slane %v1079, 4
      %v1082 = vor.u32 %v1078, %v1081
      %v1083 = vsel %vm751, %v1033, %v1082
      %v1084 = vrot.slane %v469, 3
      %v1085 = vrot.slane %v465, 4
      %v1086 = vor.u32 %v1084, %v1085
      %v1087 = vsel %vm751, %v1037, %v1086
      %v1089 = vshrl.u32 %v575, 16
      %v1091 = vrot.slane %v1089, 3
      %v1092 = vshll.u32 %v575, 16
      %v1094 = vrot.slane %v1092, 4
      %v1095 = vor.u32 %v1091, %v1094
      %v1096 = vsel %vm751, %v1046, %v1095
      %v1098 = vshrl.u32 %v595, 16
      %v1100 = vrot.slane %v1098, 3
      %v1101 = vshll.u32 %v595, 16
      %v1103 = vrot.slane %v1101, 4
      %v1104 = vor.u32 %v1100, %v1103
      %v1105 = vsel %vm751, %v1055, %v1104
      %v1107 = vshrl.u32 %v515, 16
      %v1109 = vrot.slane %v1107, 3
      %v1110 = vshll.u32 %v515, 16
      %v1112 = vrot.slane %v1110, 4
      %v1113 = vor.u32 %v1109, %v1112
      %v1114 = vsel %vm751, %v1064, %v1113
      %v1116 = vshrl.u32 %v545, 16
      %v1118 = vrot.slane %v1116, 3
      %v1119 = vshll.u32 %v545, 16
      %v1121 = vrot.slane %v1119, 4
      %v1122 = vor.u32 %v1118, %v1121
      %v1123 = vsel %vm751, %v1073, %v1122
      %v1125 = vshrl.u32 %v569, 16
      %v1127 = vrot.slane %v1125, 3
      %v1128 = vshll.u32 %v569, 16
      %v1130 = vrot.slane %v1128, 4
      %v1131 = vor.u32 %v1127, %v1130
      %v1132 = vsel %vm751, %v1082, %v1131
      %v1133 = vrot.slane %v547, 3
      %v1134 = vrot.slane %v550, 4
      %v1135 = vor.u32 %v1133, %v1134
      %v1136 = vsel %vm751, %v1086, %v1135
      %v1138 = vshrl.u32 %v581, 16
      %v1140 = vrot.slane %v1138, 3
      %v1141 = vshll.u32 %v581, 16
      %v1143 = vrot.slane %v1141, 4
      %v1144 = vor.u32 %v1140, %v1143
      %v1145 = vsel %vm751, %v1095, %v1144
      %v1147 = vshrl.u32 %v597, 16
      %v1149 = vrot.slane %v1147, 3
      %v1150 = vshll.u32 %v597, 16
      %v1152 = vrot.slane %v1150, 4
      %v1153 = vor.u32 %v1149, %v1152
      %v1154 = vsel %vm751, %v1104, %v1153
      %v1156 = vshrl.u32 %v517, 16
      %v1158 = vrot.slane %v1156, 3
      %v1159 = vshll.u32 %v517, 16
      %v1161 = vrot.slane %v1159, 4
      %v1162 = vor.u32 %v1158, %v1161
      %v1163 = vsel %vm751, %v1113, %v1162
      %v1165 = vshrl.u32 %v554, 16
      %v1167 = vrot.slane %v1165, 3
      %v1168 = vshll.u32 %v554, 16
      %v1170 = vrot.slane %v1168, 4
      %v1171 = vor.u32 %v1167, %v1170
      %v1172 = vsel %vm751, %v1122, %v1171
      %v1174 = vshrl.u32 %v571, 16
      %v1176 = vrot.slane %v1174, 3
      %v1177 = vshll.u32 %v571, 16
      %v1179 = vrot.slane %v1177, 4
      %v1180 = vor.u32 %v1176, %v1179
      %v1181 = vsel %vm751, %v1131, %v1180
      %v1182 = vrot.slane %v582, 3
      %v1183 = vrot.slane %v578, 4
      %v1184 = vor.u32 %v1182, %v1183
      %v1185 = vsel %vm751, %v1135, %v1184
      %v1187 = vshrl.u32 %v589, 16
      %v1189 = vrot.slane %v1187, 3
      %v1190 = vshll.u32 %v589, 16
      %v1192 = vrot.slane %v1190, 4
      %v1193 = vor.u32 %v1189, %v1192
      %v1194 = vsel %vm751, %v1144, %v1193
      %v1196 = vshrl.u32 %v599, 16
      %v1198 = vrot.slane %v1196, 3
      %v1199 = vshll.u32 %v599, 16
      %v1201 = vrot.slane %v1199, 4
      %v1202 = vor.u32 %v1198, %v1201
      %v1203 = vsel %vm751, %v1153, %v1202
      %v1205 = vshrl.u32 %v471, 16
      %v1207 = vrot.slane %v1205, 3
      %v1208 = vshll.u32 %v471, 16
      %v1210 = vrot.slane %v1208, 4
      %v1211 = vor.u32 %v1207, %v1210
      %v1212 = vsel %vm751, %v1046, %v1211
      %v1214 = vshrl.u32 %v497, 16
      %v1216 = vrot.slane %v1214, 3
      %v1217 = vshll.u32 %v497, 16
      %v1219 = vrot.slane %v1217, 4
      %v1220 = vor.u32 %v1216, %v1219
      %v1221 = vsel %vm751, %v1055, %v1220
      %v1223 = vshrl.u32 %v516, 16
      %v1225 = vrot.slane %v1223, 3
      %v1226 = vshll.u32 %v516, 16
      %v1228 = vrot.slane %v1226, 4
      %v1229 = vor.u32 %v1225, %v1228
      %v1230 = vsel %vm751, %v1162, %v1229
      %v1232 = vshrl.u32 %v553, 16
      %v1234 = vrot.slane %v1232, 3
      %v1235 = vshll.u32 %v553, 16
      %v1237 = vrot.slane %v1235, 4
      %v1238 = vor.u32 %v1234, %v1237
      %v1239 = vsel %vm751, %v1171, %v1238
      %v1241 = vshrl.u32 %v573, 16
      %v1243 = vrot.slane %v1241, 3
      %v1244 = vshll.u32 %v573, 16
      %v1246 = vrot.slane %v1244, 4
      %v1247 = vor.u32 %v1243, %v1246
      %v1248 = vsel %vm751, %v1180, %v1247
      %v1249 = vrot.slane %v590, 3
      %v1250 = vrot.slane %v586, 4
      %v1251 = vor.u32 %v1249, %v1250
      %v1252 = vsel %vm751, %v1184, %v1251
      %v1254 = vshrl.u32 %v592, 16
      %v1256 = vrot.slane %v1254, 3
      %v1257 = vshll.u32 %v592, 16
      %v1259 = vrot.slane %v1257, 4
      %v1260 = vor.u32 %v1256, %v1259
      %v1261 = vsel %vm751, %v1193, %v1260
      %v1263 = vshrl.u32 %v598, 16
      %v1265 = vrot.slane %v1263, 3
      %v1266 = vshll.u32 %v598, 16
      %v1268 = vrot.slane %v1266, 4
      %v1269 = vor.u32 %v1265, %v1268
      %v1270 = vsel %vm751, %v1202, %v1269
      %v1474 = vunpack.c.l.b16 %v600
      %v1475 = vunpack.c.l.b16 %v601
      %v1476 = vunpack.c.l.b16 %v602
      %v1477 = vunpack.c.l.b16 %v603
      %v1478 = vunpack.c.l.b16 %v604
      %v1479 = vunpack.c.l.b16 %v605
      %v1480 = vunpack.c.l.b16 %v606
      %v1481 = vunpack.c.l.b16 %v607
      %v1482 = vunpack.c.l.b16 %v608
      %v1483 = vunpack.c.l.b16 %v609
      %v1484 = vunpack.c.l.b16 %v610
      %v1485 = vunpack.c.l.b16 %v611
      %v1486 = vunpack.c.l.b16 %v612
      %v1487 = vunpack.c.l.b16 %v613
      %v1488 = vunpack.c.l.b16 %v614
      %v1489 = vunpack.c.l.b16 %v615
      %v1490 = vunpack.c.l.b16 %v616
      %v1491 = vunpack.c.l.b16 %v617
      %v1492 = vunpack.c.l.b16 %v618
      %v1493 = vunpack.c.l.b16 %v619
      %v1494 = vunpack.c.l.b16 %v620
      %v1495 = vunpack.c.l.b16 %v621
      %v1496 = vunpack.c.l.b16 %v622
      %v1497 = vunpack.c.l.b16 %v623
      %v1498 = vunpack.c.l.b16 %v624
      %v1499 = vunpack.c.l.b16 %v625
      %v1500 = vunpack.c.l.b16 %v626
      %v1501 = vunpack.c.l.b16 %v627
      %v1502 = vunpack.c.l.b16 %v628
      %v1503 = vunpack.c.l.b16 %v629
      %v1504 = vunpack.c.l.b16 %v630
      %v1505 = vunpack.c.l.b16 %v631
      %v1506 = vunpack.c.l.b16 %v632
      %v1507 = vunpack.c.l.b16 %v633
      %v1508 = vunpack.c.l.b16 %v634
      %v1509 = vunpack.c.l.b16 %v635
      %v1510 = vunpack.c.l.b16 %v636
      %v1511 = vunpack.c.l.b16 %v637
      %v1512 = vunpack.c.l.b16 %v638
      %v1513 = vunpack.c.l.b16 %v639
      %v1514 = vunpack.c.l.b16 %v640
      %v1515 = vunpack.c.l.b16 %v641
      %v1516 = vunpack.c.l.b16 %v642
      %v1517 = vunpack.c.l.b16 %v643
      %v1518 = vunpack.c.l.b16 %v644
      %v1519 = vunpack.c.l.b16 %v645
      %v1520 = vunpack.c.l.b16 %v646
      %v1521 = vunpack.c.l.b16 %v647
      %v1522 = vunpack.c.l.b16 %v648
      %v1523 = vunpack.c.l.b16 %v649
      %v1524 = vunpack.c.l.b16 %v650
      %v1525 = vunpack.c.l.b16 %v651
      %v1526 = vunpack.c.l.b16 %v652
      %v1527 = vunpack.c.l.b16 %v653
      %v1528 = vunpack.c.l.b16 %v654
      %v1529 = vunpack.c.l.b16 %v655
      %v1530 = vunpack.c.l.b16 %v656
      %v1531 = vunpack.c.l.b16 %v657
      %v1532 = vunpack.c.l.b16 %v658
      %v1533 = vunpack.c.l.b16 %v659
      %v1534 = vunpack.c.l.b16 %v660
      %v1535 = vunpack.c.l.b16 %v661
      %v1536 = vunpack.c.l.b16 %v662
      %v1537 = vunpack.c.l.b16 %v663
      %v1538 = vunpack.c.l.b16 %v664
      %v1539 = vunpack.c.l.b16 %v665
      %v1540 = vunpack.c.l.b16 %v666
      %v1541 = vunpack.c.l.b16 %v667
      %v1542 = vunpack.c.l.b16 %v668
      %v1543 = vunpack.c.l.b16 %v669
      %v1544 = vunpack.c.l.b16 %v670
      %v1545 = vunpack.c.l.b16 %v671
      %v1546 = vunpack.c.l.b16 %v672
      %v1547 = vunpack.c.l.b16 %v673
      %v1548 = vunpack.c.l.b16 %v674
      %v1549 = vunpack.c.l.b16 %v675
      %v1550 = vunpack.c.l.b16 %v676
      %v1551 = vunpack.c.l.b16 %v677
      %v1552 = vunpack.c.l.b16 %v678
      %v1553 = vunpack.c.l.b16 %v679
      %v1554 = vunpack.c.l.b16 %v680
      %v1555 = vunpack.c.l.b16 %v681
      %v1556 = vunpack.c.l.b16 %v682
      %v1557 = vunpack.c.l.b16 %v683
      %v1558 = vunpack.c.l.b16 %v684
      %v1559 = vunpack.c.l.b16 %v685
      %v1560 = vunpack.c.l.b16 %v686
      %v1561 = vunpack.c.l.b16 %v687
      %v1562 = vunpack.c.l.b16 %v688
      %v1563 = vunpack.c.l.b16 %v689
      %v1564 = vunpack.c.l.b16 %v690
      %v1565 = vunpack.c.l.b16 %v691
      %v1566 = vunpack.c.l.b16 %v692
      %v1567 = vunpack.c.l.b16 %v693
      %v1568 = vunpack.c.l.b16 %v694
      %v1569 = vunpack.c.l.b16 %v695
      %v1570 = vunpack.c.l.b16 %v696
      %v1571 = vunpack.c.l.b16 %v697
      %v1572 = vunpack.c.l.b16 %v698
      %v1573 = vunpack.c.l.b16 %v699
      %v1574 = vunpack.c.l.b16 %v700
      %v1575 = vunpack.c.l.b16 %v701
      %v1576 = vunpack.c.l.b16 %v702
      %v1577 = vunpack.c.l.b16 %v703
      %v1578 = vunpack.c.l.b16 %v704
      %v1579 = vunpack.c.l.b16 %v705
      %v1580 = vunpack.c.l.b16 %v706
      %v1581 = vunpack.c.l.b16 %v707
      %v1582 = vunpack.c.l.b16 %v708
      %v1583 = vunpack.c.l.b16 %v709
      %v1584 = vunpack.c.l.b16 %v710
      %v1585 = vunpack.c.l.b16 %v711
      %v1586 = vunpack.c.l.b16 %v712
      %v1587 = vunpack.c.l.b16 %v713
      %v1588 = vunpack.c.l.b16 %v714
      %v1589 = vunpack.c.l.b16 %v715
      %v1590 = vunpack.c.l.b16 %v716
      %v1591 = vunpack.c.l.b16 %v717
      %v1592 = vunpack.c.l.b16 %v718
      %v1593 = vunpack.c.l.b16 %v719
      %v1594 = vunpack.c.l.b16 %v720
      %v1595 = vunpack.c.l.b16 %v721
      %v1596 = vunpack.c.l.b16 %v722
      %v1597 = vunpack.c.l.b16 %v723
      %v1598 = vunpack.c.l.b16 %v724
      %v1599 = vunpack.c.l.b16 %v725
      %v1600 = vunpack.c.l.b16 %v726
      %v1601 = vunpack.c.l.b16 %v727
      %v1602 = vunpack.c.l.b16 %v728
      %v1603 = vunpack.c.l.b16 %v729
      %v1604 = vunpack.c.l.b16 %v730
      %v1605 = vunpack.c.l.b16 %v731
      %v1606 = vunpack.c.l.b16 %v732
      %v1607 = vunpack.c.l.b16 %v733
      %v1608 = vunpack.c.l.b16 %v734
      %v1609 = vunpack.c.l.b16 %v735
      %v1610 = vunpack.c.l.b16 %v736
      %v1611 = vunpack.c.l.b16 %v737
      %v1612 = vunpack.c.l.b16 %v738
      %v1613 = vunpack.c.l.b16 %v739
      %v1614 = vunpack.c.l.b16 %v740
      %v1615 = vunpack.c.l.b16 %v741
      %v1616 = vunpack.c.l.b16 %v742
      %v1617 = vunpack.c.l.b16 %v743
      %v1618 = vpack.c.b16 %v1475, %v1474
      %v1619 = vpack.c.b16 %v1477, %v1476
      %v1620 = vpack.c.b16 %v1479, %v1478
      %v1621 = vpack.c.b16 %v1481, %v1480
      %v1622 = vpack.c.b16 %v1483, %v1482
      %v1623 = vpack.c.b16 %v1485, %v1484
      %v1624 = vpack.c.b16 %v1487, %v1486
      %v1625 = vpack.c.b16 %v1489, %v1488
      %v1626 = vpack.c.b16 %v1491, %v1490
      %v1627 = vpack.c.b16 %v1493, %v1492
      %v1628 = vpack.c.b16 %v1495, %v1494
      %v1629 = vpack.c.b16 %v1497, %v1496
      %v1630 = vpack.c.b16 %v1499, %v1498
      %v1631 = vpack.c.b16 %v1501, %v1500
      %v1632 = vpack.c.b16 %v1503, %v1502
      %v1633 = vpack.c.b16 %v1505, %v1504
      %v1634 = vpack.c.b16 %v1507, %v1506
      %v1635 = vpack.c.b16 %v1509, %v1508
      %v1636 = vpack.c.b16 %v1511, %v1510
      %v1637 = vpack.c.b16 %v1513, %v1512
      %v1638 = vpack.c.b16 %v1515, %v1514
      %v1639 = vpack.c.b16 %v1517, %v1516
      %v1640 = vpack.c.b16 %v1519, %v1518
      %v1641 = vpack.c.b16 %v1521, %v1520
      %v1642 = vpack.c.b16 %v1523, %v1522
      %v1643 = vpack.c.b16 %v1525, %v1524
      %v1644 = vpack.c.b16 %v1527, %v1526
      %v1645 = vpack.c.b16 %v1529, %v1528
      %v1646 = vpack.c.b16 %v1531, %v1530
      %v1647 = vpack.c.b16 %v1533, %v1532
      %v1648 = vpack.c.b16 %v1535, %v1534
      %v1649 = vpack.c.b16 %v1537, %v1536
      %v1650 = vpack.c.b16 %v1539, %v1538
      %v1651 = vpack.c.b16 %v1541, %v1540
      %v1652 = vpack.c.b16 %v1543, %v1542
      %v1653 = vpack.c.b16 %v1545, %v1544
      %v1654 = vpack.c.b16 %v1547, %v1546
      %v1655 = vpack.c.b16 %v1549, %v1548
      %v1656 = vpack.c.b16 %v1551, %v1550
      %v1657 = vpack.c.b16 %v1553, %v1552
      %v1658 = vpack.c.b16 %v1555, %v1554
      %v1659 = vpack.c.b16 %v1557, %v1556
      %v1660 = vpack.c.b16 %v1559, %v1558
      %v1661 = vpack.c.b16 %v1561, %v1560
      %v1662 = vpack.c.b16 %v1563, %v1562
      %v1663 = vpack.c.b16 %v1565, %v1564
      %v1664 = vpack.c.b16 %v1567, %v1566
      %v1665 = vpack.c.b16 %v1569, %v1568
      %v1666 = vpack.c.b16 %v1571, %v1570
      %v1667 = vpack.c.b16 %v1573, %v1572
      %v1668 = vpack.c.b16 %v1575, %v1574
      %v1669 = vpack.c.b16 %v1577, %v1576
      %v1670 = vpack.c.b16 %v1579, %v1578
      %v1671 = vpack.c.b16 %v1581, %v1580
      %v1672 = vpack.c.b16 %v1583, %v1582
      %v1673 = vpack.c.b16 %v1585, %v1584
      %v1674 = vpack.c.b16 %v1587, %v1586
      %v1675 = vpack.c.b16 %v1589, %v1588
      %v1676 = vpack.c.b16 %v1591, %v1590
      %v1677 = vpack.c.b16 %v1593, %v1592
      %v1678 = vpack.c.b16 %v1595, %v1594
      %v1679 = vpack.c.b16 %v1597, %v1596
      %v1680 = vpack.c.b16 %v1599, %v1598
      %v1681 = vpack.c.b16 %v1601, %v1600
      %v1682 = vpack.c.b16 %v1603, %v1602
      %v1683 = vpack.c.b16 %v1605, %v1604
      %v1684 = vpack.c.b16 %v1607, %v1606
      %v1685 = vpack.c.b16 %v1609, %v1608
      %v1686 = vpack.c.b16 %v1611, %v1610
      %v1687 = vpack.c.b16 %v1613, %v1612
      %v1688 = vpack.c.b16 %v1615, %v1614
      %v1689 = vpack.c.b16 %v1617, %v1616
      %1762 = vmatprep.subr.bf16.mxu0 0
      %1763 = vmatpush1.bf16.msra.mxu0 %v1618
      %1764 = vmatprep.subr.bf16.mxu0 0
      %1765 = vmatpush1.bf16.msra.mxu0 %v1619
      %1766 = vmatprep.subr.bf16.mxu0 0
      %1767 = vmatpush1.bf16.msra.mxu0 %v1620
      %1768 = vmatprep.subr.bf16.mxu0 0
      %1769 = vmatpush1.bf16.msra.mxu0 %v1621
      %1770 = vmatprep.subr.bf16.mxu0 0
      %1771 = vmatpush1.bf16.msra.mxu0 %v1622
      %1772 = vmatprep.subr.bf16.mxu0 0
      %1773 = vmatpush1.bf16.msra.mxu0 %v1623
      %1774 = vmatprep.subr.bf16.mxu0 0
      %1775 = vmatpush1.bf16.msra.mxu0 %v1624
      %1776 = vmatprep.subr.bf16.mxu0 0
      %1777 = vmatpush1.bf16.msra.mxu0 %v1625
      %1778 = vmatprep.subr.bf16.mxu0 0
      %1779 = vmatpush1.bf16.msra.mxu0 %v1626
      %1780 = vmatprep.subr.bf16.mxu0 0
      %1781 = vmatpush1.bf16.msra.mxu0 %v1627
      %1782 = vmatprep.subr.bf16.mxu0 0
      %1783 = vmatpush1.bf16.msra.mxu0 %v1628
      %1784 = vmatprep.subr.bf16.mxu0 0
      %1785 = vmatpush1.bf16.msra.mxu0 %v1629
      %1786 = vmatprep.subr.bf16.mxu0 0
      %1787 = vmatpush1.bf16.msra.mxu0 %v1630
      %1788 = vmatprep.subr.bf16.mxu0 0
      %1789 = vmatpush1.bf16.msra.mxu0 %v1631
      %1790 = vmatprep.subr.bf16.mxu0 0
      %1791 = vmatpush1.bf16.msra.mxu0 %v1632
      %1792 = vmatprep.subr.bf16.mxu0 0
      %1793 = vmatpush1.bf16.msra.mxu0 %v1633
      %1794 = vmatprep.mubr.bf16.mxu0 %v775
      %1795 = vmatmul.mubr.bf16.gmra.mrb[0].mxu0 %v758
      %v1796 = vpop.f32.mrb[0].mxu0
      %v1797 = vadd.f32 %v749, %v1796
      %v1798 = vpop.f32.mrb[0].mxu0
      %v1799 = vpop.f32.mrb[0].mxu0
      %v1800 = vadd.f32 %v749, %v1799
      %v1801 = vpop.f32.mrb[0].mxu0
      %1802 = vmatprep.mubr.bf16.mxu0 %v897
      %1803 = vmatmul.mubr.bf16.gmra.mrb[0].mxu0 %v888
      %v1804 = vpop.f32.mrb[0].mxu0
      %v1805 = vadd.f32 %v749, %v1804
      %v1806 = vpop.f32.mrb[0].mxu0
      %v1807 = vpop.f32.mrb[0].mxu0
      %v1808 = vadd.f32 %v749, %v1807
      %v1809 = vpop.f32.mrb[0].mxu0
      %1810 = vmatprep.mubr.bf16.mxu0 %v957
      %1811 = vmatmul.mubr.bf16.gmra.mrb[0].mxu0 %v956
      %v1812 = vpop.f32.mrb[0].mxu0
      %v1813 = vadd.f32 %v749, %v1812
      %v1814 = vpop.f32.mrb[0].mxu0
      %v1815 = vpop.f32.mrb[0].mxu0
      %v1816 = vadd.f32 %v749, %v1815
      %v1817 = vpop.f32.mrb[0].mxu0
      %1818 = vmatprep.mubr.bf16.mxu0 %v867
      %1819 = vmatmul.mubr.bf16.gmra.mrb[0].mxu0 %v850
      %v1820 = vpop.f32.mrb[0].mxu0
      %v1821 = vadd.f32 %v749, %v1820
      %v1822 = vpop.f32.mrb[0].mxu0
      %v1823 = vpop.f32.mrb[0].mxu0
      %v1824 = vadd.f32 %v749, %v1823
      %v1825 = vpop.f32.mrb[0].mxu0
      %1826 = vmatprep.mubr.bf16.mxu0 %v946
      %1827 = vmatmul.mubr.bf16.gmra.mrb[0].mxu0 %v937
      %v1828 = vpop.f32.mrb[0].mxu0
      %v1829 = vadd.f32 %v749, %v1828
      %v1830 = vpop.f32.mrb[0].mxu0
      %v1831 = vpop.f32.mrb[0].mxu0
      %v1832 = vadd.f32 %v749, %v1831
      %v1833 = vpop.f32.mrb[0].mxu0
      %1834 = vmatprep.mubr.bf16.mxu0 %v998
      %1835 = vmatmul.mubr.bf16.gmra.mrb[0].mxu0 %v989
      %v1836 = vpop.f32.mrb[0].mxu0
      %v1837 = vadd.f32 %v749, %v1836
      %v1838 = vpop.f32.mrb[0].mxu0
      %v1839 = vpop.f32.mrb[0].mxu0
      %v1840 = vadd.f32 %v749, %v1839
      %v1841 = vpop.f32.mrb[0].mxu0
      %1842 = vmatprep.mubr.bf16.mxu0 %v1047
      %1843 = vmatmul.mubr.bf16.gmra.mrb[0].mxu0 %v1038
      %v1844 = vpop.f32.mrb[0].mxu0
      %v1845 = vadd.f32 %v749, %v1844
      %v1846 = vpop.f32.mrb[0].mxu0
      %v1847 = vpop.f32.mrb[0].mxu0
      %v1848 = vadd.f32 %v749, %v1847
      %v1849 = vpop.f32.mrb[0].mxu0
      %1850 = vmatprep.mubr.bf16.mxu0 %v1212
      %1851 = vmatmul.mubr.bf16.gmra.mrb[0].mxu0 %v1087
      %v1852 = vpop.f32.mrb[0].mxu0
      %v1853 = vadd.f32 %v749, %v1852
      %v1854 = vpop.f32.mrb[0].mxu0
      %v1855 = vpop.f32.mrb[0].mxu0
      %v1856 = vadd.f32 %v749, %v1855
      %v1857 = vpop.f32.mrb[0].mxu0
      %1858 = vdwg.mxu0
      %1859 = vmatprep.subr.bf16.mxu0 0
      %1860 = vmatpush1.bf16.msra.mxu0 %v1634
      %1861 = vmatprep.subr.bf16.mxu0 0
      %1862 = vmatpush1.bf16.msra.mxu0 %v1635
      %1863 = vmatprep.subr.bf16.mxu0 0
      %1864 = vmatpush1.bf16.msra.mxu0 %v1636
      %1865 = vmatprep.subr.bf16.mxu0 0
      %1866 = vmatpush1.bf16.msra.mxu0 %v1637
      %1867 = vmatprep.subr.bf16.mxu0 0
      %1868 = vmatpush1.bf16.msra.mxu0 %v1638
      %1869 = vmatprep.subr.bf16.mxu0 0
      %1870 = vmatpush1.bf16.msra.mxu0 %v1639
      %1871 = vmatprep.subr.bf16.mxu0 0
      %1872 = vmatpush1.bf16.msra.mxu0 %v1640
      %1873 = vmatprep.subr.bf16.mxu0 0
      %1874 = vmatpush1.bf16.msra.mxu0 %v1641
      %1875 = vmatprep.subr.bf16.mxu0 0
      %1876 = vmatpush1.bf16.msra.mxu0 %v1642
      %1877 = vmatprep.subr.bf16.mxu0 0
      %1878 = vmatpush1.bf16.msra.mxu0 %v1643
      %1879 = vmatprep.subr.bf16.mxu0 0
      %1880 = vmatpush1.bf16.msra.mxu0 %v1644
      %1881 = vmatprep.subr.bf16.mxu0 0
      %1882 = vmatpush1.bf16.msra.mxu0 %v1645
      %1883 = vmatprep.subr.bf16.mxu0 0
      %1884 = vmatpush1.bf16.msra.mxu0 %v1646
      %1885 = vmatprep.subr.bf16.mxu0 0
      %1886 = vmatpush1.bf16.msra.mxu0 %v1647
      %1887 = vmatprep.subr.bf16.mxu0 0
      %1888 = vmatpush1.bf16.msra.mxu0 %v1648
      %1889 = vmatprep.subr.bf16.mxu0 0
      %1890 = vmatpush1.bf16.msra.mxu0 %v1649
      %1891 = vmatprep.mubr.bf16.mxu0 %v809
      %1892 = vmatmul.mubr.bf16.gmra.mrb[0].mxu0 %v792
      %v1893 = vpop.f32.mrb[0].mxu0
      %v1894 = vadd.f32 %v1797, %v1893
      %v1895 = vpop.f32.mrb[0].mxu0
      %v1896 = vpop.f32.mrb[0].mxu0
      %v1897 = vadd.f32 %v1800, %v1896
      %v1898 = vpop.f32.mrb[0].mxu0
      %1899 = vmatprep.mubr.bf16.mxu0 %v915
      %1900 = vmatmul.mubr.bf16.gmra.mrb[0].mxu0 %v906
      %v1901 = vpop.f32.mrb[0].mxu0
      %v1902 = vadd.f32 %v1805, %v1901
      %v1903 = vpop.f32.mrb[0].mxu0
      %v1904 = vpop.f32.mrb[0].mxu0
      %v1905 = vadd.f32 %v1808, %v1904
      %v1906 = vpop.f32.mrb[0].mxu0
      %1907 = vmatprep.mubr.bf16.mxu0 %v967
      %1908 = vmatmul.mubr.bf16.gmra.mrb[0].mxu0 %v958
      %v1909 = vpop.f32.mrb[0].mxu0
      %v1910 = vadd.f32 %v1813, %v1909
      %v1911 = vpop.f32.mrb[0].mxu0
      %v1912 = vpop.f32.mrb[0].mxu0
      %v1913 = vadd.f32 %v1816, %v1912
      %v1914 = vpop.f32.mrb[0].mxu0
      %1915 = vmatprep.mubr.bf16.mxu0 %v1016
      %1916 = vmatmul.mubr.bf16.gmra.mrb[0].mxu0 %v884
      %v1917 = vpop.f32.mrb[0].mxu0
      %v1918 = vadd.f32 %v1821, %v1917
      %v1919 = vpop.f32.mrb[0].mxu0
      %v1920 = vpop.f32.mrb[0].mxu0
      %v1921 = vadd.f32 %v1824, %v1920
      %v1922 = vpop.f32.mrb[0].mxu0
      %1923 = vmatprep.mubr.bf16.mxu0 %v1065
      %1924 = vmatmul.mubr.bf16.gmra.mrb[0].mxu0 %v955
      %v1925 = vpop.f32.mrb[0].mxu0
      %v1926 = vadd.f32 %v1829, %v1925
      %v1927 = vpop.f32.mrb[0].mxu0
      %v1928 = vpop.f32.mrb[0].mxu0
      %v1929 = vadd.f32 %v1832, %v1928
      %v1930 = vpop.f32.mrb[0].mxu0
      %1931 = vmatprep.mubr.bf16.mxu0 %v1114
      %1932 = vmatmul.mubr.bf16.gmra.mrb[0].mxu0 %v1007
      %v1933 = vpop.f32.mrb[0].mxu0
      %v1934 = vadd.f32 %v1837, %v1933
      %v1935 = vpop.f32.mrb[0].mxu0
      %v1936 = vpop.f32.mrb[0].mxu0
      %v1937 = vadd.f32 %v1840, %v1936
      %v1938 = vpop.f32.mrb[0].mxu0
      %1939 = vmatprep.mubr.bf16.mxu0 %v1163
      %1940 = vmatmul.mubr.bf16.gmra.mrb[0].mxu0 %v1056
      %v1941 = vpop.f32.mrb[0].mxu0
      %v1942 = vadd.f32 %v1845, %v1941
      %v1943 = vpop.f32.mrb[0].mxu0
      %v1944 = vpop.f32.mrb[0].mxu0
      %v1945 = vadd.f32 %v1848, %v1944
      %v1946 = vpop.f32.mrb[0].mxu0
      %1947 = vmatprep.mubr.bf16.mxu0 %v1230
      %1948 = vmatmul.mubr.bf16.gmra.mrb[0].mxu0 %v1221
      %v1949 = vpop.f32.mrb[0].mxu0
      %v1950 = vadd.f32 %v1853, %v1949
      %v1951 = vpop.f32.mrb[0].mxu0
      %v1952 = vpop.f32.mrb[0].mxu0
      %v1953 = vadd.f32 %v1856, %v1952
      %v1954 = vpop.f32.mrb[0].mxu0
      %1955 = vdwg.mxu0
      %1956 = vmatprep.subr.bf16.mxu0 0
      %1957 = vmatpush1.bf16.msra.mxu0 %v1650
      %1958 = vmatprep.subr.bf16.mxu0 0
      %1959 = vmatpush1.bf16.msra.mxu0 %v1651
      %1960 = vmatprep.subr.bf16.mxu0 0
      %1961 = vmatpush1.bf16.msra.mxu0 %v1652
      %1962 = vmatprep.subr.bf16.mxu0 0
      %1963 = vmatpush1.bf16.msra.mxu0 %v1653
      %1964 = vmatprep.subr.bf16.mxu0 0
      %1965 = vmatpush1.bf16.msra.mxu0 %v1654
      %1966 = vmatprep.subr.bf16.mxu0 0
      %1967 = vmatpush1.bf16.msra.mxu0 %v1655
      %1968 = vmatprep.subr.bf16.mxu0 0
      %1969 = vmatpush1.bf16.msra.mxu0 %v1656
      %1970 = vmatprep.subr.bf16.mxu0 0
      %1971 = vmatpush1.bf16.msra.mxu0 %v1657
      %1972 = vmatprep.subr.bf16.mxu0 0
      %1973 = vmatpush1.bf16.msra.mxu0 %v1658
      %1974 = vmatprep.subr.bf16.mxu0 0
      %1975 = vmatpush1.bf16.msra.mxu0 %v1659
      %1976 = vmatprep.subr.bf16.mxu0 0
      %1977 = vmatpush1.bf16.msra.mxu0 %v1660
      %1978 = vmatprep.subr.bf16.mxu0 0
      %1979 = vmatpush1.bf16.msra.mxu0 %v1661
      %1980 = vmatprep.subr.bf16.mxu0 0
      %1981 = vmatpush1.bf16.msra.mxu0 %v1662
      %1982 = vmatprep.subr.bf16.mxu0 0
      %1983 = vmatpush1.bf16.msra.mxu0 %v1663
      %1984 = vmatprep.subr.bf16.mxu0 0
      %1985 = vmatpush1.bf16.msra.mxu0 %v1664
      %1986 = vmatprep.subr.bf16.mxu0 0
      %1987 = vmatpush1.bf16.msra.mxu0 %v1665
      %1988 = vmatprep.mubr.bf16.mxu0 %v843
      %1989 = vmatmul.mubr.bf16.gmra.mrb[0].mxu0 %v826
      %v1990 = vpop.f32.mrb[0].mxu0
      %v1991 = vadd.f32 %v1894, %v1990
      %v1992 = vpop.f32.mrb[0].mxu0
      %v1993 = vpop.f32.mrb[0].mxu0
      %v1994 = vadd.f32 %v1897, %v1993
      %v1995 = vpop.f32.mrb[0].mxu0
      %1996 = vmatprep.mubr.bf16.mxu0 %v933
      %1997 = vmatmul.mubr.bf16.gmra.mrb[0].mxu0 %v924
      %v1998 = vpop.f32.mrb[0].mxu0
      %v1999 = vadd.f32 %v1902, %v1998
      %v2000 = vpop.f32.mrb[0].mxu0
      %v2001 = vpop.f32.mrb[0].mxu0
      %v2002 = vadd.f32 %v1905, %v2001
      %v2003 = vpop.f32.mrb[0].mxu0
      %2004 = vmatprep.mubr.bf16.mxu0 %v985
      %2005 = vmatmul.mubr.bf16.gmra.mrb[0].mxu0 %v976
      %v2006 = vpop.f32.mrb[0].mxu0
      %v2007 = vadd.f32 %v1910, %v2006
      %v2008 = vpop.f32.mrb[0].mxu0
      %v2009 = vpop.f32.mrb[0].mxu0
      %v2010 = vadd.f32 %v1913, %v2009
      %v2011 = vpop.f32.mrb[0].mxu0
      %2012 = vmatprep.mubr.bf16.mxu0 %v1034
      %2013 = vmatmul.mubr.bf16.gmra.mrb[0].mxu0 %v1025
      %v2014 = vpop.f32.mrb[0].mxu0
      %v2015 = vadd.f32 %v1918, %v2014
      %v2016 = vpop.f32.mrb[0].mxu0
      %v2017 = vpop.f32.mrb[0].mxu0
      %v2018 = vadd.f32 %v1921, %v2017
      %v2019 = vpop.f32.mrb[0].mxu0
      %2020 = vmatprep.mubr.bf16.mxu0 %v1083
      %2021 = vmatmul.mubr.bf16.gmra.mrb[0].mxu0 %v1074
      %v2022 = vpop.f32.mrb[0].mxu0
      %v2023 = vadd.f32 %v1926, %v2022
      %v2024 = vpop.f32.mrb[0].mxu0
      %v2025 = vpop.f32.mrb[0].mxu0
      %v2026 = vadd.f32 %v1929, %v2025
      %v2027 = vpop.f32.mrb[0].mxu0
      %2028 = vmatprep.mubr.bf16.mxu0 %v1132
      %2029 = vmatmul.mubr.bf16.gmra.mrb[0].mxu0 %v1123
      %v2030 = vpop.f32.mrb[0].mxu0
      %v2031 = vadd.f32 %v1934, %v2030
      %v2032 = vpop.f32.mrb[0].mxu0
      %v2033 = vpop.f32.mrb[0].mxu0
      %v2034 = vadd.f32 %v1937, %v2033
      %v2035 = vpop.f32.mrb[0].mxu0
      %2036 = vmatprep.mubr.bf16.mxu0 %v1181
      %2037 = vmatmul.mubr.bf16.gmra.mrb[0].mxu0 %v1172
      %v2038 = vpop.f32.mrb[0].mxu0
      %v2039 = vadd.f32 %v1942, %v2038
      %v2040 = vpop.f32.mrb[0].mxu0
      %v2041 = vpop.f32.mrb[0].mxu0
      %v2042 = vadd.f32 %v1945, %v2041
      %v2043 = vpop.f32.mrb[0].mxu0
      %2044 = vmatprep.mubr.bf16.mxu0 %v1248
      %2045 = vmatmul.mubr.bf16.gmra.mrb[0].mxu0 %v1239
      %v2046 = vpop.f32.mrb[0].mxu0
      %v2047 = vadd.f32 %v1950, %v2046
      %v2048 = vpop.f32.mrb[0].mxu0
      %v2049 = vpop.f32.mrb[0].mxu0
      %v2050 = vadd.f32 %v1953, %v2049
      %v2051 = vpop.f32.mrb[0].mxu0
      %2052 = vdwg.mxu0
      %2053 = vmatprep.subr.bf16.mxu0 0
      %2054 = vmatpush1.bf16.msra.mxu0 %v1666
      %2055 = vmatprep.subr.bf16.mxu0 0
      %2056 = vmatpush1.bf16.msra.mxu0 %v1667
      %2057 = vmatprep.subr.bf16.mxu0 0
      %2058 = vmatpush1.bf16.msra.mxu0 %v1668
      %2059 = vmatprep.subr.bf16.mxu0 0
      %2060 = vmatpush1.bf16.msra.mxu0 %v1669
      %2061 = vmatprep.subr.bf16.mxu0 0
      %2062 = vmatpush1.bf16.msra.mxu0 %v1670
      %2063 = vmatprep.subr.bf16.mxu0 0
      %2064 = vmatpush1.bf16.msra.mxu0 %v1671
      %2065 = vmatprep.subr.bf16.mxu0 0
      %2066 = vmatpush1.bf16.msra.mxu0 %v1672
      %2067 = vmatprep.subr.bf16.mxu0 0
      %2068 = vmatpush1.bf16.msra.mxu0 %v1673
      %2069 = vmatprep.subr.bf16.mxu0 0
      %2070 = vmatpush1.bf16.msra.mxu0 %v1674
      %2071 = vmatprep.subr.bf16.mxu0 0
      %2072 = vmatpush1.bf16.msra.mxu0 %v1675
      %2073 = vmatprep.subr.bf16.mxu0 0
      %2074 = vmatpush1.bf16.msra.mxu0 %v1676
      %2075 = vmatprep.subr.bf16.mxu0 0
      %2076 = vmatpush1.bf16.msra.mxu0 %v1677
      %2077 = vmatprep.subr.bf16.mxu0 0
      %2078 = vmatpush1.bf16.msra.mxu0 %v1678
      %2079 = vmatprep.subr.bf16.mxu0 0
      %2080 = vmatpush1.bf16.msra.mxu0 %v1679
      %2081 = vmatprep.subr.bf16.mxu0 0
      %2082 = vmatpush1.bf16.msra.mxu0 %v1680
      %2083 = vmatprep.subr.bf16.mxu0 0
      %2084 = vmatpush1.bf16.msra.mxu0 %v1681
      %2085 = vmatprep.mubr.bf16.mxu0 %v867
      %2086 = vmatmul.mubr.bf16.gmra.mrb[0].mxu0 %v850
      %v2087 = vpop.f32.mrb[0].mxu0
      %v2088 = vadd.f32 %v1991, %v2087
      %v2089 = vpop.f32.mrb[0].mxu0
      %v2090 = vpop.f32.mrb[0].mxu0
      %v2091 = vadd.f32 %v1994, %v2090
      %v2092 = vpop.f32.mrb[0].mxu0
      %2093 = vmatprep.mubr.bf16.mxu0 %v946
      %2094 = vmatmul.mubr.bf16.gmra.mrb[0].mxu0 %v937
      %v2095 = vpop.f32.mrb[0].mxu0
      %v2096 = vadd.f32 %v1999, %v2095
      %v2097 = vpop.f32.mrb[0].mxu0
      %v2098 = vpop.f32.mrb[0].mxu0
      %v2099 = vadd.f32 %v2002, %v2098
      %v2100 = vpop.f32.mrb[0].mxu0
      %2101 = vmatprep.mubr.bf16.mxu0 %v998
      %2102 = vmatmul.mubr.bf16.gmra.mrb[0].mxu0 %v989
      %v2103 = vpop.f32.mrb[0].mxu0
      %v2104 = vadd.f32 %v2007, %v2103
      %v2105 = vpop.f32.mrb[0].mxu0
      %v2106 = vpop.f32.mrb[0].mxu0
      %v2107 = vadd.f32 %v2010, %v2106
      %v2108 = vpop.f32.mrb[0].mxu0
      %2109 = vmatprep.mubr.bf16.mxu0 %v1047
      %2110 = vmatmul.mubr.bf16.gmra.mrb[0].mxu0 %v1038
      %v2111 = vpop.f32.mrb[0].mxu0
      %v2112 = vadd.f32 %v2015, %v2111
      %v2113 = vpop.f32.mrb[0].mxu0
      %v2114 = vpop.f32.mrb[0].mxu0
      %v2115 = vadd.f32 %v2018, %v2114
      %v2116 = vpop.f32.mrb[0].mxu0
      %2117 = vmatprep.mubr.bf16.mxu0 %v1096
      %2118 = vmatmul.mubr.bf16.gmra.mrb[0].mxu0 %v1087
      %v2119 = vpop.f32.mrb[0].mxu0
      %v2120 = vadd.f32 %v2023, %v2119
      %v2121 = vpop.f32.mrb[0].mxu0
      %v2122 = vpop.f32.mrb[0].mxu0
      %v2123 = vadd.f32 %v2026, %v2122
      %v2124 = vpop.f32.mrb[0].mxu0
      %2125 = vmatprep.mubr.bf16.mxu0 %v1145
      %2126 = vmatmul.mubr.bf16.gmra.mrb[0].mxu0 %v1136
      %v2127 = vpop.f32.mrb[0].mxu0
      %v2128 = vadd.f32 %v2031, %v2127
      %v2129 = vpop.f32.mrb[0].mxu0
      %v2130 = vpop.f32.mrb[0].mxu0
      %v2131 = vadd.f32 %v2034, %v2130
      %v2132 = vpop.f32.mrb[0].mxu0
      %2133 = vmatprep.mubr.bf16.mxu0 %v1194
      %2134 = vmatmul.mubr.bf16.gmra.mrb[0].mxu0 %v1185
      %v2135 = vpop.f32.mrb[0].mxu0
      %v2136 = vadd.f32 %v2039, %v2135
      %v2137 = vpop.f32.mrb[0].mxu0
      %v2138 = vpop.f32.mrb[0].mxu0
      %v2139 = vadd.f32 %v2042, %v2138
      %v2140 = vpop.f32.mrb[0].mxu0
      %2141 = vmatprep.mubr.bf16.mxu0 %v1261
      %2142 = vmatmul.mubr.bf16.gmra.mrb[0].mxu0 %v1252
      %v2143 = vpop.f32.mrb[0].mxu0
      %v2144 = vadd.f32 %v2047, %v2143
      %v2145 = vpop.f32.mrb[0].mxu0
      %v2146 = vpop.f32.mrb[0].mxu0
      %v2147 = vadd.f32 %v2050, %v2146
      %v2148 = vpop.f32.mrb[0].mxu0
      %2149 = vdwg.mxu0
      %2150 = vmatprep.subr.bf16.mxu0 0
      %2151 = vmatpush1.bf16.msra.mxu0 %v1682
      %2152 = vmatprep.subr.bf16.mxu0 0
      %2153 = vmatpush1.bf16.msra.mxu0 %v1683
      %2154 = vmatprep.subr.bf16.mxu0 0
      %2155 = vmatpush1.bf16.msra.mxu0 %v1684
      %2156 = vmatprep.subr.bf16.mxu0 0
      %2157 = vmatpush1.bf16.msra.mxu0 %v1685
      %2158 = vmatprep.subr.bf16.mxu0 0
      %2159 = vmatpush1.bf16.msra.mxu0 %v1686
      %2160 = vmatprep.subr.bf16.mxu0 0
      %2161 = vmatpush1.bf16.msra.mxu0 %v1687
      %2162 = vmatprep.subr.bf16.mxu0 0
      %2163 = vmatpush1.bf16.msra.mxu0 %v1688
      %2164 = vmatprep.subr.bf16.mxu0 0
      %2165 = vmatpush1.bf16.msra.mxu0 %v1689
      %2166 = vmatprep.subr.bf16.mxu0 0
      %2167 = vmatpush1.bf16.msra.mxu0 0
      %2168 = vmatprep.subr.bf16.mxu0 0
      %2169 = vmatpush1.bf16.msra.mxu0 0
      %2170 = vmatprep.subr.bf16.mxu0 0
      %2171 = vmatpush1.bf16.msra.mxu0 0
      %2172 = vmatprep.subr.bf16.mxu0 0
      %2173 = vmatpush1.bf16.msra.mxu0 0
      %2174 = vmatprep.subr.bf16.mxu0 0
      %2175 = vmatpush1.bf16.msra.mxu0 0
      %2176 = vmatprep.subr.bf16.mxu0 0
      %2177 = vmatpush1.bf16.msra.mxu0 0
      %2178 = vmatprep.subr.bf16.mxu0 0
      %2179 = vmatpush1.bf16.msra.mxu0 0
      %2180 = vmatprep.subr.bf16.mxu0 0
      %2181 = vmatpush1.bf16.msra.mxu0 0
      %2182 = vmatprep.mubr.bf16.mxu0 0
      %2183 = vmatmul.mubr.bf16.gmra.mrb[0].mxu0 %v884
      %v2184 = vpop.f32.mrb[0].mxu0
      %v2185 = vadd.f32 %v2088, %v2184
      %v2186 = vpop.f32.mrb[0].mxu0
      %v2187 = vpop.f32.mrb[0].mxu0
      %v2188 = vadd.f32 %v2091, %v2187
      %v2189 = vpop.f32.mrb[0].mxu0
      %2190 = vmatprep.mubr.bf16.mxu0 0
      %2191 = vmatmul.mubr.bf16.gmra.mrb[0].mxu0 %v955
      %v2192 = vpop.f32.mrb[0].mxu0
      %v2193 = vadd.f32 %v2096, %v2192
      %v2194 = vpop.f32.mrb[0].mxu0
      %v2195 = vpop.f32.mrb[0].mxu0
      %v2196 = vadd.f32 %v2099, %v2195
      %v2197 = vpop.f32.mrb[0].mxu0
      %2198 = vmatprep.mubr.bf16.mxu0 0
      %2199 = vmatmul.mubr.bf16.gmra.mrb[0].mxu0 %v1007
      %v2200 = vpop.f32.mrb[0].mxu0
      %v2201 = vadd.f32 %v2104, %v2200
      %v2202 = vpop.f32.mrb[0].mxu0
      %v2203 = vpop.f32.mrb[0].mxu0
      %v2204 = vadd.f32 %v2107, %v2203
      %v2205 = vpop.f32.mrb[0].mxu0
      %2206 = vmatprep.mubr.bf16.mxu0 0
      %2207 = vmatmul.mubr.bf16.gmra.mrb[0].mxu0 %v1056
      %v2208 = vpop.f32.mrb[0].mxu0
      %v2209 = vadd.f32 %v2112, %v2208
      %v2210 = vpop.f32.mrb[0].mxu0
      %v2211 = vpop.f32.mrb[0].mxu0
      %v2212 = vadd.f32 %v2115, %v2211
      %v2213 = vpop.f32.mrb[0].mxu0
      %2214 = vmatprep.mubr.bf16.mxu0 0
      %2215 = vmatmul.mubr.bf16.gmra.mrb[0].mxu0 %v1105
      %v2216 = vpop.f32.mrb[0].mxu0
      %v2217 = vadd.f32 %v2120, %v2216
      %v2218 = vpop.f32.mrb[0].mxu0
      %v2219 = vpop.f32.mrb[0].mxu0
      %v2220 = vadd.f32 %v2123, %v2219
      %v2221 = vpop.f32.mrb[0].mxu0
      %2222 = vmatprep.mubr.bf16.mxu0 0
      %2223 = vmatmul.mubr.bf16.gmra.mrb[0].mxu0 %v1154
      %v2224 = vpop.f32.mrb[0].mxu0
      %v2225 = vadd.f32 %v2128, %v2224
      %v2226 = vpop.f32.mrb[0].mxu0
      %v2227 = vpop.f32.mrb[0].mxu0
      %v2228 = vadd.f32 %v2131, %v2227
      %v2229 = vpop.f32.mrb[0].mxu0
      %2230 = vmatprep.mubr.bf16.mxu0 0
      %2231 = vmatmul.mubr.bf16.gmra.mrb[0].mxu0 %v1203
      %v2232 = vpop.f32.mrb[0].mxu0
      %v2233 = vadd.f32 %v2136, %v2232
      %v2234 = vpop.f32.mrb[0].mxu0
      %v2235 = vpop.f32.mrb[0].mxu0
      %v2236 = vadd.f32 %v2139, %v2235
      %v2237 = vpop.f32.mrb[0].mxu0
      %2238 = vmatprep.mubr.bf16.mxu0 0
      %2239 = vmatmul.mubr.bf16.gmra.mrb[0].mxu0 %v1270
      %v2240 = vpop.f32.mrb[0].mxu0
      %v2241 = vadd.f32 %v2144, %v2240
      %v2242 = vpop.f32.mrb[0].mxu0
      %v2243 = vpop.f32.mrb[0].mxu0
      %v2244 = vadd.f32 %v2147, %v2243
      %v2245 = vpop.f32.mrb[0].mxu0
      %2246 = vdwg.mxu0
      %v2247 = vld [vmem:[%s199] sm:$0xff]
      %v2248 = vld [vmem:[%s199 + $0x8] sm:$0xff]
      %v2249 = vld [vmem:[%s199 + $0x10] sm:$0xff]
      %v2250 = vld [vmem:[%s199 + $0x18] sm:$0xff]
      %v2251 = vld [vmem:[%s199 + $0x20] sm:$0xff]
      %v2252 = vld [vmem:[%s199 + $0x28] sm:$0xff]
      %v2253 = vld [vmem:[%s199 + $0x30] sm:$0xff]
      %v2254 = vld [vmem:[%s199 + $0x38] sm:$0xff]
      %v2255 = vld [vmem:[%s199 + $0x40] sm:$0xff]
      %v2256 = vld [vmem:[%s199 + $0x48] sm:$0xff]
      %v2257 = vld [vmem:[%s199 + $0x50] sm:$0xff]
      %v2258 = vld [vmem:[%s199 + $0x58] sm:$0xff]
      %v2259 = vld [vmem:[%s199 + $0x60] sm:$0xff]
      %v2260 = vld [vmem:[%s199 + $0x68] sm:$0xff]
      %v2261 = vld [vmem:[%s199 + $0x70] sm:$0xff]
      %v2262 = vld [vmem:[%s199 + $0x78] sm:$0xff]
      %v2263 = vadd.f32 %v2185, %v2247
      %v2264 = vadd.f32 %v2188, %v2248
      %v2265 = vadd.f32 %v2193, %v2249
      %v2266 = vadd.f32 %v2196, %v2250
      %v2267 = vadd.f32 %v2201, %v2251
      %v2268 = vadd.f32 %v2204, %v2252
      %v2269 = vadd.f32 %v2209, %v2253
      %v2270 = vadd.f32 %v2212, %v2254
      %v2271 = vadd.f32 %v2217, %v2255
      %v2272 = vadd.f32 %v2220, %v2256
      %v2273 = vadd.f32 %v2225, %v2257
      %v2274 = vadd.f32 %v2228, %v2258
      %v2275 = vadd.f32 %v2233, %v2259
      %v2276 = vadd.f32 %v2236, %v2260
      %v2277 = vadd.f32 %v2241, %v2261
      %v2278 = vadd.f32 %v2244, %v2262
      %vm2279 = vcmask 31744
      %v2280 = vsel %vm2279, %v2263, -inf
      %2281 = vmax.xlane.f32.xlu0 %v2280
      %v2282 = vpop.xlane.xlu0 %2281
      %v2283 = vsel %vm2279, %v2264, -inf
      %2284 = vmax.xlane.f32.xlu0 %v2283
      %v2285 = vpop.xlane.xlu0 %2284
      %v2286 = vsel %vm2279, %v2265, -inf
      %2287 = vmax.xlane.f32.xlu0 %v2286
      %v2288 = vpop.xlane.xlu0 %2287
      %v2289 = vsel %vm2279, %v2266, -inf
      %2290 = vmax.xlane.f32.xlu0 %v2289
      %v2291 = vpop.xlane.xlu0 %2290
      %v2292 = vsel %vm2279, %v2267, -inf
      %2293 = vmax.xlane.f32.xlu0 %v2292
      %v2294 = vpop.xlane.xlu0 %2293
      %v2295 = vsel %vm2279, %v2268, -inf
      %2296 = vmax.xlane.f32.xlu0 %v2295
      %v2297 = vpop.xlane.xlu0 %2296
      %v2298 = vsel %vm2279, %v2269, -inf
      %2299 = vmax.xlane.f32.xlu0 %v2298
      %v2300 = vpop.xlane.xlu0 %2299
      %v2301 = vsel %vm2279, %v2270, -inf
      %2302 = vmax.xlane.f32.xlu0 %v2301
      %v2303 = vpop.xlane.xlu0 %2302
      %v2304 = vsel %vm2279, %v2271, -inf
      %2305 = vmax.xlane.f32.xlu0 %v2304
      %v2306 = vpop.xlane.xlu0 %2305
      %v2307 = vsel %vm2279, %v2272, -inf
      %2308 = vmax.xlane.f32.xlu0 %v2307
      %v2309 = vpop.xlane.xlu0 %2308
      %v2310 = vsel %vm2279, %v2273, -inf
      %2311 = vmax.xlane.f32.xlu0 %v2310
      %v2312 = vpop.xlane.xlu0 %2311
      %v2313 = vsel %vm2279, %v2274, -inf
      %2314 = vmax.xlane.f32.xlu0 %v2313
      %v2315 = vpop.xlane.xlu0 %2314
      %v2316 = vsel %vm2279, %v2275, -inf
      %2317 = vmax.xlane.f32.xlu0 %v2316
      %v2318 = vpop.xlane.xlu0 %2317
      %v2319 = vsel %vm2279, %v2276, -inf
      %2320 = vmax.xlane.f32.xlu0 %v2319
      %v2321 = vpop.xlane.xlu0 %2320
      %v2322 = vsel %vm2279, %v2277, -inf
      %2323 = vmax.xlane.f32.xlu0 %v2322
      %v2324 = vpop.xlane.xlu0 %2323
      %v2325 = vsel %vm2279, %v2278, -inf
      %2326 = vmax.xlane.f32.xlu0 %v2325
      %v2327 = vpop.xlane.xlu0 %2326
      %v2328 = vlaneseq
      %v2329 = vand.u32 %v2328, 127
      %vm2330 = vcmp.ge.f32.partialorder %v2263, %v2282
      %vm2331 = vcmp.ge.f32.partialorder %v2264, %v2285
      %vm2332 = vcmp.ge.f32.partialorder %v2265, %v2288
      %vm2333 = vcmp.ge.f32.partialorder %v2266, %v2291
      %vm2334 = vcmp.ge.f32.partialorder %v2267, %v2294
      %vm2335 = vcmp.ge.f32.partialorder %v2268, %v2297
      %vm2336 = vcmp.ge.f32.partialorder %v2269, %v2300
      %vm2337 = vcmp.ge.f32.partialorder %v2270, %v2303
      %vm2338 = vcmp.ge.f32.partialorder %v2271, %v2306
      %vm2339 = vcmp.ge.f32.partialorder %v2272, %v2309
      %vm2340 = vcmp.ge.f32.partialorder %v2273, %v2312
      %vm2341 = vcmp.ge.f32.partialorder %v2274, %v2315
      %vm2342 = vcmp.ge.f32.partialorder %v2275, %v2318
      %vm2343 = vcmp.ge.f32.partialorder %v2276, %v2321
      %vm2344 = vcmp.ge.f32.partialorder %v2277, %v2324
      %vm2345 = vcmp.ge.f32.partialorder %v2278, %v2327
      %v2346 = vsel %vm2330, %v2329, 4
      %v2347 = vsel %vm2331, %v2329, 4
      %v2348 = vsel %vm2332, %v2329, 4
      %v2349 = vsel %vm2333, %v2329, 4
      %v2350 = vsel %vm2334, %v2329, 4
      %v2351 = vsel %vm2335, %v2329, 4
      %v2352 = vsel %vm2336, %v2329, 4
      %v2353 = vsel %vm2337, %v2329, 4
      %v2354 = vsel %vm2338, %v2329, 4
      %v2355 = vsel %vm2339, %v2329, 4
      %v2356 = vsel %vm2340, %v2329, 4
      %v2357 = vsel %vm2341, %v2329, 4
      %v2358 = vsel %vm2342, %v2329, 4
      %v2359 = vsel %vm2343, %v2329, 4
      %v2360 = vsel %vm2344, %v2329, 4
      %v2361 = vsel %vm2345, %v2329, 4
      %v2362 = vsel %vm2279, %v2346, 2147483647
      %v2363 = vand.u32 %v2362, 65535
      %v2364 = vshra.s32 %v2362, 16
      %v2365 = vcvt.s32.f32 %v2363
      %v2366 = vcvt.s32.f32 %v2364
      %2367 = vmin.xlane.f32.xlu0 %v2366
      %v2368 = vpop.xlane.xlu0 %2367
      %vm2369 = vcmp.eq.f32.partialorder %v2366, %v2368
      %v2370 = vsel %vm2369, %v2365, inf
      %2371 = vmin.xlane.f32.xlu0 %v2370
      %v2372 = vpop.xlane.xlu0 %2371
      %v2373 = vcvt.f32.s32 %v2372
      %v2374 = vcvt.f32.s32 %v2368
      %v2375 = vshll.u32 %v2374, 16
      %v2376 = vadd.s32 %v2375, %v2373
      %v2377 = vsel %vm2279, %v2347, 2147483647
      %v2378 = vand.u32 %v2377, 65535
      %v2379 = vshra.s32 %v2377, 16
      %v2380 = vcvt.s32.f32 %v2378
      %v2381 = vcvt.s32.f32 %v2379
      %2382 = vmin.xlane.f32.xlu0 %v2381
      %v2383 = vpop.xlane.xlu0 %2382
      %vm2384 = vcmp.eq.f32.partialorder %v2381, %v2383
      %v2385 = vsel %vm2384, %v2380, inf
      %2386 = vmin.xlane.f32.xlu0 %v2385
      %v2387 = vpop.xlane.xlu0 %2386
      %v2388 = vcvt.f32.s32 %v2387
      %v2389 = vcvt.f32.s32 %v2383
      %v2390 = vshll.u32 %v2389, 16
      %v2391 = vadd.s32 %v2390, %v2388
      %v2392 = vsel %vm2279, %v2348, 2147483647
      %v2393 = vand.u32 %v2392, 65535
      %v2394 = vshra.s32 %v2392, 16
      %v2395 = vcvt.s32.f32 %v2393
      %v2396 = vcvt.s32.f32 %v2394
      %2397 = vmin.xlane.f32.xlu0 %v2396
      %v2398 = vpop.xlane.xlu0 %2397
      %vm2399 = vcmp.eq.f32.partialorder %v2396, %v2398
      %v2400 = vsel %vm2399, %v2395, inf
      %2401 = vmin.xlane.f32.xlu0 %v2400
      %v2402 = vpop.xlane.xlu0 %2401
      %v2403 = vcvt.f32.s32 %v2402
      %v2404 = vcvt.f32.s32 %v2398
      %v2405 = vshll.u32 %v2404, 16
      %v2406 = vadd.s32 %v2405, %v2403
      %v2407 = vsel %vm2279, %v2349, 2147483647
      %v2408 = vand.u32 %v2407, 65535
      %v2409 = vshra.s32 %v2407, 16
      %v2410 = vcvt.s32.f32 %v2408
      %v2411 = vcvt.s32.f32 %v2409
      %2412 = vmin.xlane.f32.xlu0 %v2411
      %v2413 = vpop.xlane.xlu0 %2412
      %vm2414 = vcmp.eq.f32.partialorder %v2411, %v2413
      %v2415 = vsel %vm2414, %v2410, inf
      %2416 = vmin.xlane.f32.xlu0 %v2415
      %v2417 = vpop.xlane.xlu0 %2416
      %v2418 = vcvt.f32.s32 %v2417
      %v2419 = vcvt.f32.s32 %v2413
      %v2420 = vshll.u32 %v2419, 16
      %v2421 = vadd.s32 %v2420, %v2418
      %v2422 = vsel %vm2279, %v2350, 2147483647
      %v2423 = vand.u32 %v2422, 65535
      %v2424 = vshra.s32 %v2422, 16
      %v2425 = vcvt.s32.f32 %v2423
      %v2426 = vcvt.s32.f32 %v2424
      %2427 = vmin.xlane.f32.xlu0 %v2426
      %v2428 = vpop.xlane.xlu0 %2427
      %vm2429 = vcmp.eq.f32.partialorder %v2426, %v2428
      %v2430 = vsel %vm2429, %v2425, inf
      %2431 = vmin.xlane.f32.xlu0 %v2430
      %v2432 = vpop.xlane.xlu0 %2431
      %v2433 = vcvt.f32.s32 %v2432
      %v2434 = vcvt.f32.s32 %v2428
      %v2435 = vshll.u32 %v2434, 16
      %v2436 = vadd.s32 %v2435, %v2433
      %v2437 = vsel %vm2279, %v2351, 2147483647
      %v2438 = vand.u32 %v2437, 65535
      %v2439 = vshra.s32 %v2437, 16
      %v2440 = vcvt.s32.f32 %v2438
      %v2441 = vcvt.s32.f32 %v2439
      %2442 = vmin.xlane.f32.xlu0 %v2441
      %v2443 = vpop.xlane.xlu0 %2442
      %vm2444 = vcmp.eq.f32.partialorder %v2441, %v2443
      %v2445 = vsel %vm2444, %v2440, inf
      %2446 = vmin.xlane.f32.xlu0 %v2445
      %v2447 = vpop.xlane.xlu0 %2446
      %v2448 = vcvt.f32.s32 %v2447
      %v2449 = vcvt.f32.s32 %v2443
      %v2450 = vshll.u32 %v2449, 16
      %v2451 = vadd.s32 %v2450, %v2448
      %v2452 = vsel %vm2279, %v2352, 2147483647
      %v2453 = vand.u32 %v2452, 65535
      %v2454 = vshra.s32 %v2452, 16
      %v2455 = vcvt.s32.f32 %v2453
      %v2456 = vcvt.s32.f32 %v2454
      %2457 = vmin.xlane.f32.xlu0 %v2456
      %v2458 = vpop.xlane.xlu0 %2457
      %vm2459 = vcmp.eq.f32.partialorder %v2456, %v2458
      %v2460 = vsel %vm2459, %v2455, inf
      %2461 = vmin.xlane.f32.xlu0 %v2460
      %v2462 = vpop.xlane.xlu0 %2461
      %v2463 = vcvt.f32.s32 %v2462
      %v2464 = vcvt.f32.s32 %v2458
      %v2465 = vshll.u32 %v2464, 16
      %v2466 = vadd.s32 %v2465, %v2463
      %v2467 = vsel %vm2279, %v2353, 2147483647
      %v2468 = vand.u32 %v2467, 65535
      %v2469 = vshra.s32 %v2467, 16
      %v2470 = vcvt.s32.f32 %v2468
      %v2471 = vcvt.s32.f32 %v2469
      %2472 = vmin.xlane.f32.xlu0 %v2471
      %v2473 = vpop.xlane.xlu0 %2472
      %vm2474 = vcmp.eq.f32.partialorder %v2471, %v2473
      %v2475 = vsel %vm2474, %v2470, inf
      %2476 = vmin.xlane.f32.xlu0 %v2475
      %v2477 = vpop.xlane.xlu0 %2476
      %v2478 = vcvt.f32.s32 %v2477
      %v2479 = vcvt.f32.s32 %v2473
      %v2480 = vshll.u32 %v2479, 16
      %v2481 = vadd.s32 %v2480, %v2478
      %v2482 = vsel %vm2279, %v2354, 2147483647
      %v2483 = vand.u32 %v2482, 65535
      %v2484 = vshra.s32 %v2482, 16
      %v2485 = vcvt.s32.f32 %v2483
      %v2486 = vcvt.s32.f32 %v2484
      %2487 = vmin.xlane.f32.xlu0 %v2486
      %v2488 = vpop.xlane.xlu0 %2487
      %vm2489 = vcmp.eq.f32.partialorder %v2486, %v2488
      %v2490 = vsel %vm2489, %v2485, inf
      %2491 = vmin.xlane.f32.xlu0 %v2490
      %v2492 = vpop.xlane.xlu0 %2491
      %v2493 = vcvt.f32.s32 %v2492
      %v2494 = vcvt.f32.s32 %v2488
      %v2495 = vshll.u32 %v2494, 16
      %v2496 = vadd.s32 %v2495, %v2493
      %v2497 = vsel %vm2279, %v2355, 2147483647
      %v2498 = vand.u32 %v2497, 65535
      %v2499 = vshra.s32 %v2497, 16
      %v2500 = vcvt.s32.f32 %v2498
      %v2501 = vcvt.s32.f32 %v2499
      %2502 = vmin.xlane.f32.xlu0 %v2501
      %v2503 = vpop.xlane.xlu0 %2502
      %vm2504 = vcmp.eq.f32.partialorder %v2501, %v2503
      %v2505 = vsel %vm2504, %v2500, inf
      %2506 = vmin.xlane.f32.xlu0 %v2505
      %v2507 = vpop.xlane.xlu0 %2506
      %v2508 = vcvt.f32.s32 %v2507
      %v2509 = vcvt.f32.s32 %v2503
      %v2510 = vshll.u32 %v2509, 16
      %v2511 = vadd.s32 %v2510, %v2508
      %v2512 = vsel %vm2279, %v2356, 2147483647
      %v2513 = vand.u32 %v2512, 65535
      %v2514 = vshra.s32 %v2512, 16
      %v2515 = vcvt.s32.f32 %v2513
      %v2516 = vcvt.s32.f32 %v2514
      %2517 = vmin.xlane.f32.xlu0 %v2516
      %v2518 = vpop.xlane.xlu0 %2517
      %vm2519 = vcmp.eq.f32.partialorder %v2516, %v2518
      %v2520 = vsel %vm2519, %v2515, inf
      %2521 = vmin.xlane.f32.xlu0 %v2520
      %v2522 = vpop.xlane.xlu0 %2521
      %v2523 = vcvt.f32.s32 %v2522
      %v2524 = vcvt.f32.s32 %v2518
      %v2525 = vshll.u32 %v2524, 16
      %v2526 = vadd.s32 %v2525, %v2523
      %v2527 = vsel %vm2279, %v2357, 2147483647
      %v2528 = vand.u32 %v2527, 65535
      %v2529 = vshra.s32 %v2527, 16
      %v2530 = vcvt.s32.f32 %v2528
      %v2531 = vcvt.s32.f32 %v2529
      %2532 = vmin.xlane.f32.xlu0 %v2531
      %v2533 = vpop.xlane.xlu0 %2532
      %vm2534 = vcmp.eq.f32.partialorder %v2531, %v2533
      %v2535 = vsel %vm2534, %v2530, inf
      %2536 = vmin.xlane.f32.xlu0 %v2535
      %v2537 = vpop.xlane.xlu0 %2536
      %v2538 = vcvt.f32.s32 %v2537
      %v2539 = vcvt.f32.s32 %v2533
      %v2540 = vshll.u32 %v2539, 16
      %v2541 = vadd.s32 %v2540, %v2538
      %v2542 = vsel %vm2279, %v2358, 2147483647
      %v2543 = vand.u32 %v2542, 65535
      %v2544 = vshra.s32 %v2542, 16
      %v2545 = vcvt.s32.f32 %v2543
      %v2546 = vcvt.s32.f32 %v2544
      %2547 = vmin.xlane.f32.xlu0 %v2546
      %v2548 = vpop.xlane.xlu0 %2547
      %vm2549 = vcmp.eq.f32.partialorder %v2546, %v2548
      %v2550 = vsel %vm2549, %v2545, inf
      %2551 = vmin.xlane.f32.xlu0 %v2550
      %v2552 = vpop.xlane.xlu0 %2551
      %v2553 = vcvt.f32.s32 %v2552
      %v2554 = vcvt.f32.s32 %v2548
      %v2555 = vshll.u32 %v2554, 16
      %v2556 = vadd.s32 %v2555, %v2553
      %v2557 = vsel %vm2279, %v2359, 2147483647
      %v2558 = vand.u32 %v2557, 65535
      %v2559 = vshra.s32 %v2557, 16
      %v2560 = vcvt.s32.f32 %v2558
      %v2561 = vcvt.s32.f32 %v2559
      %2562 = vmin.xlane.f32.xlu0 %v2561
      %v2563 = vpop.xlane.xlu0 %2562
      %vm2564 = vcmp.eq.f32.partialorder %v2561, %v2563
      %v2565 = vsel %vm2564, %v2560, inf
      %2566 = vmin.xlane.f32.xlu0 %v2565
      %v2567 = vpop.xlane.xlu0 %2566
      %v2568 = vcvt.f32.s32 %v2567
      %v2569 = vcvt.f32.s32 %v2563
      %v2570 = vshll.u32 %v2569, 16
      %v2571 = vadd.s32 %v2570, %v2568
      %v2572 = vsel %vm2279, %v2360, 2147483647
      %v2573 = vand.u32 %v2572, 65535
      %v2574 = vshra.s32 %v2572, 16
      %v2575 = vcvt.s32.f32 %v2573
      %v2576 = vcvt.s32.f32 %v2574
      %2577 = vmin.xlane.f32.xlu0 %v2576
      %v2578 = vpop.xlane.xlu0 %2577
      %vm2579 = vcmp.eq.f32.partialorder %v2576, %v2578
      %v2580 = vsel %vm2579, %v2575, inf
      %2581 = vmin.xlane.f32.xlu0 %v2580
      %v2582 = vpop.xlane.xlu0 %2581
      %v2583 = vcvt.f32.s32 %v2582
      %v2584 = vcvt.f32.s32 %v2578
      %v2585 = vshll.u32 %v2584, 16
      %v2586 = vadd.s32 %v2585, %v2583
      %v2587 = vsel %vm2279, %v2361, 2147483647
      %v2588 = vand.u32 %v2587, 65535
      %v2589 = vshra.s32 %v2587, 16
      %v2590 = vcvt.s32.f32 %v2588
      %v2591 = vcvt.s32.f32 %v2589
      %2592 = vmin.xlane.f32.xlu0 %v2591
      %v2593 = vpop.xlane.xlu0 %2592
      %vm2594 = vcmp.eq.f32.partialorder %v2591, %v2593
      %v2595 = vsel %vm2594, %v2590, inf
      %2596 = vmin.xlane.f32.xlu0 %v2595
      %v2597 = vpop.xlane.xlu0 %2596
      %v2598 = vcvt.f32.s32 %v2597
      %v2599 = vcvt.f32.s32 %v2593
      %v2600 = vshll.u32 %v2599, 16
      %v2601 = vadd.s32 %v2600, %v2598
      %vm2602 = vcmp.eq.s32.totalorder %v2329, %v2376
      %vm2603 = vcmp.eq.s32.totalorder %v2329, %v2391
      %vm2604 = vcmp.eq.s32.totalorder %v2329, %v2406
      %vm2605 = vcmp.eq.s32.totalorder %v2329, %v2421
      %vm2606 = vcmp.eq.s32.totalorder %v2329, %v2436
      %vm2607 = vcmp.eq.s32.totalorder %v2329, %v2451
      %vm2608 = vcmp.eq.s32.totalorder %v2329, %v2466
      %vm2609 = vcmp.eq.s32.totalorder %v2329, %v2481
      %vm2610 = vcmp.eq.s32.totalorder %v2329, %v2496
      %vm2611 = vcmp.eq.s32.totalorder %v2329, %v2511
      %vm2612 = vcmp.eq.s32.totalorder %v2329, %v2526
      %vm2613 = vcmp.eq.s32.totalorder %v2329, %v2541
      %vm2614 = vcmp.eq.s32.totalorder %v2329, %v2556
      %vm2615 = vcmp.eq.s32.totalorder %v2329, %v2571
      %vm2616 = vcmp.eq.s32.totalorder %v2329, %v2586
      %vm2617 = vcmp.eq.s32.totalorder %v2329, %v2601
      %v2618 = vsel %vm2602, 1, 0
      %v2619 = vsel %vm2603, 1, 0
      %v2620 = vsel %vm2604, 1, 0
      %v2621 = vsel %vm2605, 1, 0
      %v2622 = vsel %vm2606, 1, 0
      %v2623 = vsel %vm2607, 1, 0
      %v2624 = vsel %vm2608, 1, 0
      %v2625 = vsel %vm2609, 1, 0
      %v2626 = vsel %vm2610, 1, 0
      %v2627 = vsel %vm2611, 1, 0
      %v2628 = vsel %vm2612, 1, 0
      %v2629 = vsel %vm2613, 1, 0
      %v2630 = vsel %vm2614, 1, 0
      %v2631 = vsel %vm2615, 1, 0
      %v2632 = vsel %vm2616, 1, 0
      %v2633 = vsel %vm2617, 1, 0
      %v2634 = vcvt.s32.f32 %v2618
      %v2635 = vcvt.s32.f32 %v2619
      %v2636 = vcvt.s32.f32 %v2620
      %v2637 = vcvt.s32.f32 %v2621
      %v2638 = vcvt.s32.f32 %v2622
      %v2639 = vcvt.s32.f32 %v2623
      %v2640 = vcvt.s32.f32 %v2624
      %v2641 = vcvt.s32.f32 %v2625
      %v2642 = vcvt.s32.f32 %v2626
      %v2643 = vcvt.s32.f32 %v2627
      %v2644 = vcvt.s32.f32 %v2628
      %v2645 = vcvt.s32.f32 %v2629
      %v2646 = vcvt.s32.f32 %v2630
      %v2647 = vcvt.s32.f32 %v2631
      %v2648 = vcvt.s32.f32 %v2632
      %v2649 = vcvt.s32.f32 %v2633
      %2650 = vst.msk [vmem:[%s209] sm:$0xff] %vm2279, %v2634
      %2651 = vst.msk [vmem:[%s209 + $0x8] sm:$0xff] %vm2279, %v2635
      %2652 = vst.msk [vmem:[%s209 + $0x10] sm:$0xff] %vm2279, %v2636
      %2653 = vst.msk [vmem:[%s209 + $0x18] sm:$0xff] %vm2279, %v2637
      %2654 = vst.msk [vmem:[%s209 + $0x20] sm:$0xff] %vm2279, %v2638
      %2655 = vst.msk [vmem:[%s209 + $0x28] sm:$0xff] %vm2279, %v2639
      %2656 = vst.msk [vmem:[%s209 + $0x30] sm:$0xff] %vm2279, %v2640
      %2657 = vst.msk [vmem:[%s209 + $0x38] sm:$0xff] %vm2279, %v2641
      %2658 = vst.msk [vmem:[%s209 + $0x40] sm:$0xff] %vm2279, %v2642
      %2659 = vst.msk [vmem:[%s209 + $0x48] sm:$0xff] %vm2279, %v2643
      %2660 = vst.msk [vmem:[%s209 + $0x50] sm:$0xff] %vm2279, %v2644
      %2661 = vst.msk [vmem:[%s209 + $0x58] sm:$0xff] %vm2279, %v2645
      %2662 = vst.msk [vmem:[%s209 + $0x60] sm:$0xff] %vm2279, %v2646
      %2663 = vst.msk [vmem:[%s209 + $0x68] sm:$0xff] %vm2279, %v2647
      %2664 = vst.msk [vmem:[%s209 + $0x70] sm:$0xff] %vm2279, %v2648
      %2665 = vst.msk [vmem:[%s209 + $0x78] sm:$0xff] %vm2279, %v2649
      %s2666 = smul.u32 16, %s20
      %p2667 = scmp.lt.s32.totalorder %s19, 1
      %s2668 = scalar_select %p2667, %s19, 1
      %p2669 = scmp.lt.s32.totalorder %s2666, 47
      %s2670 = scalar_select %p2669, %s2666, 47
      %s2671 = smul.addr %s2668, 48
      %s2672 = sadd.s32 %s2670, %s2671
      %s2673 = smul.addr %s2672, 8
      %s2674 = scalar_lea.vmem %s4, %s2673
      // Predicated region
      $region109: #{noise_net_forward.7} parent=31 // pred_check
        %p2675 = pneg %p117
      $region110: #{noise_net_forward.7} parent=31 // pred_check_branch
        %2677 = sbr.rel (%p2675) target = $region112
      $region111: #{noise_net_forward.7} parent=31 // pred_region
        %s2678 = smul.u32 16, %s20
      $region112: #{noise_net_forward.7} parent=31 // pred_fallthru
        _
    $region32: #{noise_net_forward.7} parent=5 // pred_fallthru
      _
    %p2679 = scmp.le.s32.totalorder 2, %s10
    // Predicated region
    $region113: #{noise_net_forward.7} parent=5 // pred_check
      %p2680 = pneg %p2679
    $region114: #{noise_net_forward.7} parent=5 // pred_check_branch
      %2682 = sbr.rel (%p2680) target = $region116
    $region115: #{noise_net_forward.7} parent=5 // pred_region
      %s2683 = ssub.s32 %s10, 2
      // Predicated region
      $region117: #{noise_net_forward.7} parent=115 // pred_check
        %p2684 = pneg %p123
      $region118: #{noise_net_forward.7} parent=115 // pred_check_branch
        %2686 = sbr.rel (%p2684) target = $region120
      $region119: #{noise_net_forward.7} parent=115 // pred_region
        %s2687 = smul.u32 16, %s22
        %p2688 = scmp.lt.s32.totalorder %s21, 1
        %s2689 = scalar_select %p2688, %s21, 1
        %p2690 = scmp.lt.s32.totalorder %s2687, 47
        %s2691 = scalar_select %p2690, %s2687, 47
        %s2692 = smul.addr %s2689, 48
        %s2693 = sadd.s32 %s2691, %s2692
        %s2694 = smul.addr %s2693, 8
        %s2695 = scalar_lea.vmem %s4, %s2694
      $region120: #{noise_net_forward.7} parent=115 // pred_fallthru
        _
    $region116: #{noise_net_forward.7} parent=5 // pred_fallthru
      _
  $region6: #{noise_net_forward.7} parent=0 // loop_footer
    %s14 = sadd.s32 1, %s10
  $region7: #{noise_net_forward.7} parent=0 // loop_footer_branch
    %9 = sbr.rel target = $region3
  $region8: #{noise_net_forward.7} parent=0 // loop_exit
    _
  %2696 = vsyncmov [#allocation3]
  %s2697 = vpop.sfrf %2696
  %p2698 = scmp.eq.s32.totalorder %s2697, 0
  %p2699 = pneg %p2698
  %2701 = shalt.err (%p2699)
  %s2702 = scalar_lea.sflag [#allocation3], 1
  %2703 = vsyncmov %s2702
  %s2704 = vpop.sfrf %2703
  %p2705 = scmp.eq.s32.totalorder %s2704, 0
  %p2706 = pneg %p2705
  %2708 = shalt.err (%p2706)

</llo_original>
